<compile_context>
chip_gen: v7x
topology: tpu7x:2x2x1
jax: 0.10.0
libtpu: 0.0.40
codegen_flags: <defaults>
</compile_context>

<pallas_src>
import functools

import jax
import jax.numpy as jnp
from jax import lax
from jax.experimental import pallas as pl
from jax.experimental.pallas import tpu as pltpu


def _supcon_kernel(*refs, n_views, bsz, inv_temperature, loss_scale,
                   has_weight):
    if has_weight:
        slab_ref, w_ref, out_ref = refs
    else:
        slab_ref, lab_rows_ref, lab_cols_ref, out_ref = refs

    tm = out_ref.shape[0]
    n_pad = slab_ref.shape[0]
    bsz_pad = n_pad // n_views

    i = pl.program_id(0)
    row0 = pl.multiple_of(i * tm, tm)

    # Anchor rows sliced out of the resident contrast slab (no second stream).
    a = slab_ref[pl.ds(row0, tm), :]                        # (tm, dp)
    prec = (lax.Precision.HIGHEST if a.dtype == jnp.float32
            else lax.Precision.DEFAULT)
    logits = lax.dot_general(
        a, slab_ref[...], (((1,), (1,)), ((), ())),         # a . slab^T
        precision=prec,
        preferred_element_type=jnp.float32) * inv_temperature   # (tm, n_pad)

    col = lax.broadcasted_iota(jnp.int32, (tm, n_pad), 1)
    row_g = i * tm + lax.broadcasted_iota(jnp.int32, (tm, n_pad), 0)

    # Valid contrast columns (each view segment is padded from bsz to bsz_pad).
    valid = col < 0                                          # all False
    for v in range(n_views):
        lo = v * bsz_pad
        valid = jnp.logical_or(
            valid, jnp.logical_and(col >= lo, col < lo + bsz))
    keep = jnp.logical_and(valid, col != row_g)              # drop self-pair

    neg_inf = jnp.float32(-jnp.inf)
    # Row max over all real columns (diagonal included), as in the reference.
    m = jnp.max(jnp.where(valid, logits, neg_inf), axis=1, keepdims=True)
    sl = logits - m
    denom = jnp.sum(jnp.exp(jnp.where(keep, sl, neg_inf)),
                    axis=1, keepdims=True)                   # (tm, 1)

    if has_weight:
        # (tm, bsz_pad) positive-pair weight block; identical for every view's
        # 128-aligned column segment of the tiled mask.
        w_blk = w_ref[...].astype(jnp.float32)
        p = jnp.zeros((tm, 1), jnp.float32)
        s = jnp.zeros((tm, 1), jnp.float32)
        for v in range(n_views):                             # aligned slices
            lo = v * bsz_pad
            keep_v = keep[:, lo:lo + bsz_pad]
            sl_v = sl[:, lo:lo + bsz_pad]
            wv = jnp.where(keep_v, w_blk, 0.0)
            p = p + jnp.sum(wv, axis=1, keepdims=True)
            s = s + jnp.sum(wv * sl_v, axis=1, keepdims=True)
    else:
        w = (lab_rows_ref[...] == lab_cols_ref[...]).astype(jnp.float32)
        wm = jnp.where(keep, w, 0.0)
        p = jnp.sum(wm, axis=1, keepdims=True)
        s = jnp.sum(wm * sl, axis=1, keepdims=True)

    # sum(mask * log_prob) = s - p * log(denom); log_prob never materialized.
    p_safe = jnp.where(p < 1e-6, 1.0, p)
    mean_log_prob_pos = (s - p * jnp.log(denom)) / p_safe
    out_ref[...] = (loss_scale * mean_log_prob_pos).astype(out_ref.dtype)


def _round_up(x, m):
    return ((x + m - 1) // m) * m


def _pick_row_tile(bsz_pad, n_pad, target):
    """Largest power-of-two row tile <= target dividing bsz_pad; keep >= 2
    grid steps when possible (v7x has two TensorCores)."""
    tm = 16                                   # multiple of 16: bf16 packing
    while tm * 2 <= min(target, bsz_pad) and bsz_pad % (tm * 2) == 0:
        tm *= 2
    while tm > 16 and n_pad // tm < 2:
        tm //= 2
    return tm


def _vmem_limit_bytes():
    # Generation-aware VMEM ceiling: ~52 MiB on v7x (64 MiB/TC), ~104 MiB on
    # v5e/v6e (128 MiB/TC).
    try:
        cap = pltpu.get_tpu_info().vmem_capacity_bytes
    except Exception:
        cap = 64 * 1024 * 1024
    return max(32 * 1024 * 1024, int(cap * 0.8))


def weight_supcon_loss(features, labels, weight=None, temperature=0.07,
                       base_temperature=0.07, compute_dtype=None,
                       row_tile_target=256):
    """features: [bsz, n_views, dim]; labels: [bsz] int; weight: [bsz,bsz]|None.

    compute_dtype: dtype of the Gram-matmul operands.  Defaults to bfloat16
    for float32 inputs (f32 accumulation is always used) -- 4-8x faster MXU on
    v5e/v6e/v7x.  Pass jnp.float32 for a bit-faithful check vs. the reference.
    """
    bsz, n_views, dim = features.shape
    n = bsz * n_views
    if compute_dtype is None:
        compute_dtype = (jnp.bfloat16 if features.dtype == jnp.float32
                         else features.dtype)

    dp = _round_up(dim, 128)
    bsz_pad = _round_up(bsz, 128)
    n_pad = n_views * bsz_pad
    tm = _pick_row_tile(bsz_pad, n_pad, row_tile_target)
    grid = (n_pad // tm,)
    blocks_per_view = bsz_pad // tm

    # View-major, per-view row-padded contrast slab: row v*bsz_pad + r holds
    # features[r, v, :]; zero rows / lanes elsewhere (exact for the dot).
    cf = jnp.transpose(features, (1, 0, 2))                  # (n_views,bsz,dim)
    cf = jnp.pad(cf, ((0, 0), (0, bsz_pad - bsz), (0, dp - dim)))
    cf = cf.reshape(n_pad, dp).astype(compute_dtype)

    labels_i = labels.reshape(-1).astype(jnp.int32)
    has_weight = weight is not None

    kernel = functools.partial(
        _supcon_kernel, n_views=n_views, bsz=bsz,
        inv_temperature=float(1.0 / temperature),
        loss_scale=float(-(temperature / base_temperature)),
        has_weight=has_weight)

    if has_weight:
        eqw = ((labels_i[:, None] == labels_i[None, :]).astype(jnp.float32)
               * weight.astype(jnp.float32))
        eqw = jnp.pad(eqw, ((0, bsz_pad - bsz), (0, bsz_pad - bsz)))
        extra_args = (eqw,)
        extra_specs = [pl.BlockSpec((tm, bsz_pad),
                                    lambda i: (i % blocks_per_view, 0))]
    else:
        lab_pad = jnp.pad(labels_i, (0, bsz_pad - bsz), constant_values=-1)
        lab_all = jnp.tile(lab_pad, n_views)
        extra_args = (lab_pad.reshape(bsz_pad, 1), lab_all.reshape(1, n_pad))
        extra_specs = [pl.BlockSpec((tm, 1),
                                    lambda i: (i % blocks_per_view, 0)),
                       pl.BlockSpec((1, n_pad), lambda i: (0, 0))]

    bytes_accessed = (int(cf.size) * cf.dtype.itemsize
                      + sum(int(a.size) * a.dtype.itemsize for a in extra_args)
                      + n_pad * 4)
    cost = pl.CostEstimate(flops=2 * n_pad * n_pad * dp,
                           transcendentals=n_pad * n_pad,
                           bytes_accessed=int(bytes_accessed))

    def build(single_buffer_slab):
        if single_buffer_slab:
            # Constant-index resident slab: one buffer is enough (it is DMA'd
            # exactly once) -- halves the dominant VMEM term (matters on v7x).
            slab_spec = pl.BlockSpec((n_pad, dp), lambda i: (0, 0),
                                     pipeline_mode=pl.Buffered(buffer_count=1))
        else:
            slab_spec = pl.BlockSpec((n_pad, dp), lambda i: (0, 0))
        return pl.pallas_call(
            kernel,
            out_shape=jax.ShapeDtypeStruct((n_pad, 1), jnp.float32),
            grid=grid,
            in_specs=[slab_spec] + extra_specs,
            out_specs=pl.BlockSpec((tm, 1), lambda i: (i, 0)),
            compiler_params=pltpu.CompilerParams(
                dimension_semantics=("parallel",),
                vmem_limit_bytes=_vmem_limit_bytes()),
            cost_estimate=cost,
        )

    try:
        per_row = build(True)(cf, *extra_args)
    except Exception:
        # pipeline_mode / Buffered(1) unsupported: default double buffering.
        per_row = build(False)(cf, *extra_args)

    # loss.view(n_views, bsz).mean() / 2  ==  sum(per-real-row) / N / 2
    real = per_row[:, 0].reshape(n_views, bsz_pad)[:, :bsz]
    return jnp.sum(real) / jnp.float32(n) / 2.0


def _reference(features, labels, weight, temperature=0.07,
               base_temperature=0.07):
    """Pure-JAX reference mirroring the PyTorch forward, for validation."""
    bsz, n_views, dim = features.shape
    n = bsz * n_views
    mask = (labels.reshape(-1, 1) == labels.reshape(1, -1)).astype(jnp.float32)
    if weight is not None:
        mask = mask * weight
    cf = jnp.transpose(features, (1, 0, 2)).reshape(n, dim)
    adc = jnp.matmul(cf, cf.T, precision=lax.Precision.HIGHEST) / temperature
    logits = adc - jnp.max(adc, axis=1, keepdims=True)
    mask = jnp.tile(mask, (n_views, n_views))
    logits_mask = 1.0 - jnp.eye(n, dtype=jnp.float32)
    mask = mask * logits_mask
    exp_logits = jnp.exp(logits) * logits_mask
    log_prob = logits - jnp.log(exp_logits.sum(1, keepdims=True))
    mpp = mask.sum(1)
    mpp = jnp.where(mpp < 1e-6, 1.0, mpp)
    mlpp = (mask * log_prob).sum(1) / mpp
    loss = -(temperature / base_temperature) * mlpp
    return loss.mean() / 2.0


if __name__ == "__main__":
    key = jax.random.PRNGKey(0)
    k1, k2, k3 = jax.random.split(key, 3)

    bsz, n_views, dim = 8, 2, 32
    features = jax.random.normal(k1, (bsz, n_views, dim), jnp.float32)
    features = features / jnp.linalg.norm(features, axis=-1, keepdims=True)
    labels = jax.random.randint(k2, (bsz,), 0, 3, jnp.int32)
    weight = jax.random.uniform(k3, (bsz, bsz), jnp.float32)

    ref_w = _reference(features, labels, weight)
    ref_u = _reference(features, labels, None)

    # f32 MXU operands: tight check against the pure-JAX reference.
    loss_w = weight_supcon_loss(features, labels, weight,
                                compute_dtype=jnp.float32)
    jax.block_until_ready(loss_w)
    assert jnp.allclose(loss_w, ref_w, rtol=2e-4, atol=2e-4), (loss_w, ref_w)

    # weight=None path (labels only, no mask DMA).
    loss_u = weight_supcon_loss(features, labels, None,
                                compute_dtype=jnp.float32)
    jax.block_until_ready(loss_u)
    assert jnp.allclose(loss_u, ref_u, rtol=2e-4, atol=2e-4), (loss_u, ref_u)

    # Default (performance) path: bf16 MXU operands, f32 accumulation.
    loss_bf = weight_supcon_loss(features, labels, weight)
    jax.block_until_ready(loss_bf)
    assert jnp.allclose(loss_bf, ref_w, rtol=5e-2, atol=5e-2), (loss_bf, ref_w)

    print("KERNEL_OK")
</pallas_src>

<mosaic_0001>
module attributes {stable_mosaic.version = 11 : i64} {
  func.func @_supcon_kernel(%arg0: i32, %arg1: memref<256x128xf32, #tpu.memory_space<vmem>>, %arg2: memref<128x128xf32, #tpu.memory_space<vmem>>, %arg3: memref<128x1xf32, #tpu.memory_space<vmem>>) attributes {dimension_semantics = [#tpu.dimension_semantics<parallel>], iteration_bounds = array<i64: 2>, scalar_prefetch = 0 : i64, scratch_operands = 0 : i64, tpu.core_type = #tpu.core_type<tc>, window_params = [{pipeline_mode = #tpu.pipeline_mode<synchronous>, transform_indices = @transform_0, window_bounds = array<i64: 256, 128>}, {transform_indices = @transform_1, window_bounds = array<i64: 128, 128>}, {transform_indices = @transform_2, window_bounds = array<i64: 128, 1>}]} {
    %c128_i32 = arith.constant 128 : i32
    %0 = arith.muli %arg0, %c128_i32 : i32
    %1 = tpu.assume_multiple %0, 128 : i32
    %2 = arith.index_cast %1 : i32 to index
    %c0 = arith.constant 0 : index
    %3 = vector.load %arg1[%2, %c0] : memref<256x128xf32, #tpu.memory_space<vmem>>, vector<128x128xf32>
    %c0_0 = arith.constant 0 : index
    %c0_1 = arith.constant 0 : index
    %4 = vector.load %arg1[%c0_0, %c0_1] : memref<256x128xf32, #tpu.memory_space<vmem>>, vector<256x128xf32>
    %cst = arith.constant dense<0.000000e+00> : vector<128x256xf32>
    %5 = tpu.matmul %3, %4, %cst {dimension_numbers = #tpu.dot_dimension_numbers<[1], [1], [0], [0], [0, 0, 1, 0], [], []>, precision = #tpu.contract_precision<fp32>} : vector<128x128xf32>, vector<256x128xf32>, vector<128x256xf32> -> vector<128x256xf32>
    %cst_2 = arith.constant 14.2857141 : f32
    %6 = vector.broadcast %cst_2 : f32 to vector<128x256xf32>
    %7 = arith.mulf %5, %6 : vector<128x256xf32>
    %8 = tpu.iota {dimensions = array<i32: 1>} : vector<128x256xi32>
    %c128_i32_3 = arith.constant 128 : i32
    %9 = arith.muli %arg0, %c128_i32_3 : i32
    %10 = tpu.iota {dimensions = array<i32: 0>} : vector<128x256xi32>
    %11 = vector.broadcast %9 : i32 to vector<128x256xi32>
    %12 = arith.addi %11, %10 : vector<128x256xi32>
    %c0_i32 = arith.constant 0 : i32
    %13 = vector.broadcast %c0_i32 : i32 to vector<128x256xi32>
    %14 = arith.cmpi slt, %8, %13 : vector<128x256xi32>
    %c0_i32_4 = arith.constant 0 : i32
    %15 = vector.broadcast %c0_i32_4 : i32 to vector<128x256xi32>
    %16 = arith.cmpi sge, %8, %15 : vector<128x256xi32>
    %c8_i32 = arith.constant 8 : i32
    %17 = vector.broadcast %c8_i32 : i32 to vector<128x256xi32>
    %18 = arith.cmpi slt, %8, %17 : vector<128x256xi32>
    %19 = arith.andi %16, %18 : vector<128x256xi1>
    %20 = arith.ori %14, %19 : vector<128x256xi1>
    %c128_i32_5 = arith.constant 128 : i32
    %21 = vector.broadcast %c128_i32_5 : i32 to vector<128x256xi32>
    %22 = arith.cmpi sge, %8, %21 : vector<128x256xi32>
    %c136_i32 = arith.constant 136 : i32
    %23 = vector.broadcast %c136_i32 : i32 to vector<128x256xi32>
    %24 = arith.cmpi slt, %8, %23 : vector<128x256xi32>
    %25 = arith.andi %22, %24 : vector<128x256xi1>
    %26 = arith.ori %20, %25 : vector<128x256xi1>
    %27 = arith.cmpi ne, %8, %12 : vector<128x256xi32>
    %28 = arith.andi %26, %27 : vector<128x256xi1>
    %cst_6 = arith.constant 0xFF800000 : f32
    %29 = vector.broadcast %cst_6 : f32 to vector<128x256xf32>
    %30 = arith.select %26, %7, %29 : vector<128x256xi1>, vector<128x256xf32>
    %cst_7 = arith.constant dense<0xFF800000> : vector<128xf32>
    %31 = vector.multi_reduction <maximumf>, %30, %cst_7 [1] : vector<128x256xf32> to vector<128xf32>
    %32 = vector.shape_cast %31 : vector<128xf32> to vector<128x1xf32>
    %33 = vector.broadcast %32 : vector<128x1xf32> to vector<128x256xf32>
    %34 = arith.subf %7, %33 : vector<128x256xf32>
    %cst_8 = arith.constant 0xFF800000 : f32
    %35 = vector.broadcast %cst_8 : f32 to vector<128x256xf32>
    %36 = arith.select %28, %34, %35 : vector<128x256xi1>, vector<128x256xf32>
    %37 = math.exp %36 : vector<128x256xf32>
    %cst_9 = arith.constant dense<0.000000e+00> : vector<128xf32>
    %38 = vector.multi_reduction <add>, %37, %cst_9 [1] : vector<128x256xf32> to vector<128xf32>
    %39 = vector.shape_cast %38 : vector<128xf32> to vector<128x1xf32>
    %c0_10 = arith.constant 0 : index
    %c0_11 = arith.constant 0 : index
    %40 = vector.load %arg2[%c0_10, %c0_11] : memref<128x128xf32, #tpu.memory_space<vmem>>, vector<128x128xf32>
    %cst_12 = arith.constant 0.000000e+00 : f32
    %41 = vector.broadcast %cst_12 : f32 to vector<128x1xf32>
    %cst_13 = arith.constant 0.000000e+00 : f32
    %42 = vector.broadcast %cst_13 : f32 to vector<128x1xf32>
    %43 = vector.extract_strided_slice %28 {offsets = [0, 0], sizes = [128, 128], strides = [1, 1]} : vector<128x256xi1> to vector<128x128xi1>
    %44 = vector.extract_strided_slice %34 {offsets = [0, 0], sizes = [128, 128], strides = [1, 1]} : vector<128x256xf32> to vector<128x128xf32>
    %cst_14 = arith.constant 0.000000e+00 : f32
    %45 = vector.broadcast %cst_14 : f32 to vector<128x128xf32>
    %46 = arith.select %43, %40, %45 : vector<128x128xi1>, vector<128x128xf32>
    %cst_15 = arith.constant dense<0.000000e+00> : vector<128xf32>
    %47 = vector.multi_reduction <add>, %46, %cst_15 [1] : vector<128x128xf32> to vector<128xf32>
    %48 = vector.shape_cast %47 : vector<128xf32> to vector<128x1xf32>
    %49 = arith.addf %41, %48 : vector<128x1xf32>
    %50 = arith.mulf %46, %44 : vector<128x128xf32>
    %cst_16 = arith.constant dense<0.000000e+00> : vector<128xf32>
    %51 = vector.multi_reduction <add>, %50, %cst_16 [1] : vector<128x128xf32> to vector<128xf32>
    %52 = vector.shape_cast %51 : vector<128xf32> to vector<128x1xf32>
    %53 = arith.addf %42, %52 : vector<128x1xf32>
    %54 = vector.extract_strided_slice %28 {offsets = [0, 128], sizes = [128, 128], strides = [1, 1]} : vector<128x256xi1> to vector<128x128xi1>
    %55 = vector.extract_strided_slice %34 {offsets = [0, 128], sizes = [128, 128], strides = [1, 1]} : vector<128x256xf32> to vector<128x128xf32>
    %cst_17 = arith.constant 0.000000e+00 : f32
    %56 = vector.broadcast %cst_17 : f32 to vector<128x128xf32>
    %57 = arith.select %54, %40, %56 : vector<128x128xi1>, vector<128x128xf32>
    %cst_18 = arith.constant dense<0.000000e+00> : vector<128xf32>
    %58 = vector.multi_reduction <add>, %57, %cst_18 [1] : vector<128x128xf32> to vector<128xf32>
    %59 = vector.shape_cast %58 : vector<128xf32> to vector<128x1xf32>
    %60 = arith.addf %49, %59 : vector<128x1xf32>
    %61 = arith.mulf %57, %55 : vector<128x128xf32>
    %cst_19 = arith.constant dense<0.000000e+00> : vector<128xf32>
    %62 = vector.multi_reduction <add>, %61, %cst_19 [1] : vector<128x128xf32> to vector<128xf32>
    %63 = vector.shape_cast %62 : vector<128xf32> to vector<128x1xf32>
    %64 = arith.addf %53, %63 : vector<128x1xf32>
    %cst_20 = arith.constant 9.99999997E-7 : f32
    %65 = vector.broadcast %cst_20 : f32 to vector<128x1xf32>
    %66 = arith.cmpf olt, %60, %65 : vector<128x1xf32>
    %cst_21 = arith.constant 1.000000e+00 : f32
    %67 = vector.broadcast %cst_21 : f32 to vector<128x1xf32>
    %68 = arith.select %66, %67, %60 : vector<128x1xi1>, vector<128x1xf32>
    %69 = math.log %39 : vector<128x1xf32>
    %70 = arith.mulf %60, %69 : vector<128x1xf32>
    %71 = arith.subf %64, %70 : vector<128x1xf32>
    %72 = arith.divf %71, %68 : vector<128x1xf32>
    %cst_22 = arith.constant -1.000000e+00 : f32
    %73 = vector.broadcast %cst_22 : f32 to vector<128x1xf32>
    %74 = arith.mulf %73, %72 : vector<128x1xf32>
    %c0_23 = arith.constant 0 : index
    %c0_24 = arith.constant 0 : index
    %75 = vector.load %arg3[%c0_23, %c0_24] : memref<128x1xf32, #tpu.memory_space<vmem>>, vector<128x1xf32>
    tpu.vector_store %arg3[%c0_23, %c0_24], %74 {strides = array<i32>} : memref<128x1xf32, #tpu.memory_space<vmem>>, vector<128x1xf32>,
    return
  }
  func.func @transform_0(%arg0: i32) -> (i32, i32) {
    %c0_i32 = arith.constant 0 : i32
    %c0_i32_0 = arith.constant 0 : i32
    %c0_i32_1 = arith.constant 0 : i32
    return %c0_i32, %c0_i32_0 : i32, i32
  }
  func.func @transform_1(%arg0: i32) -> (i32, i32) {
    %c1_i32 = arith.constant 1 : i32
    %c0_i32 = arith.constant 0 : i32
    %0 = arith.cmpi eq, %c1_i32, %c0_i32 : i32
    %c1_i32_0 = arith.constant 1 : i32
    %1 = arith.select %0, %c1_i32_0, %c1_i32 : i32
    %2 = arith.remsi %arg0, %1 : i32
    %c0_i32_1 = arith.constant 0 : i32
    %3 = arith.cmpi ne, %2, %c0_i32_1 : i32
    %c0_i32_2 = arith.constant 0 : i32
    %4 = arith.cmpi slt, %2, %c0_i32_2 : i32
    %c0_i32_3 = arith.constant 0 : i32
    %5 = arith.cmpi slt, %1, %c0_i32_3 : i32
    %6 = arith.xori %4, %5 : i1
    %7 = arith.andi %6, %3 : i1
    %8 = arith.addi %2, %1 : i32
    %9 = arith.select %7, %8, %2 : i32
    %c0_i32_4 = arith.constant 0 : i32
    %c0_i32_5 = arith.constant 0 : i32
    return %9, %c0_i32_4 : i32, i32
  }
  func.func @transform_2(%arg0: i32) -> (i32, i32) {
    %c0_i32 = arith.constant 0 : i32
    %c0_i32_0 = arith.constant 0 : i32
    return %arg0, %c0_i32 : i32, i32
  }
}

module attributes {stable_mosaic.version = 11 : i64} {
  func.func @_supcon_kernel(%arg0: i32, %arg1: memref<256x128xf32, #tpu.memory_space<vmem>>, %arg2: memref<128x128xf32, #tpu.memory_space<vmem>>, %arg3: memref<128x1xf32, #tpu.memory_space<vmem>>) attributes {dimension_semantics = [#tpu.dimension_semantics<parallel>], iteration_bounds = array<i64: 2>, scalar_prefetch = 0 : i64, scratch_operands = 0 : i64, tpu.core_type = #tpu.core_type<tc>, window_params = [{pipeline_mode = #tpu.pipeline_mode<synchronous>, transform_indices = @transform_0, window_bounds = array<i64: 256, 128>}, {transform_indices = @transform_1, window_bounds = array<i64: 128, 128>}, {transform_indices = @transform_2, window_bounds = array<i64: 128, 1>}]} {
    %c128_i32 = arith.constant 128 : i32
    %0 = arith.muli %arg0, %c128_i32 : i32
    %1 = tpu.assume_multiple %0, 128 : i32
    %2 = arith.index_cast %1 : i32 to index
    %c0 = arith.constant 0 : index
    %3 = vector.load %arg1[%2, %c0] : memref<256x128xf32, #tpu.memory_space<vmem>>, vector<128x128xf32>
    %c0_0 = arith.constant 0 : index
    %c0_1 = arith.constant 0 : index
    %4 = vector.load %arg1[%c0_0, %c0_1] : memref<256x128xf32, #tpu.memory_space<vmem>>, vector<256x128xf32>
    %cst = arith.constant dense<0.000000e+00> : vector<128x256xf32>
    %5 = tpu.matmul %3, %4, %cst {dimension_numbers = #tpu.dot_dimension_numbers<[1], [1], [0], [0], [0, 0, 1, 0], [], []>, precision = #tpu.contract_precision<fp32>} : vector<128x128xf32>, vector<256x128xf32>, vector<128x256xf32> -> vector<128x256xf32>
    %cst_2 = arith.constant 14.2857141 : f32
    %6 = vector.broadcast %cst_2 : f32 to vector<128x256xf32>
    %7 = arith.mulf %5, %6 : vector<128x256xf32>
    %8 = tpu.iota {dimensions = array<i32: 1>} : vector<128x256xi32>
    %c128_i32_3 = arith.constant 128 : i32
    %9 = arith.muli %arg0, %c128_i32_3 : i32
    %10 = tpu.iota {dimensions = array<i32: 0>} : vector<128x256xi32>
    %11 = vector.broadcast %9 : i32 to vector<128x256xi32>
    %12 = arith.addi %11, %10 : vector<128x256xi32>
    %c0_i32 = arith.constant 0 : i32
    %13 = vector.broadcast %c0_i32 : i32 to vector<128x256xi32>
    %14 = arith.cmpi slt, %8, %13 : vector<128x256xi32>
    %c0_i32_4 = arith.constant 0 : i32
    %15 = vector.broadcast %c0_i32_4 : i32 to vector<128x256xi32>
    %16 = arith.cmpi sge, %8, %15 : vector<128x256xi32>
    %c8_i32 = arith.constant 8 : i32
    %17 = vector.broadcast %c8_i32 : i32 to vector<128x256xi32>
    %18 = arith.cmpi slt, %8, %17 : vector<128x256xi32>
    %19 = arith.andi %16, %18 : vector<128x256xi1>
    %20 = arith.ori %14, %19 : vector<128x256xi1>
    %c128_i32_5 = arith.constant 128 : i32
    %21 = vector.broadcast %c128_i32_5 : i32 to vector<128x256xi32>
    %22 = arith.cmpi sge, %8, %21 : vector<128x256xi32>
    %c136_i32 = arith.constant 136 : i32
    %23 = vector.broadcast %c136_i32 : i32 to vector<128x256xi32>
    %24 = arith.cmpi slt, %8, %23 : vector<128x256xi32>
    %25 = arith.andi %22, %24 : vector<128x256xi1>
    %26 = arith.ori %20, %25 : vector<128x256xi1>
    %27 = arith.cmpi ne, %8, %12 : vector<128x256xi32>
    %28 = arith.andi %26, %27 : vector<128x256xi1>
    %cst_6 = arith.constant 0xFF800000 : f32
    %29 = vector.broadcast %cst_6 : f32 to vector<128x256xf32>
    %30 = arith.select %26, %7, %29 : vector<128x256xi1>, vector<128x256xf32>
    %cst_7 = arith.constant dense<0xFF800000> : vector<128xf32>
    %31 = vector.multi_reduction <maximumf>, %30, %cst_7 [1] : vector<128x256xf32> to vector<128xf32>
    %32 = vector.shape_cast %31 : vector<128xf32> to vector<128x1xf32>
    %33 = vector.broadcast %32 : vector<128x1xf32> to vector<128x256xf32>
    %34 = arith.subf %7, %33 : vector<128x256xf32>
    %cst_8 = arith.constant 0xFF800000 : f32
    %35 = vector.broadcast %cst_8 : f32 to vector<128x256xf32>
    %36 = arith.select %28, %34, %35 : vector<128x256xi1>, vector<128x256xf32>
    %37 = math.exp %36 : vector<128x256xf32>
    %cst_9 = arith.constant dense<0.000000e+00> : vector<128xf32>
    %38 = vector.multi_reduction <add>, %37, %cst_9 [1] : vector<128x256xf32> to vector<128xf32>
    %39 = vector.shape_cast %38 : vector<128xf32> to vector<128x1xf32>
    %c0_10 = arith.constant 0 : index
    %c0_11 = arith.constant 0 : index
    %40 = vector.load %arg2[%c0_10, %c0_11] : memref<128x128xf32, #tpu.memory_space<vmem>>, vector<128x128xf32>
    %cst_12 = arith.constant 0.000000e+00 : f32
    %41 = vector.broadcast %cst_12 : f32 to vector<128x1xf32>
    %cst_13 = arith.constant 0.000000e+00 : f32
    %42 = vector.broadcast %cst_13 : f32 to vector<128x1xf32>
    %43 = vector.extract_strided_slice %28 {offsets = [0, 0], sizes = [128, 128], strides = [1, 1]} : vector<128x256xi1> to vector<128x128xi1>
    %44 = vector.extract_strided_slice %34 {offsets = [0, 0], sizes = [128, 128], strides = [1, 1]} : vector<128x256xf32> to vector<128x128xf32>
    %cst_14 = arith.constant 0.000000e+00 : f32
    %45 = vector.broadcast %cst_14 : f32 to vector<128x128xf32>
    %46 = arith.select %43, %40, %45 : vector<128x128xi1>, vector<128x128xf32>
    %cst_15 = arith.constant dense<0.000000e+00> : vector<128xf32>
    %47 = vector.multi_reduction <add>, %46, %cst_15 [1] : vector<128x128xf32> to vector<128xf32>
    %48 = vector.shape_cast %47 : vector<128xf32> to vector<128x1xf32>
    %49 = arith.addf %41, %48 : vector<128x1xf32>
    %50 = arith.mulf %46, %44 : vector<128x128xf32>
    %cst_16 = arith.constant dense<0.000000e+00> : vector<128xf32>
    %51 = vector.multi_reduction <add>, %50, %cst_16 [1] : vector<128x128xf32> to vector<128xf32>
    %52 = vector.shape_cast %51 : vector<128xf32> to vector<128x1xf32>
    %53 = arith.addf %42, %52 : vector<128x1xf32>
    %54 = vector.extract_strided_slice %28 {offsets = [0, 128], sizes = [128, 128], strides = [1, 1]} : vector<128x256xi1> to vector<128x128xi1>
    %55 = vector.extract_strided_slice %34 {offsets = [0, 128], sizes = [128, 128], strides = [1, 1]} : vector<128x256xf32> to vector<128x128xf32>
    %cst_17 = arith.constant 0.000000e+00 : f32
    %56 = vector.broadcast %cst_17 : f32 to vector<128x128xf32>
    %57 = arith.select %54, %40, %56 : vector<128x128xi1>, vector<128x128xf32>
    %cst_18 = arith.constant dense<0.000000e+00> : vector<128xf32>
    %58 = vector.multi_reduction <add>, %57, %cst_18 [1] : vector<128x128xf32> to vector<128xf32>
    %59 = vector.shape_cast %58 : vector<128xf32> to vector<128x1xf32>
    %60 = arith.addf %49, %59 : vector<128x1xf32>
    %61 = arith.mulf %57, %55 : vector<128x128xf32>
    %cst_19 = arith.constant dense<0.000000e+00> : vector<128xf32>
    %62 = vector.multi_reduction <add>, %61, %cst_19 [1] : vector<128x128xf32> to vector<128xf32>
    %63 = vector.shape_cast %62 : vector<128xf32> to vector<128x1xf32>
    %64 = arith.addf %53, %63 : vector<128x1xf32>
    %cst_20 = arith.constant 9.99999997E-7 : f32
    %65 = vector.broadcast %cst_20 : f32 to vector<128x1xf32>
    %66 = arith.cmpf olt, %60, %65 : vector<128x1xf32>
    %cst_21 = arith.constant 1.000000e+00 : f32
    %67 = vector.broadcast %cst_21 : f32 to vector<128x1xf32>
    %68 = arith.select %66, %67, %60 : vector<128x1xi1>, vector<128x1xf32>
    %69 = math.log %39 : vector<128x1xf32>
    %70 = arith.mulf %60, %69 : vector<128x1xf32>
    %71 = arith.subf %64, %70 : vector<128x1xf32>
    %72 = arith.divf %71, %68 : vector<128x1xf32>
    %cst_22 = arith.constant -1.000000e+00 : f32
    %73 = vector.broadcast %cst_22 : f32 to vector<128x1xf32>
    %74 = arith.mulf %73, %72 : vector<128x1xf32>
    %c0_23 = arith.constant 0 : index
    %c0_24 = arith.constant 0 : index
    %75 = vector.load %arg3[%c0_23, %c0_24] : memref<128x1xf32, #tpu.memory_space<vmem>>, vector<128x1xf32>
    tpu.vector_store %arg3[%c0_23, %c0_24], %74 {strides = array<i32>} : memref<128x1xf32, #tpu.memory_space<vmem>>, vector<128x1xf32>,
    return
  }
  func.func @transform_0(%arg0: i32) -> (i32, i32) {
    %c0_i32 = arith.constant 0 : i32
    %c0_i32_0 = arith.constant 0 : i32
    %c0_i32_1 = arith.constant 0 : i32
    return %c0_i32, %c0_i32_0 : i32, i32
  }
  func.func @transform_1(%arg0: i32) -> (i32, i32) {
    %c1_i32 = arith.constant 1 : i32
    %c0_i32 = arith.constant 0 : i32
    %0 = arith.cmpi eq, %c1_i32, %c0_i32 : i32
    %c1_i32_0 = arith.constant 1 : i32
    %1 = arith.select %0, %c1_i32_0, %c1_i32 : i32
    %2 = arith.remsi %arg0, %1 : i32
    %c0_i32_1 = arith.constant 0 : i32
    %3 = arith.cmpi ne, %2, %c0_i32_1 : i32
    %c0_i32_2 = arith.constant 0 : i32
    %4 = arith.cmpi slt, %2, %c0_i32_2 : i32
    %c0_i32_3 = arith.constant 0 : i32
    %5 = arith.cmpi slt, %1, %c0_i32_3 : i32
    %6 = arith.xori %4, %5 : i1
    %7 = arith.andi %6, %3 : i1
    %8 = arith.addi %2, %1 : i32
    %9 = arith.select %7, %8, %2 : i32
    %c0_i32_4 = arith.constant 0 : i32
    %c0_i32_5 = arith.constant 0 : i32
    return %9, %c0_i32_4 : i32, i32
  }
  func.func @transform_2(%arg0: i32) -> (i32, i32) {
    %c0_i32 = arith.constant 0 : i32
    %c0_i32_0 = arith.constant 0 : i32
    return %arg0, %c0_i32 : i32, i32
  }
}

</mosaic_0001>

<llo_original>
// kernel: tpu_custom_call.1
$region0: #{tpu_custom_call.1}
  #allocation0 [shape = 'u32[]', space=smem, size = 0x4, offset = 0x4, fixed_abs, tag = 'smem constant byte address 0x4 - core index']
  #allocation1 [shape = 'u32[144,128]{1,0:T(1,128)}', space=vmem, size = 0x12000, scoped, tag = 'internal scratch']
  %s0 = inlined_call_operand.hbm [shape: f32[256,128], index: 0, kind: input, shape index: {}]
  %s1 = inlined_call_operand.hbm [shape: f32[128,128], index: 1, kind: input, shape index: {}]
  %s2 = inlined_call_operand.vmem [shape: f32[256,1], index: 2, kind: output, shape index: {}]
  %s3 = sld [smem:[#allocation0]]
  $region49: #{tpu_custom_call.1} parent=0
    _
  %s5 = ssub.s32 1, %s3
  %s6 = scalar_select 0, %s5, %s3
  $region1: #{tpu_custom_call.1} parent=0
    #allocation2 [shape = 'u8[131072]{0}', space=vmem, size = 0x20000, scoped, tag = 'input window, operand 0, single buffered']
    #allocation3 [shape = 's32[2]{0}', space=sflag, size = 0x8, scoped, tag = 'scoped memory for tpu_custom_call.1']
    #allocation4 [shape = 'u8[65536]{0}', space=vmem, size = 0x10000, scoped, tag = 'input window, operand 1, single buffered']
    #allocation5 [shape = 's32[1]{0}', space=sflag, size = 0x4, scoped, tag = 'scoped memory for tpu_custom_call.1']
    %7 = vsyncpa [#allocation3], 0
    %8 = vsyncpa [#allocation5], 0
    loop: start=0, step=1, limit=4
    $region2: #{tpu_custom_call.1} parent=1 // loop_pre_header
      _
    $region3: #{tpu_custom_call.1} parent=1 // loop_header
      %s10 = sphi 0, %s14
      %p11 = scmp.ge.s32.totalorder %s10, 4
      %s18 = sphi 0, %s18
      %s20 = sphi 0, %s18
      %s21 = sphi 0, %s20
      %s35 = sphi 0, %s21
      %s39 = sphi 0, %s39
      %s41 = sphi 0, %s39
      %s42 = sphi 0, %s41
      %s56 = sphi 0, %s42
      %s62 = sphi 0, %s64
      %s65 = sphi 0, %s62
      %s66 = sphi 0, %s65
      %s82 = sphi 0, %s66
    $region4: #{tpu_custom_call.1} parent=1 // loop_header_branch
      %13 = sbr.rel (%p11) target = $region8
    $region5: #{tpu_custom_call.1} parent=1 // loop_body
      %s15 = ssub.s32 %s10, 1
      %s16 = ssub.s32 %s10, 2
      %s17 = sadd.s32 %s10, 1
      %s19 = sadd.s32 %s18, 1
      %p22 = scmp.eq.s32.totalorder %s10, 1
      %p23 = scmp.ne.s32.totalorder %s18, %s20
      %p24 = scmp.eq.s32.totalorder %s10, 0
      %p25 = por %p23, %p24
      %p26 = scmp.ne.s32.totalorder %s18, %s20
      %p27 = scmp.eq.s32.totalorder %s15, 1
      %p28 = por %p26, %p27
      %p29 = scmp.ne.s32.totalorder %s20, %s21
      %p30 = scmp.eq.s32.totalorder %s15, 0
      %p31 = por %p29, %p30
      %p32 = scmp.ne.s32.totalorder %s20, %s21
      %p33 = scmp.eq.s32.totalorder %s16, 1
      %p34 = por %p32, %p33
      %p36 = scmp.ne.s32.totalorder %s21, %s35
      %p37 = scmp.eq.s32.totalorder %s16, 0
      %p38 = por %p36, %p37
      %s40 = sadd.s32 %s39, 1
      %p43 = scmp.eq.s32.totalorder %s10, 1
      %p44 = scmp.ne.s32.totalorder %s39, %s41
      %p45 = scmp.eq.s32.totalorder %s10, 0
      %p46 = por %p44, %p45
      %p47 = scmp.ne.s32.totalorder %s39, %s41
      %p48 = scmp.eq.s32.totalorder %s15, 1
      %p49 = por %p47, %p48
      %p50 = scmp.ne.s32.totalorder %s41, %s42
      %p51 = scmp.eq.s32.totalorder %s15, 0
      %p52 = por %p50, %p51
      %p53 = scmp.ne.s32.totalorder %s41, %s42
      %p54 = scmp.eq.s32.totalorder %s16, 1
      %p55 = por %p53, %p54
      %p57 = scmp.ne.s32.totalorder %s42, %s56
      %p58 = scmp.eq.s32.totalorder %s16, 0
      %p59 = por %p57, %p58
      %s60 = ssub.s32 %s10, %s17
      %p61 = scmp.eq.s32.totalorder %s60, 0
      %s63 = sadd.s32 %s62, 1
      %s64 = scalar_select %p61, %s62, %s63
      %p67 = pneg %p61
      %p68 = scmp.eq.s32.totalorder %s10, 1
      %p69 = por %p67, %p68
      %p70 = scmp.ne.s32.totalorder %s62, %s65
      %p71 = scmp.eq.s32.totalorder %s10, 0
      %p72 = por %p70, %p71
      %p73 = scmp.ne.s32.totalorder %s62, %s65
      %p74 = scmp.eq.s32.totalorder %s15, 1
      %p75 = por %p73, %p74
      %p76 = scmp.ne.s32.totalorder %s65, %s66
      %p77 = scmp.eq.s32.totalorder %s15, 0
      %p78 = por %p76, %p77
      %p79 = scmp.ne.s32.totalorder %s65, %s66
      %p80 = scmp.eq.s32.totalorder %s16, 1
      %p81 = por %p79, %p80
      %p83 = scmp.ne.s32.totalorder %s66, %s82
      %p84 = scmp.eq.s32.totalorder %s16, 0
      %p85 = por %p83, %p84
      %p86 = scmp.le.s32.totalorder 1, %s10
      %p87 = scmp.lt.s32.totalorder %s10, 3
      %p88 = pnand %p86, %p87
      %p89 = pneg %p88
      // Predicated region
      $region9: #{tpu_custom_call.1} parent=5 // pred_check
        _
      $region10: #{tpu_custom_call.1} parent=5 // pred_check_branch
        %91 = sbr.rel (%p88) target = $region12
      $region11: #{tpu_custom_call.1} parent=5 // pred_region
        %s92 = ssub.s32 %s10, 1
        // Predicated region
        $region13: #{tpu_custom_call.1} parent=11 // pred_check
          %p93 = pneg %p31
        $region14: #{tpu_custom_call.1} parent=11 // pred_check_branch
          %95 = sbr.rel (%p93) target = $region16
        $region15: #{tpu_custom_call.1} parent=11 // pred_region
          %s97 = ssub.s32 4096, 4096
          %98 = vsyncadd [#allocation3], %s97
          %s99 = sshll.u32 [#allocation2], 4
          %s100 = int_to_ptr.vmem [resolvable:$true] %s99
          %105 = dma.hbm_to_vmem [thread:$0]  %s0, 4096, %s100, [#allocation3], 128, 128, 8
        $region16: #{tpu_custom_call.1} parent=11 // pred_fallthru
          _
        // Predicated region
        $region17: #{tpu_custom_call.1} parent=11 // pred_check
          %p106 = pneg %p52
        $region18: #{tpu_custom_call.1} parent=11 // pred_check_branch
          %108 = sbr.rel (%p106) target = $region20
        $region19: #{tpu_custom_call.1} parent=11 // pred_region
          %s110 = ssub.s32 2048, 2048
          %111 = vsyncadd [#allocation5], %s110
          %s112 = sshll.u32 [#allocation4], 4
          %s113 = int_to_ptr.vmem [resolvable:$true] %s112
          %118 = dma.hbm_to_vmem [thread:$0]  %s1, 2048, %s113, [#allocation5], 128, 128, 8
        $region20: #{tpu_custom_call.1} parent=11 // pred_fallthru
          _
      $region12: #{tpu_custom_call.1} parent=5 // pred_fallthru
        _
      %p119 = scmp.lt.s32.totalorder %s10, 2
      // Predicated region
      $region21: #{tpu_custom_call.1} parent=5 // pred_check
        %p120 = pneg %p119
      $region22: #{tpu_custom_call.1} parent=5 // pred_check_branch
        %122 = sbr.rel (%p120) target = $region24
      $region23: #{tpu_custom_call.1} parent=5 // pred_region
        _
      $region24: #{tpu_custom_call.1} parent=5 // pred_fallthru
        _
      %p123 = scmp.le.s32.totalorder 1, %s10
      %p124 = scmp.lt.s32.totalorder %s10, 3
      %p125 = pnand %p123, %p124
      %p126 = pneg %p125
      // Predicated region
      $region25: #{tpu_custom_call.1} parent=5 // pred_check
        _
      $region26: #{tpu_custom_call.1} parent=5 // pred_check_branch
        %128 = sbr.rel (%p125) target = $region28
      $region27: #{tpu_custom_call.1} parent=5 // pred_region
        %s129 = ssub.s32 %s10, 1
        // Predicated region
        $region29: #{tpu_custom_call.1} parent=27 // pred_check
          %p130 = pneg %p31
        $region30: #{tpu_custom_call.1} parent=27 // pred_check_branch
          %132 = sbr.rel (%p130) target = $region32
        $region31: #{tpu_custom_call.1} parent=27 // pred_region
          %133 = dma.done [#allocation3], 4096
        $region32: #{tpu_custom_call.1} parent=27 // pred_fallthru
          _
        // Predicated region
        $region33: #{tpu_custom_call.1} parent=27 // pred_check
          %p134 = pneg %p52
        $region34: #{tpu_custom_call.1} parent=27 // pred_check_branch
          %136 = sbr.rel (%p134) target = $region36
        $region35: #{tpu_custom_call.1} parent=27 // pred_region
          %137 = dma.done [#allocation5], 2048
        $region36: #{tpu_custom_call.1} parent=27 // pred_fallthru
          _
        %p138 = pneg %p31
        %p139 = pneg %p28
        %p140 = pneg %p52
        %p141 = pneg %p49
        %p142 = pneg %p78
        %p143 = pneg %p75
        %s144 = smul.u32 16, %s15
        %p145 = scmp.lt.s32.totalorder %s144, 31
        %s146 = scalar_select %p145, %s144, 31
        %s147 = smul.addr %s146, 8
        %s148 = scalar_lea.vmem %s2, %s147
        %s149 = smul.u32 16, %s15
        %p150 = scmp.lt.s32.totalorder %s149, 31
        %s151 = scalar_select %p150, %s149, 31
        %s152 = smul.addr %s151, 8
        %s153 = scalar_lea.vmem %s2, %s152
        %s154 = smul.u32 16, %s15
        %s155 = smul.u32 %s15, 128
        %s156 = scalar_lea.vmem [#allocation2], %s155
        %v157 = vld [vmem:[%s156] sm:$0xff]
        %v158 = vld [vmem:[%s156 + $0x8] sm:$0xff]
        %v159 = vld [vmem:[%s156 + $0x10] sm:$0xff]
        %v160 = vld [vmem:[%s156 + $0x18] sm:$0xff]
        %v161 = vld [vmem:[%s156 + $0x20] sm:$0xff]
        %v162 = vld [vmem:[%s156 + $0x28] sm:$0xff]
        %v163 = vld [vmem:[%s156 + $0x30] sm:$0xff]
        %v164 = vld [vmem:[%s156 + $0x38] sm:$0xff]
        %v165 = vld [vmem:[%s156 + $0x40] sm:$0xff]
        %v166 = vld [vmem:[%s156 + $0x48] sm:$0xff]
        %v167 = vld [vmem:[%s156 + $0x50] sm:$0xff]
        %v168 = vld [vmem:[%s156 + $0x58] sm:$0xff]
        %v169 = vld [vmem:[%s156 + $0x60] sm:$0xff]
        %v170 = vld [vmem:[%s156 + $0x68] sm:$0xff]
        %v171 = vld [vmem:[%s156 + $0x70] sm:$0xff]
        %v172 = vld [vmem:[%s156 + $0x78] sm:$0xff]
        %v173 = vld [vmem:[#allocation2] sm:$0xff]
        %v174 = vld [vmem:[#allocation2 + $0x8] sm:$0xff]
        %v175 = vld [vmem:[#allocation2 + $0x10] sm:$0xff]
        %v176 = vld [vmem:[#allocation2 + $0x18] sm:$0xff]
        %v177 = vld [vmem:[#allocation2 + $0x20] sm:$0xff]
        %v178 = vld [vmem:[#allocation2 + $0x28] sm:$0xff]
        %v179 = vld [vmem:[#allocation2 + $0x30] sm:$0xff]
        %v180 = vld [vmem:[#allocation2 + $0x38] sm:$0xff]
        %v181 = vld [vmem:[#allocation2 + $0x40] sm:$0xff]
        %v182 = vld [vmem:[#allocation2 + $0x48] sm:$0xff]
        %v183 = vld [vmem:[#allocation2 + $0x50] sm:$0xff]
        %v184 = vld [vmem:[#allocation2 + $0x58] sm:$0xff]
        %v185 = vld [vmem:[#allocation2 + $0x60] sm:$0xff]
        %v186 = vld [vmem:[#allocation2 + $0x68] sm:$0xff]
        %v187 = vld [vmem:[#allocation2 + $0x70] sm:$0xff]
        %v188 = vld [vmem:[#allocation2 + $0x78] sm:$0xff]
        %v189 = vld [vmem:[#allocation2 + $0x80] sm:$0xff]
        %v190 = vld [vmem:[#allocation2 + $0x88] sm:$0xff]
        %v191 = vld [vmem:[#allocation2 + $0x90] sm:$0xff]
        %v192 = vld [vmem:[#allocation2 + $0x98] sm:$0xff]
        %v193 = vld [vmem:[#allocation2 + $0xa0] sm:$0xff]
        %v194 = vld [vmem:[#allocation2 + $0xa8] sm:$0xff]
        %v195 = vld [vmem:[#allocation2 + $0xb0] sm:$0xff]
        %v196 = vld [vmem:[#allocation2 + $0xb8] sm:$0xff]
        %v197 = vld [vmem:[#allocation2 + $0xc0] sm:$0xff]
        %v198 = vld [vmem:[#allocation2 + $0xc8] sm:$0xff]
        %v199 = vld [vmem:[#allocation2 + $0xd0] sm:$0xff]
        %v200 = vld [vmem:[#allocation2 + $0xd8] sm:$0xff]
        %v201 = vld [vmem:[#allocation2 + $0xe0] sm:$0xff]
        %v202 = vld [vmem:[#allocation2 + $0xe8] sm:$0xff]
        %v203 = vld [vmem:[#allocation2 + $0xf0] sm:$0xff]
        %v204 = vld [vmem:[#allocation2 + $0xf8] sm:$0xff]
        %205 = vmatprep.subr.mxu0 0.0
        %v206 = vand.u32 %v173, 4294901760
        %207 = vmatpush1.xpose.msra.mxu0 %v206
        %208 = vmatprep.subr.mxu0 0.0
        %v209 = vand.u32 %v174, 4294901760
        %210 = vmatpush1.xpose.msra.mxu0 %v209
        %211 = vmatprep.subr.mxu0 0.0
        %v212 = vand.u32 %v175, 4294901760
        %213 = vmatpush1.xpose.msra.mxu0 %v212
        %214 = vmatprep.subr.mxu0 0.0
        %v215 = vand.u32 %v176, 4294901760
        %216 = vmatpush1.xpose.msra.mxu0 %v215
        %217 = vmatprep.subr.mxu0 0.0
        %v218 = vand.u32 %v177, 4294901760
        %219 = vmatpush1.xpose.msra.mxu0 %v218
        %220 = vmatprep.subr.mxu0 0.0
        %v221 = vand.u32 %v178, 4294901760
        %222 = vmatpush1.xpose.msra.mxu0 %v221
        %223 = vmatprep.subr.mxu0 0.0
        %v224 = vand.u32 %v179, 4294901760
        %225 = vmatpush1.xpose.msra.mxu0 %v224
        %226 = vmatprep.subr.mxu0 0.0
        %v227 = vand.u32 %v180, 4294901760
        %228 = vmatpush1.xpose.msra.mxu0 %v227
        %229 = vmatprep.subr.mxu0 0.0
        %v230 = vand.u32 %v181, 4294901760
        %231 = vmatpush1.xpose.msra.mxu0 %v230
        %232 = vmatprep.subr.mxu0 0.0
        %v233 = vand.u32 %v182, 4294901760
        %234 = vmatpush1.xpose.msra.mxu0 %v233
        %235 = vmatprep.subr.mxu0 0.0
        %v236 = vand.u32 %v183, 4294901760
        %237 = vmatpush1.xpose.msra.mxu0 %v236
        %238 = vmatprep.subr.mxu0 0.0
        %v239 = vand.u32 %v184, 4294901760
        %240 = vmatpush1.xpose.msra.mxu0 %v239
        %241 = vmatprep.subr.mxu0 0.0
        %v242 = vand.u32 %v185, 4294901760
        %243 = vmatpush1.xpose.msra.mxu0 %v242
        %244 = vmatprep.subr.mxu0 0.0
        %v245 = vand.u32 %v186, 4294901760
        %246 = vmatpush1.xpose.msra.mxu0 %v245
        %247 = vmatprep.subr.mxu0 0.0
        %v248 = vand.u32 %v187, 4294901760
        %249 = vmatpush1.xpose.msra.mxu0 %v248
        %250 = vmatprep.subr.mxu0 0.0
        %v251 = vand.u32 %v188, 4294901760
        %252 = vmatpush1.xpose.msra.mxu0 %v251
        %253 = vmatprep.subr.mxu0 0.0
        %v254 = vand.u32 %v189, 4294901760
        %255 = vmatpush1.xpose.msra.mxu0 %v254
        %256 = vmatprep.subr.mxu0 0.0
        %v257 = vand.u32 %v190, 4294901760
        %258 = vmatpush1.xpose.msra.mxu0 %v257
        %259 = vmatprep.subr.mxu0 0.0
        %v260 = vand.u32 %v191, 4294901760
        %261 = vmatpush1.xpose.msra.mxu0 %v260
        %262 = vmatprep.subr.mxu0 0.0
        %v263 = vand.u32 %v192, 4294901760
        %264 = vmatpush1.xpose.msra.mxu0 %v263
        %265 = vmatprep.subr.mxu0 0.0
        %v266 = vand.u32 %v193, 4294901760
        %267 = vmatpush1.xpose.msra.mxu0 %v266
        %268 = vmatprep.subr.mxu0 0.0
        %v269 = vand.u32 %v194, 4294901760
        %270 = vmatpush1.xpose.msra.mxu0 %v269
        %271 = vmatprep.subr.mxu0 0.0
        %v272 = vand.u32 %v195, 4294901760
        %273 = vmatpush1.xpose.msra.mxu0 %v272
        %274 = vmatprep.subr.mxu0 0.0
        %v275 = vand.u32 %v196, 4294901760
        %276 = vmatpush1.xpose.msra.mxu0 %v275
        %277 = vmatprep.subr.mxu0 0.0
        %v278 = vand.u32 %v197, 4294901760
        %279 = vmatpush1.xpose.msra.mxu0 %v278
        %280 = vmatprep.subr.mxu0 0.0
        %v281 = vand.u32 %v198, 4294901760
        %282 = vmatpush1.xpose.msra.mxu0 %v281
        %283 = vmatprep.subr.mxu0 0.0
        %v284 = vand.u32 %v199, 4294901760
        %285 = vmatpush1.xpose.msra.mxu0 %v284
        %286 = vmatprep.subr.mxu0 0.0
        %v287 = vand.u32 %v200, 4294901760
        %288 = vmatpush1.xpose.msra.mxu0 %v287
        %289 = vmatprep.subr.mxu0 0.0
        %v290 = vand.u32 %v201, 4294901760
        %291 = vmatpush1.xpose.msra.mxu0 %v290
        %292 = vmatprep.subr.mxu0 0.0
        %v293 = vand.u32 %v202, 4294901760
        %294 = vmatpush1.xpose.msra.mxu0 %v293
        %295 = vmatprep.subr.mxu0 0.0
        %v296 = vand.u32 %v203, 4294901760
        %297 = vmatpush1.xpose.msra.mxu0 %v296
        %298 = vmatprep.subr.mxu0 0.0
        %v299 = vand.u32 %v204, 4294901760
        %300 = vmatpush1.xpose.msra.mxu0 %v299
        %301 = vmatprep.mubr.f32.mxu0 0.0
        %v302 = vand.u32 %v157, 4294901760
        %v303 = vsub.f32 %v157, %v302
        %v304 = vand.u32 %v303, 4294901760
        %v305 = vsub.f32 %v303, %v304
        %v306 = vand.u32 %v305, 4294901760
        %307 = vmatmul.mubr.f32.gmra.mrb[0].mxu0 %v306
        %v308 = vpop.f32.mrb[0].mxu0
        %v309 = vadd.f32 0.0, %v308
        %v310 = vpop.f32.mrb[0].mxu0
        %v311 = vadd.f32 0.0, %v310
        %312 = vmatprep.mubr.f32.mxu0 0.0
        %v313 = vand.u32 %v158, 4294901760
        %v314 = vsub.f32 %v158, %v313
        %v315 = vand.u32 %v314, 4294901760
        %v316 = vsub.f32 %v314, %v315
        %v317 = vand.u32 %v316, 4294901760
        %318 = vmatmul.mubr.f32.gmra.mrb[0].mxu0 %v317
        %v319 = vpop.f32.mrb[0].mxu0
        %v320 = vadd.f32 0.0, %v319
        %v321 = vpop.f32.mrb[0].mxu0
        %v322 = vadd.f32 0.0, %v321
        %323 = vmatprep.mubr.f32.mxu0 0.0
        %v324 = vand.u32 %v159, 4294901760
        %v325 = vsub.f32 %v159, %v324
        %v326 = vand.u32 %v325, 4294901760
        %v327 = vsub.f32 %v325, %v326
        %v328 = vand.u32 %v327, 4294901760
        %329 = vmatmul.mubr.f32.gmra.mrb[0].mxu0 %v328
        %v330 = vpop.f32.mrb[0].mxu0
        %v331 = vadd.f32 0.0, %v330
        %v332 = vpop.f32.mrb[0].mxu0
        %v333 = vadd.f32 0.0, %v332
        %334 = vmatprep.mubr.f32.mxu0 0.0
        %v335 = vand.u32 %v160, 4294901760
        %v336 = vsub.f32 %v160, %v335
        %v337 = vand.u32 %v336, 4294901760
        %v338 = vsub.f32 %v336, %v337
        %v339 = vand.u32 %v338, 4294901760
        %340 = vmatmul.mubr.f32.gmra.mrb[0].mxu0 %v339
        %v341 = vpop.f32.mrb[0].mxu0
        %v342 = vadd.f32 0.0, %v341
        %v343 = vpop.f32.mrb[0].mxu0
        %v344 = vadd.f32 0.0, %v343
        %345 = vmatprep.mubr.f32.mxu0 0.0
        %v346 = vand.u32 %v161, 4294901760
        %v347 = vsub.f32 %v161, %v346
        %v348 = vand.u32 %v347, 4294901760
        %v349 = vsub.f32 %v347, %v348
        %v350 = vand.u32 %v349, 4294901760
        %351 = vmatmul.mubr.f32.gmra.mrb[0].mxu0 %v350
        %v352 = vpop.f32.mrb[0].mxu0
        %v353 = vadd.f32 0.0, %v352
        %v354 = vpop.f32.mrb[0].mxu0
        %v355 = vadd.f32 0.0, %v354
        %356 = vmatprep.mubr.f32.mxu0 0.0
        %v357 = vand.u32 %v162, 4294901760
        %v358 = vsub.f32 %v162, %v357
        %v359 = vand.u32 %v358, 4294901760
        %v360 = vsub.f32 %v358, %v359
        %v361 = vand.u32 %v360, 4294901760
        %362 = vmatmul.mubr.f32.gmra.mrb[0].mxu0 %v361
        %v363 = vpop.f32.mrb[0].mxu0
        %v364 = vadd.f32 0.0, %v363
        %v365 = vpop.f32.mrb[0].mxu0
        %v366 = vadd.f32 0.0, %v365
        %367 = vmatprep.mubr.f32.mxu0 0.0
        %v368 = vand.u32 %v163, 4294901760
        %v369 = vsub.f32 %v163, %v368
        %v370 = vand.u32 %v369, 4294901760
        %v371 = vsub.f32 %v369, %v370
        %v372 = vand.u32 %v371, 4294901760
        %373 = vmatmul.mubr.f32.gmra.mrb[0].mxu0 %v372
        %v374 = vpop.f32.mrb[0].mxu0
        %v375 = vadd.f32 0.0, %v374
        %v376 = vpop.f32.mrb[0].mxu0
        %v377 = vadd.f32 0.0, %v376
        %378 = vmatprep.mubr.f32.mxu0 0.0
        %v379 = vand.u32 %v164, 4294901760
        %v380 = vsub.f32 %v164, %v379
        %v381 = vand.u32 %v380, 4294901760
        %v382 = vsub.f32 %v380, %v381
        %v383 = vand.u32 %v382, 4294901760
        %384 = vmatmul.mubr.f32.gmra.mrb[0].mxu0 %v383
        %v385 = vpop.f32.mrb[0].mxu0
        %v386 = vadd.f32 0.0, %v385
        %v387 = vpop.f32.mrb[0].mxu0
        %v388 = vadd.f32 0.0, %v387
        %389 = vmatprep.mubr.f32.mxu0 0.0
        %v390 = vand.u32 %v165, 4294901760
        %v391 = vsub.f32 %v165, %v390
        %v392 = vand.u32 %v391, 4294901760
        %v393 = vsub.f32 %v391, %v392
        %v394 = vand.u32 %v393, 4294901760
        %395 = vmatmul.mubr.f32.gmra.mrb[0].mxu0 %v394
        %v396 = vpop.f32.mrb[0].mxu0
        %v397 = vadd.f32 0.0, %v396
        %v398 = vpop.f32.mrb[0].mxu0
        %v399 = vadd.f32 0.0, %v398
        %400 = vmatprep.mubr.f32.mxu0 0.0
        %v401 = vand.u32 %v166, 4294901760
        %v402 = vsub.f32 %v166, %v401
        %v403 = vand.u32 %v402, 4294901760
        %v404 = vsub.f32 %v402, %v403
        %v405 = vand.u32 %v404, 4294901760
        %406 = vmatmul.mubr.f32.gmra.mrb[0].mxu0 %v405
        %v407 = vpop.f32.mrb[0].mxu0
        %v408 = vadd.f32 0.0, %v407
        %v409 = vpop.f32.mrb[0].mxu0
        %v410 = vadd.f32 0.0, %v409
        %411 = vmatprep.mubr.f32.mxu0 0.0
        %v412 = vand.u32 %v167, 4294901760
        %v413 = vsub.f32 %v167, %v412
        %v414 = vand.u32 %v413, 4294901760
        %v415 = vsub.f32 %v413, %v414
        %v416 = vand.u32 %v415, 4294901760
        %417 = vmatmul.mubr.f32.gmra.mrb[0].mxu0 %v416
        %v418 = vpop.f32.mrb[0].mxu0
        %v419 = vadd.f32 0.0, %v418
        %v420 = vpop.f32.mrb[0].mxu0
        %v421 = vadd.f32 0.0, %v420
        %422 = vmatprep.mubr.f32.mxu0 0.0
        %v423 = vand.u32 %v168, 4294901760
        %v424 = vsub.f32 %v168, %v423
        %v425 = vand.u32 %v424, 4294901760
        %v426 = vsub.f32 %v424, %v425
        %v427 = vand.u32 %v426, 4294901760
        %428 = vmatmul.mubr.f32.gmra.mrb[0].mxu0 %v427
        %v429 = vpop.f32.mrb[0].mxu0
        %v430 = vadd.f32 0.0, %v429
        %v431 = vpop.f32.mrb[0].mxu0
        %v432 = vadd.f32 0.0, %v431
        %433 = vmatprep.mubr.f32.mxu0 0.0
        %v434 = vand.u32 %v169, 4294901760
        %v435 = vsub.f32 %v169, %v434
        %v436 = vand.u32 %v435, 4294901760
        %v437 = vsub.f32 %v435, %v436
        %v438 = vand.u32 %v437, 4294901760
        %439 = vmatmul.mubr.f32.gmra.mrb[0].mxu0 %v438
        %v440 = vpop.f32.mrb[0].mxu0
        %v441 = vadd.f32 0.0, %v440
        %v442 = vpop.f32.mrb[0].mxu0
        %v443 = vadd.f32 0.0, %v442
        %444 = vmatprep.mubr.f32.mxu0 0.0
        %v445 = vand.u32 %v170, 4294901760
        %v446 = vsub.f32 %v170, %v445
        %v447 = vand.u32 %v446, 4294901760
        %v448 = vsub.f32 %v446, %v447
        %v449 = vand.u32 %v448, 4294901760
        %450 = vmatmul.mubr.f32.gmra.mrb[0].mxu0 %v449
        %v451 = vpop.f32.mrb[0].mxu0
        %v452 = vadd.f32 0.0, %v451
        %v453 = vpop.f32.mrb[0].mxu0
        %v454 = vadd.f32 0.0, %v453
        %455 = vmatprep.mubr.f32.mxu0 0.0
        %v456 = vand.u32 %v171, 4294901760
        %v457 = vsub.f32 %v171, %v456
        %v458 = vand.u32 %v457, 4294901760
        %v459 = vsub.f32 %v457, %v458
        %v460 = vand.u32 %v459, 4294901760
        %461 = vmatmul.mubr.f32.gmra.mrb[0].mxu0 %v460
        %v462 = vpop.f32.mrb[0].mxu0
        %v463 = vadd.f32 0.0, %v462
        %v464 = vpop.f32.mrb[0].mxu0
        %v465 = vadd.f32 0.0, %v464
        %466 = vmatprep.mubr.f32.mxu0 0.0
        %v467 = vand.u32 %v172, 4294901760
        %v468 = vsub.f32 %v172, %v467
        %v469 = vand.u32 %v468, 4294901760
        %v470 = vsub.f32 %v468, %v469
        %v471 = vand.u32 %v470, 4294901760
        %472 = vmatmul.mubr.f32.gmra.mrb[0].mxu0 %v471
        %v473 = vpop.f32.mrb[0].mxu0
        %v474 = vadd.f32 0.0, %v473
        %v475 = vpop.f32.mrb[0].mxu0
        %v476 = vadd.f32 0.0, %v475
        %477 = vdwg.mxu0
        %478 = vmatprep.subr.mxu0 0.0
        %v479 = vand.u32 %v173, 4294901760
        %v480 = vsub.f32 %v173, %v479
        %v481 = vand.u32 %v480, 4294901760
        %v482 = vsub.f32 %v480, %v481
        %v483 = vand.u32 %v482, 4294901760
        %484 = vmatpush1.xpose.msra.mxu0 %v483
        %485 = vmatprep.subr.mxu0 0.0
        %v486 = vand.u32 %v174, 4294901760
        %v487 = vsub.f32 %v174, %v486
        %v488 = vand.u32 %v487, 4294901760
        %v489 = vsub.f32 %v487, %v488
        %v490 = vand.u32 %v489, 4294901760
        %491 = vmatpush1.xpose.msra.mxu0 %v490
        %492 = vmatprep.subr.mxu0 0.0
        %v493 = vand.u32 %v175, 4294901760
        %v494 = vsub.f32 %v175, %v493
        %v495 = vand.u32 %v494, 4294901760
        %v496 = vsub.f32 %v494, %v495
        %v497 = vand.u32 %v496, 4294901760
        %498 = vmatpush1.xpose.msra.mxu0 %v497
        %499 = vmatprep.subr.mxu0 0.0
        %v500 = vand.u32 %v176, 4294901760
        %v501 = vsub.f32 %v176, %v500
        %v502 = vand.u32 %v501, 4294901760
        %v503 = vsub.f32 %v501, %v502
        %v504 = vand.u32 %v503, 4294901760
        %505 = vmatpush1.xpose.msra.mxu0 %v504
        %506 = vmatprep.subr.mxu0 0.0
        %v507 = vand.u32 %v177, 4294901760
        %v508 = vsub.f32 %v177, %v507
        %v509 = vand.u32 %v508, 4294901760
        %v510 = vsub.f32 %v508, %v509
        %v511 = vand.u32 %v510, 4294901760
        %512 = vmatpush1.xpose.msra.mxu0 %v511
        %513 = vmatprep.subr.mxu0 0.0
        %v514 = vand.u32 %v178, 4294901760
        %v515 = vsub.f32 %v178, %v514
        %v516 = vand.u32 %v515, 4294901760
        %v517 = vsub.f32 %v515, %v516
        %v518 = vand.u32 %v517, 4294901760
        %519 = vmatpush1.xpose.msra.mxu0 %v518
        %520 = vmatprep.subr.mxu0 0.0
        %v521 = vand.u32 %v179, 4294901760
        %v522 = vsub.f32 %v179, %v521
        %v523 = vand.u32 %v522, 4294901760
        %v524 = vsub.f32 %v522, %v523
        %v525 = vand.u32 %v524, 4294901760
        %526 = vmatpush1.xpose.msra.mxu0 %v525
        %527 = vmatprep.subr.mxu0 0.0
        %v528 = vand.u32 %v180, 4294901760
        %v529 = vsub.f32 %v180, %v528
        %v530 = vand.u32 %v529, 4294901760
        %v531 = vsub.f32 %v529, %v530
        %v532 = vand.u32 %v531, 4294901760
        %533 = vmatpush1.xpose.msra.mxu0 %v532
        %534 = vmatprep.subr.mxu0 0.0
        %v535 = vand.u32 %v181, 4294901760
        %v536 = vsub.f32 %v181, %v535
        %v537 = vand.u32 %v536, 4294901760
        %v538 = vsub.f32 %v536, %v537
        %v539 = vand.u32 %v538, 4294901760
        %540 = vmatpush1.xpose.msra.mxu0 %v539
        %541 = vmatprep.subr.mxu0 0.0
        %v542 = vand.u32 %v182, 4294901760
        %v543 = vsub.f32 %v182, %v542
        %v544 = vand.u32 %v543, 4294901760
        %v545 = vsub.f32 %v543, %v544
        %v546 = vand.u32 %v545, 4294901760
        %547 = vmatpush1.xpose.msra.mxu0 %v546
        %548 = vmatprep.subr.mxu0 0.0
        %v549 = vand.u32 %v183, 4294901760
        %v550 = vsub.f32 %v183, %v549
        %v551 = vand.u32 %v550, 4294901760
        %v552 = vsub.f32 %v550, %v551
        %v553 = vand.u32 %v552, 4294901760
        %554 = vmatpush1.xpose.msra.mxu0 %v553
        %555 = vmatprep.subr.mxu0 0.0
        %v556 = vand.u32 %v184, 4294901760
        %v557 = vsub.f32 %v184, %v556
        %v558 = vand.u32 %v557, 4294901760
        %v559 = vsub.f32 %v557, %v558
        %v560 = vand.u32 %v559, 4294901760
        %561 = vmatpush1.xpose.msra.mxu0 %v560
        %562 = vmatprep.subr.mxu0 0.0
        %v563 = vand.u32 %v185, 4294901760
        %v564 = vsub.f32 %v185, %v563
        %v565 = vand.u32 %v564, 4294901760
        %v566 = vsub.f32 %v564, %v565
        %v567 = vand.u32 %v566, 4294901760
        %568 = vmatpush1.xpose.msra.mxu0 %v567
        %569 = vmatprep.subr.mxu0 0.0
        %v570 = vand.u32 %v186, 4294901760
        %v571 = vsub.f32 %v186, %v570
        %v572 = vand.u32 %v571, 4294901760
        %v573 = vsub.f32 %v571, %v572
        %v574 = vand.u32 %v573, 4294901760
        %575 = vmatpush1.xpose.msra.mxu0 %v574
        %576 = vmatprep.subr.mxu0 0.0
        %v577 = vand.u32 %v187, 4294901760
        %v578 = vsub.f32 %v187, %v577
        %v579 = vand.u32 %v578, 4294901760
        %v580 = vsub.f32 %v578, %v579
        %v581 = vand.u32 %v580, 4294901760
        %582 = vmatpush1.xpose.msra.mxu0 %v581
        %583 = vmatprep.subr.mxu0 0.0
        %v584 = vand.u32 %v188, 4294901760
        %v585 = vsub.f32 %v188, %v584
        %v586 = vand.u32 %v585, 4294901760
        %v587 = vsub.f32 %v585, %v586
        %v588 = vand.u32 %v587, 4294901760
        %589 = vmatpush1.xpose.msra.mxu0 %v588
        %590 = vmatprep.subr.mxu0 0.0
        %v591 = vand.u32 %v189, 4294901760
        %v592 = vsub.f32 %v189, %v591
        %v593 = vand.u32 %v592, 4294901760
        %v594 = vsub.f32 %v592, %v593
        %v595 = vand.u32 %v594, 4294901760
        %596 = vmatpush1.xpose.msra.mxu0 %v595
        %597 = vmatprep.subr.mxu0 0.0
        %v598 = vand.u32 %v190, 4294901760
        %v599 = vsub.f32 %v190, %v598
        %v600 = vand.u32 %v599, 4294901760
        %v601 = vsub.f32 %v599, %v600
        %v602 = vand.u32 %v601, 4294901760
        %603 = vmatpush1.xpose.msra.mxu0 %v602
        %604 = vmatprep.subr.mxu0 0.0
        %v605 = vand.u32 %v191, 4294901760
        %v606 = vsub.f32 %v191, %v605
        %v607 = vand.u32 %v606, 4294901760
        %v608 = vsub.f32 %v606, %v607
        %v609 = vand.u32 %v608, 4294901760
        %610 = vmatpush1.xpose.msra.mxu0 %v609
        %611 = vmatprep.subr.mxu0 0.0
        %v612 = vand.u32 %v192, 4294901760
        %v613 = vsub.f32 %v192, %v612
        %v614 = vand.u32 %v613, 4294901760
        %v615 = vsub.f32 %v613, %v614
        %v616 = vand.u32 %v615, 4294901760
        %617 = vmatpush1.xpose.msra.mxu0 %v616
        %618 = vmatprep.subr.mxu0 0.0
        %v619 = vand.u32 %v193, 4294901760
        %v620 = vsub.f32 %v193, %v619
        %v621 = vand.u32 %v620, 4294901760
        %v622 = vsub.f32 %v620, %v621
        %v623 = vand.u32 %v622, 4294901760
        %624 = vmatpush1.xpose.msra.mxu0 %v623
        %625 = vmatprep.subr.mxu0 0.0
        %v626 = vand.u32 %v194, 4294901760
        %v627 = vsub.f32 %v194, %v626
        %v628 = vand.u32 %v627, 4294901760
        %v629 = vsub.f32 %v627, %v628
        %v630 = vand.u32 %v629, 4294901760
        %631 = vmatpush1.xpose.msra.mxu0 %v630
        %632 = vmatprep.subr.mxu0 0.0
        %v633 = vand.u32 %v195, 4294901760
        %v634 = vsub.f32 %v195, %v633
        %v635 = vand.u32 %v634, 4294901760
        %v636 = vsub.f32 %v634, %v635
        %v637 = vand.u32 %v636, 4294901760
        %638 = vmatpush1.xpose.msra.mxu0 %v637
        %639 = vmatprep.subr.mxu0 0.0
        %v640 = vand.u32 %v196, 4294901760
        %v641 = vsub.f32 %v196, %v640
        %v642 = vand.u32 %v641, 4294901760
        %v643 = vsub.f32 %v641, %v642
        %v644 = vand.u32 %v643, 4294901760
        %645 = vmatpush1.xpose.msra.mxu0 %v644
        %646 = vmatprep.subr.mxu0 0.0
        %v647 = vand.u32 %v197, 4294901760
        %v648 = vsub.f32 %v197, %v647
        %v649 = vand.u32 %v648, 4294901760
        %v650 = vsub.f32 %v648, %v649
        %v651 = vand.u32 %v650, 4294901760
        %652 = vmatpush1.xpose.msra.mxu0 %v651
        %653 = vmatprep.subr.mxu0 0.0
        %v654 = vand.u32 %v198, 4294901760
        %v655 = vsub.f32 %v198, %v654
        %v656 = vand.u32 %v655, 4294901760
        %v657 = vsub.f32 %v655, %v656
        %v658 = vand.u32 %v657, 4294901760
        %659 = vmatpush1.xpose.msra.mxu0 %v658
        %660 = vmatprep.subr.mxu0 0.0
        %v661 = vand.u32 %v199, 4294901760
        %v662 = vsub.f32 %v199, %v661
        %v663 = vand.u32 %v662, 4294901760
        %v664 = vsub.f32 %v662, %v663
        %v665 = vand.u32 %v664, 4294901760
        %666 = vmatpush1.xpose.msra.mxu0 %v665
        %667 = vmatprep.subr.mxu0 0.0
        %v668 = vand.u32 %v200, 4294901760
        %v669 = vsub.f32 %v200, %v668
        %v670 = vand.u32 %v669, 4294901760
        %v671 = vsub.f32 %v669, %v670
        %v672 = vand.u32 %v671, 4294901760
        %673 = vmatpush1.xpose.msra.mxu0 %v672
        %674 = vmatprep.subr.mxu0 0.0
        %v675 = vand.u32 %v201, 4294901760
        %v676 = vsub.f32 %v201, %v675
        %v677 = vand.u32 %v676, 4294901760
        %v678 = vsub.f32 %v676, %v677
        %v679 = vand.u32 %v678, 4294901760
        %680 = vmatpush1.xpose.msra.mxu0 %v679
        %681 = vmatprep.subr.mxu0 0.0
        %v682 = vand.u32 %v202, 4294901760
        %v683 = vsub.f32 %v202, %v682
        %v684 = vand.u32 %v683, 4294901760
        %v685 = vsub.f32 %v683, %v684
        %v686 = vand.u32 %v685, 4294901760
        %687 = vmatpush1.xpose.msra.mxu0 %v686
        %688 = vmatprep.subr.mxu0 0.0
        %v689 = vand.u32 %v203, 4294901760
        %v690 = vsub.f32 %v203, %v689
        %v691 = vand.u32 %v690, 4294901760
        %v692 = vsub.f32 %v690, %v691
        %v693 = vand.u32 %v692, 4294901760
        %694 = vmatpush1.xpose.msra.mxu0 %v693
        %695 = vmatprep.subr.mxu0 0.0
        %v696 = vand.u32 %v204, 4294901760
        %v697 = vsub.f32 %v204, %v696
        %v698 = vand.u32 %v697, 4294901760
        %v699 = vsub.f32 %v697, %v698
        %v700 = vand.u32 %v699, 4294901760
        %701 = vmatpush1.xpose.msra.mxu0 %v700
        %702 = vmatprep.mubr.f32.mxu0 0.0
        %v703 = vand.u32 %v157, 4294901760
        %704 = vmatmul.mubr.f32.gmra.mrb[0].mxu0 %v703
        %v705 = vpop.f32.mrb[0].mxu0
        %v706 = vadd.f32 %v309, %v705
        %v707 = vpop.f32.mrb[0].mxu0
        %v708 = vadd.f32 %v311, %v707
        %709 = vmatprep.mubr.f32.mxu0 0.0
        %v710 = vand.u32 %v158, 4294901760
        %711 = vmatmul.mubr.f32.gmra.mrb[0].mxu0 %v710
        %v712 = vpop.f32.mrb[0].mxu0
        %v713 = vadd.f32 %v320, %v712
        %v714 = vpop.f32.mrb[0].mxu0
        %v715 = vadd.f32 %v322, %v714
        %716 = vmatprep.mubr.f32.mxu0 0.0
        %v717 = vand.u32 %v159, 4294901760
        %718 = vmatmul.mubr.f32.gmra.mrb[0].mxu0 %v717
        %v719 = vpop.f32.mrb[0].mxu0
        %v720 = vadd.f32 %v331, %v719
        %v721 = vpop.f32.mrb[0].mxu0
        %v722 = vadd.f32 %v333, %v721
        %723 = vmatprep.mubr.f32.mxu0 0.0
        %v724 = vand.u32 %v160, 4294901760
        %725 = vmatmul.mubr.f32.gmra.mrb[0].mxu0 %v724
        %v726 = vpop.f32.mrb[0].mxu0
        %v727 = vadd.f32 %v342, %v726
        %v728 = vpop.f32.mrb[0].mxu0
        %v729 = vadd.f32 %v344, %v728
        %730 = vmatprep.mubr.f32.mxu0 0.0
        %v731 = vand.u32 %v161, 4294901760
        %732 = vmatmul.mubr.f32.gmra.mrb[0].mxu0 %v731
        %v733 = vpop.f32.mrb[0].mxu0
        %v734 = vadd.f32 %v353, %v733
        %v735 = vpop.f32.mrb[0].mxu0
        %v736 = vadd.f32 %v355, %v735
        %737 = vmatprep.mubr.f32.mxu0 0.0
        %v738 = vand.u32 %v162, 4294901760
        %739 = vmatmul.mubr.f32.gmra.mrb[0].mxu0 %v738
        %v740 = vpop.f32.mrb[0].mxu0
        %v741 = vadd.f32 %v364, %v740
        %v742 = vpop.f32.mrb[0].mxu0
        %v743 = vadd.f32 %v366, %v742
        %744 = vmatprep.mubr.f32.mxu0 0.0
        %v745 = vand.u32 %v163, 4294901760
        %746 = vmatmul.mubr.f32.gmra.mrb[0].mxu0 %v745
        %v747 = vpop.f32.mrb[0].mxu0
        %v748 = vadd.f32 %v375, %v747
        %v749 = vpop.f32.mrb[0].mxu0
        %v750 = vadd.f32 %v377, %v749
        %751 = vmatprep.mubr.f32.mxu0 0.0
        %v752 = vand.u32 %v164, 4294901760
        %753 = vmatmul.mubr.f32.gmra.mrb[0].mxu0 %v752
        %v754 = vpop.f32.mrb[0].mxu0
        %v755 = vadd.f32 %v386, %v754
        %v756 = vpop.f32.mrb[0].mxu0
        %v757 = vadd.f32 %v388, %v756
        %758 = vmatprep.mubr.f32.mxu0 0.0
        %v759 = vand.u32 %v165, 4294901760
        %760 = vmatmul.mubr.f32.gmra.mrb[0].mxu0 %v759
        %v761 = vpop.f32.mrb[0].mxu0
        %v762 = vadd.f32 %v397, %v761
        %v763 = vpop.f32.mrb[0].mxu0
        %v764 = vadd.f32 %v399, %v763
        %765 = vmatprep.mubr.f32.mxu0 0.0
        %v766 = vand.u32 %v166, 4294901760
        %767 = vmatmul.mubr.f32.gmra.mrb[0].mxu0 %v766
        %v768 = vpop.f32.mrb[0].mxu0
        %v769 = vadd.f32 %v408, %v768
        %v770 = vpop.f32.mrb[0].mxu0
        %v771 = vadd.f32 %v410, %v770
        %772 = vmatprep.mubr.f32.mxu0 0.0
        %v773 = vand.u32 %v167, 4294901760
        %774 = vmatmul.mubr.f32.gmra.mrb[0].mxu0 %v773
        %v775 = vpop.f32.mrb[0].mxu0
        %v776 = vadd.f32 %v419, %v775
        %v777 = vpop.f32.mrb[0].mxu0
        %v778 = vadd.f32 %v421, %v777
        %779 = vmatprep.mubr.f32.mxu0 0.0
        %v780 = vand.u32 %v168, 4294901760
        %781 = vmatmul.mubr.f32.gmra.mrb[0].mxu0 %v780
        %v782 = vpop.f32.mrb[0].mxu0
        %v783 = vadd.f32 %v430, %v782
        %v784 = vpop.f32.mrb[0].mxu0
        %v785 = vadd.f32 %v432, %v784
        %786 = vmatprep.mubr.f32.mxu0 0.0
        %v787 = vand.u32 %v169, 4294901760
        %788 = vmatmul.mubr.f32.gmra.mrb[0].mxu0 %v787
        %v789 = vpop.f32.mrb[0].mxu0
        %v790 = vadd.f32 %v441, %v789
        %v791 = vpop.f32.mrb[0].mxu0
        %v792 = vadd.f32 %v443, %v791
        %793 = vmatprep.mubr.f32.mxu0 0.0
        %v794 = vand.u32 %v170, 4294901760
        %795 = vmatmul.mubr.f32.gmra.mrb[0].mxu0 %v794
        %v796 = vpop.f32.mrb[0].mxu0
        %v797 = vadd.f32 %v452, %v796
        %v798 = vpop.f32.mrb[0].mxu0
        %v799 = vadd.f32 %v454, %v798
        %800 = vmatprep.mubr.f32.mxu0 0.0
        %v801 = vand.u32 %v171, 4294901760
        %802 = vmatmul.mubr.f32.gmra.mrb[0].mxu0 %v801
        %v803 = vpop.f32.mrb[0].mxu0
        %v804 = vadd.f32 %v463, %v803
        %v805 = vpop.f32.mrb[0].mxu0
        %v806 = vadd.f32 %v465, %v805
        %807 = vmatprep.mubr.f32.mxu0 0.0
        %v808 = vand.u32 %v172, 4294901760
        %809 = vmatmul.mubr.f32.gmra.mrb[0].mxu0 %v808
        %v810 = vpop.f32.mrb[0].mxu0
        %v811 = vadd.f32 %v474, %v810
        %v812 = vpop.f32.mrb[0].mxu0
        %v813 = vadd.f32 %v476, %v812
        %814 = vdwg.mxu0
        %815 = vmatprep.subr.mxu0 0.0
        %v816 = vand.u32 %v173, 4294901760
        %v817 = vsub.f32 %v173, %v816
        %818 = vmatpush1.xpose.msra.mxu0 %v817
        %819 = vmatprep.subr.mxu0 0.0
        %v820 = vand.u32 %v174, 4294901760
        %v821 = vsub.f32 %v174, %v820
        %822 = vmatpush1.xpose.msra.mxu0 %v821
        %823 = vmatprep.subr.mxu0 0.0
        %v824 = vand.u32 %v175, 4294901760
        %v825 = vsub.f32 %v175, %v824
        %826 = vmatpush1.xpose.msra.mxu0 %v825
        %827 = vmatprep.subr.mxu0 0.0
        %v828 = vand.u32 %v176, 4294901760
        %v829 = vsub.f32 %v176, %v828
        %830 = vmatpush1.xpose.msra.mxu0 %v829
        %831 = vmatprep.subr.mxu0 0.0
        %v832 = vand.u32 %v177, 4294901760
        %v833 = vsub.f32 %v177, %v832
        %834 = vmatpush1.xpose.msra.mxu0 %v833
        %835 = vmatprep.subr.mxu0 0.0
        %v836 = vand.u32 %v178, 4294901760
        %v837 = vsub.f32 %v178, %v836
        %838 = vmatpush1.xpose.msra.mxu0 %v837
        %839 = vmatprep.subr.mxu0 0.0
        %v840 = vand.u32 %v179, 4294901760
        %v841 = vsub.f32 %v179, %v840
        %842 = vmatpush1.xpose.msra.mxu0 %v841
        %843 = vmatprep.subr.mxu0 0.0
        %v844 = vand.u32 %v180, 4294901760
        %v845 = vsub.f32 %v180, %v844
        %846 = vmatpush1.xpose.msra.mxu0 %v845
        %847 = vmatprep.subr.mxu0 0.0
        %v848 = vand.u32 %v181, 4294901760
        %v849 = vsub.f32 %v181, %v848
        %850 = vmatpush1.xpose.msra.mxu0 %v849
        %851 = vmatprep.subr.mxu0 0.0
        %v852 = vand.u32 %v182, 4294901760
        %v853 = vsub.f32 %v182, %v852
        %854 = vmatpush1.xpose.msra.mxu0 %v853
        %855 = vmatprep.subr.mxu0 0.0
        %v856 = vand.u32 %v183, 4294901760
        %v857 = vsub.f32 %v183, %v856
        %858 = vmatpush1.xpose.msra.mxu0 %v857
        %859 = vmatprep.subr.mxu0 0.0
        %v860 = vand.u32 %v184, 4294901760
        %v861 = vsub.f32 %v184, %v860
        %862 = vmatpush1.xpose.msra.mxu0 %v861
        %863 = vmatprep.subr.mxu0 0.0
        %v864 = vand.u32 %v185, 4294901760
        %v865 = vsub.f32 %v185, %v864
        %866 = vmatpush1.xpose.msra.mxu0 %v865
        %867 = vmatprep.subr.mxu0 0.0
        %v868 = vand.u32 %v186, 4294901760
        %v869 = vsub.f32 %v186, %v868
        %870 = vmatpush1.xpose.msra.mxu0 %v869
        %871 = vmatprep.subr.mxu0 0.0
        %v872 = vand.u32 %v187, 4294901760
        %v873 = vsub.f32 %v187, %v872
        %874 = vmatpush1.xpose.msra.mxu0 %v873
        %875 = vmatprep.subr.mxu0 0.0
        %v876 = vand.u32 %v188, 4294901760
        %v877 = vsub.f32 %v188, %v876
        %878 = vmatpush1.xpose.msra.mxu0 %v877
        %879 = vmatprep.subr.mxu0 0.0
        %v880 = vand.u32 %v189, 4294901760
        %v881 = vsub.f32 %v189, %v880
        %882 = vmatpush1.xpose.msra.mxu0 %v881
        %883 = vmatprep.subr.mxu0 0.0
        %v884 = vand.u32 %v190, 4294901760
        %v885 = vsub.f32 %v190, %v884
        %886 = vmatpush1.xpose.msra.mxu0 %v885
        %887 = vmatprep.subr.mxu0 0.0
        %v888 = vand.u32 %v191, 4294901760
        %v889 = vsub.f32 %v191, %v888
        %890 = vmatpush1.xpose.msra.mxu0 %v889
        %891 = vmatprep.subr.mxu0 0.0
        %v892 = vand.u32 %v192, 4294901760
        %v893 = vsub.f32 %v192, %v892
        %894 = vmatpush1.xpose.msra.mxu0 %v893
        %895 = vmatprep.subr.mxu0 0.0
        %v896 = vand.u32 %v193, 4294901760
        %v897 = vsub.f32 %v193, %v896
        %898 = vmatpush1.xpose.msra.mxu0 %v897
        %899 = vmatprep.subr.mxu0 0.0
        %v900 = vand.u32 %v194, 4294901760
        %v901 = vsub.f32 %v194, %v900
        %902 = vmatpush1.xpose.msra.mxu0 %v901
        %903 = vmatprep.subr.mxu0 0.0
        %v904 = vand.u32 %v195, 4294901760
        %v905 = vsub.f32 %v195, %v904
        %906 = vmatpush1.xpose.msra.mxu0 %v905
        %907 = vmatprep.subr.mxu0 0.0
        %v908 = vand.u32 %v196, 4294901760
        %v909 = vsub.f32 %v196, %v908
        %910 = vmatpush1.xpose.msra.mxu0 %v909
        %911 = vmatprep.subr.mxu0 0.0
        %v912 = vand.u32 %v197, 4294901760
        %v913 = vsub.f32 %v197, %v912
        %914 = vmatpush1.xpose.msra.mxu0 %v913
        %915 = vmatprep.subr.mxu0 0.0
        %v916 = vand.u32 %v198, 4294901760
        %v917 = vsub.f32 %v198, %v916
        %918 = vmatpush1.xpose.msra.mxu0 %v917
        %919 = vmatprep.subr.mxu0 0.0
        %v920 = vand.u32 %v199, 4294901760
        %v921 = vsub.f32 %v199, %v920
        %922 = vmatpush1.xpose.msra.mxu0 %v921
        %923 = vmatprep.subr.mxu0 0.0
        %v924 = vand.u32 %v200, 4294901760
        %v925 = vsub.f32 %v200, %v924
        %926 = vmatpush1.xpose.msra.mxu0 %v925
        %927 = vmatprep.subr.mxu0 0.0
        %v928 = vand.u32 %v201, 4294901760
        %v929 = vsub.f32 %v201, %v928
        %930 = vmatpush1.xpose.msra.mxu0 %v929
        %931 = vmatprep.subr.mxu0 0.0
        %v932 = vand.u32 %v202, 4294901760
        %v933 = vsub.f32 %v202, %v932
        %934 = vmatpush1.xpose.msra.mxu0 %v933
        %935 = vmatprep.subr.mxu0 0.0
        %v936 = vand.u32 %v203, 4294901760
        %v937 = vsub.f32 %v203, %v936
        %938 = vmatpush1.xpose.msra.mxu0 %v937
        %939 = vmatprep.subr.mxu0 0.0
        %v940 = vand.u32 %v204, 4294901760
        %v941 = vsub.f32 %v204, %v940
        %942 = vmatpush1.xpose.msra.mxu0 %v941
        %943 = vmatprep.mubr.f32.mxu0 0.0
        %v944 = vand.u32 %v157, 4294901760
        %v945 = vsub.f32 %v157, %v944
        %946 = vmatmul.mubr.f32.gmra.mrb[0].mxu0 %v945
        %v947 = vpop.f32.mrb[0].mxu0
        %v948 = vadd.f32 %v706, %v947
        %v949 = vpop.f32.mrb[0].mxu0
        %v950 = vadd.f32 %v708, %v949
        %951 = vmatprep.mubr.f32.mxu0 0.0
        %v952 = vand.u32 %v158, 4294901760
        %v953 = vsub.f32 %v158, %v952
        %954 = vmatmul.mubr.f32.gmra.mrb[0].mxu0 %v953
        %v955 = vpop.f32.mrb[0].mxu0
        %v956 = vadd.f32 %v713, %v955
        %v957 = vpop.f32.mrb[0].mxu0
        %v958 = vadd.f32 %v715, %v957
        %959 = vmatprep.mubr.f32.mxu0 0.0
        %v960 = vand.u32 %v159, 4294901760
        %v961 = vsub.f32 %v159, %v960
        %962 = vmatmul.mubr.f32.gmra.mrb[0].mxu0 %v961
        %v963 = vpop.f32.mrb[0].mxu0
        %v964 = vadd.f32 %v720, %v963
        %v965 = vpop.f32.mrb[0].mxu0
        %v966 = vadd.f32 %v722, %v965
        %967 = vmatprep.mubr.f32.mxu0 0.0
        %v968 = vand.u32 %v160, 4294901760
        %v969 = vsub.f32 %v160, %v968
        %970 = vmatmul.mubr.f32.gmra.mrb[0].mxu0 %v969
        %v971 = vpop.f32.mrb[0].mxu0
        %v972 = vadd.f32 %v727, %v971
        %v973 = vpop.f32.mrb[0].mxu0
        %v974 = vadd.f32 %v729, %v973
        %975 = vmatprep.mubr.f32.mxu0 0.0
        %v976 = vand.u32 %v161, 4294901760
        %v977 = vsub.f32 %v161, %v976
        %978 = vmatmul.mubr.f32.gmra.mrb[0].mxu0 %v977
        %v979 = vpop.f32.mrb[0].mxu0
        %v980 = vadd.f32 %v734, %v979
        %v981 = vpop.f32.mrb[0].mxu0
        %v982 = vadd.f32 %v736, %v981
        %983 = vmatprep.mubr.f32.mxu0 0.0
        %v984 = vand.u32 %v162, 4294901760
        %v985 = vsub.f32 %v162, %v984
        %986 = vmatmul.mubr.f32.gmra.mrb[0].mxu0 %v985
        %v987 = vpop.f32.mrb[0].mxu0
        %v988 = vadd.f32 %v741, %v987
        %v989 = vpop.f32.mrb[0].mxu0
        %v990 = vadd.f32 %v743, %v989
        %991 = vmatprep.mubr.f32.mxu0 0.0
        %v992 = vand.u32 %v163, 4294901760
        %v993 = vsub.f32 %v163, %v992
        %994 = vmatmul.mubr.f32.gmra.mrb[0].mxu0 %v993
        %v995 = vpop.f32.mrb[0].mxu0
        %v996 = vadd.f32 %v748, %v995
        %v997 = vpop.f32.mrb[0].mxu0
        %v998 = vadd.f32 %v750, %v997
        %999 = vmatprep.mubr.f32.mxu0 0.0
        %v1000 = vand.u32 %v164, 4294901760
        %v1001 = vsub.f32 %v164, %v1000
        %1002 = vmatmul.mubr.f32.gmra.mrb[0].mxu0 %v1001
        %v1003 = vpop.f32.mrb[0].mxu0
        %v1004 = vadd.f32 %v755, %v1003
        %v1005 = vpop.f32.mrb[0].mxu0
        %v1006 = vadd.f32 %v757, %v1005
        %1007 = vmatprep.mubr.f32.mxu0 0.0
        %v1008 = vand.u32 %v165, 4294901760
        %v1009 = vsub.f32 %v165, %v1008
        %1010 = vmatmul.mubr.f32.gmra.mrb[0].mxu0 %v1009
        %v1011 = vpop.f32.mrb[0].mxu0
        %v1012 = vadd.f32 %v762, %v1011
        %v1013 = vpop.f32.mrb[0].mxu0
        %v1014 = vadd.f32 %v764, %v1013
        %1015 = vmatprep.mubr.f32.mxu0 0.0
        %v1016 = vand.u32 %v166, 4294901760
        %v1017 = vsub.f32 %v166, %v1016
        %1018 = vmatmul.mubr.f32.gmra.mrb[0].mxu0 %v1017
        %v1019 = vpop.f32.mrb[0].mxu0
        %v1020 = vadd.f32 %v769, %v1019
        %v1021 = vpop.f32.mrb[0].mxu0
        %v1022 = vadd.f32 %v771, %v1021
        %1023 = vmatprep.mubr.f32.mxu0 0.0
        %v1024 = vand.u32 %v167, 4294901760
        %v1025 = vsub.f32 %v167, %v1024
        %1026 = vmatmul.mubr.f32.gmra.mrb[0].mxu0 %v1025
        %v1027 = vpop.f32.mrb[0].mxu0
        %v1028 = vadd.f32 %v776, %v1027
        %v1029 = vpop.f32.mrb[0].mxu0
        %v1030 = vadd.f32 %v778, %v1029
        %1031 = vmatprep.mubr.f32.mxu0 0.0
        %v1032 = vand.u32 %v168, 4294901760
        %v1033 = vsub.f32 %v168, %v1032
        %1034 = vmatmul.mubr.f32.gmra.mrb[0].mxu0 %v1033
        %v1035 = vpop.f32.mrb[0].mxu0
        %v1036 = vadd.f32 %v783, %v1035
        %v1037 = vpop.f32.mrb[0].mxu0
        %v1038 = vadd.f32 %v785, %v1037
        %1039 = vmatprep.mubr.f32.mxu0 0.0
        %v1040 = vand.u32 %v169, 4294901760
        %v1041 = vsub.f32 %v169, %v1040
        %1042 = vmatmul.mubr.f32.gmra.mrb[0].mxu0 %v1041
        %v1043 = vpop.f32.mrb[0].mxu0
        %v1044 = vadd.f32 %v790, %v1043
        %v1045 = vpop.f32.mrb[0].mxu0
        %v1046 = vadd.f32 %v792, %v1045
        %1047 = vmatprep.mubr.f32.mxu0 0.0
        %v1048 = vand.u32 %v170, 4294901760
        %v1049 = vsub.f32 %v170, %v1048
        %1050 = vmatmul.mubr.f32.gmra.mrb[0].mxu0 %v1049
        %v1051 = vpop.f32.mrb[0].mxu0
        %v1052 = vadd.f32 %v797, %v1051
        %v1053 = vpop.f32.mrb[0].mxu0
        %v1054 = vadd.f32 %v799, %v1053
        %1055 = vmatprep.mubr.f32.mxu0 0.0
        %v1056 = vand.u32 %v171, 4294901760
        %v1057 = vsub.f32 %v171, %v1056
        %1058 = vmatmul.mubr.f32.gmra.mrb[0].mxu0 %v1057
        %v1059 = vpop.f32.mrb[0].mxu0
        %v1060 = vadd.f32 %v804, %v1059
        %v1061 = vpop.f32.mrb[0].mxu0
        %v1062 = vadd.f32 %v806, %v1061
        %1063 = vmatprep.mubr.f32.mxu0 0.0
        %v1064 = vand.u32 %v172, 4294901760
        %v1065 = vsub.f32 %v172, %v1064
        %1066 = vmatmul.mubr.f32.gmra.mrb[0].mxu0 %v1065
        %v1067 = vpop.f32.mrb[0].mxu0
        %v1068 = vadd.f32 %v811, %v1067
        %v1069 = vpop.f32.mrb[0].mxu0
        %v1070 = vadd.f32 %v813, %v1069
        %1071 = vdwg.mxu0
        %1072 = vmatprep.subr.mxu0 0.0
        %v1073 = vand.u32 %v173, 4294901760
        %1074 = vmatpush1.xpose.msra.mxu0 %v1073
        %1075 = vmatprep.subr.mxu0 0.0
        %v1076 = vand.u32 %v174, 4294901760
        %1077 = vmatpush1.xpose.msra.mxu0 %v1076
        %1078 = vmatprep.subr.mxu0 0.0
        %v1079 = vand.u32 %v175, 4294901760
        %1080 = vmatpush1.xpose.msra.mxu0 %v1079
        %1081 = vmatprep.subr.mxu0 0.0
        %v1082 = vand.u32 %v176, 4294901760
        %1083 = vmatpush1.xpose.msra.mxu0 %v1082
        %1084 = vmatprep.subr.mxu0 0.0
        %v1085 = vand.u32 %v177, 4294901760
        %1086 = vmatpush1.xpose.msra.mxu0 %v1085
        %1087 = vmatprep.subr.mxu0 0.0
        %v1088 = vand.u32 %v178, 4294901760
        %1089 = vmatpush1.xpose.msra.mxu0 %v1088
        %1090 = vmatprep.subr.mxu0 0.0
        %v1091 = vand.u32 %v179, 4294901760
        %1092 = vmatpush1.xpose.msra.mxu0 %v1091
        %1093 = vmatprep.subr.mxu0 0.0
        %v1094 = vand.u32 %v180, 4294901760
        %1095 = vmatpush1.xpose.msra.mxu0 %v1094
        %1096 = vmatprep.subr.mxu0 0.0
        %v1097 = vand.u32 %v181, 4294901760
        %1098 = vmatpush1.xpose.msra.mxu0 %v1097
        %1099 = vmatprep.subr.mxu0 0.0
        %v1100 = vand.u32 %v182, 4294901760
        %1101 = vmatpush1.xpose.msra.mxu0 %v1100
        %1102 = vmatprep.subr.mxu0 0.0
        %v1103 = vand.u32 %v183, 4294901760
        %1104 = vmatpush1.xpose.msra.mxu0 %v1103
        %1105 = vmatprep.subr.mxu0 0.0
        %v1106 = vand.u32 %v184, 4294901760
        %1107 = vmatpush1.xpose.msra.mxu0 %v1106
        %1108 = vmatprep.subr.mxu0 0.0
        %v1109 = vand.u32 %v185, 4294901760
        %1110 = vmatpush1.xpose.msra.mxu0 %v1109
        %1111 = vmatprep.subr.mxu0 0.0
        %v1112 = vand.u32 %v186, 4294901760
        %1113 = vmatpush1.xpose.msra.mxu0 %v1112
        %1114 = vmatprep.subr.mxu0 0.0
        %v1115 = vand.u32 %v187, 4294901760
        %1116 = vmatpush1.xpose.msra.mxu0 %v1115
        %1117 = vmatprep.subr.mxu0 0.0
        %v1118 = vand.u32 %v188, 4294901760
        %1119 = vmatpush1.xpose.msra.mxu0 %v1118
        %1120 = vmatprep.subr.mxu0 0.0
        %v1121 = vand.u32 %v189, 4294901760
        %1122 = vmatpush1.xpose.msra.mxu0 %v1121
        %1123 = vmatprep.subr.mxu0 0.0
        %v1124 = vand.u32 %v190, 4294901760
        %1125 = vmatpush1.xpose.msra.mxu0 %v1124
        %1126 = vmatprep.subr.mxu0 0.0
        %v1127 = vand.u32 %v191, 4294901760
        %1128 = vmatpush1.xpose.msra.mxu0 %v1127
        %1129 = vmatprep.subr.mxu0 0.0
        %v1130 = vand.u32 %v192, 4294901760
        %1131 = vmatpush1.xpose.msra.mxu0 %v1130
        %1132 = vmatprep.subr.mxu0 0.0
        %v1133 = vand.u32 %v193, 4294901760
        %1134 = vmatpush1.xpose.msra.mxu0 %v1133
        %1135 = vmatprep.subr.mxu0 0.0
        %v1136 = vand.u32 %v194, 4294901760
        %1137 = vmatpush1.xpose.msra.mxu0 %v1136
        %1138 = vmatprep.subr.mxu0 0.0
        %v1139 = vand.u32 %v195, 4294901760
        %1140 = vmatpush1.xpose.msra.mxu0 %v1139
        %1141 = vmatprep.subr.mxu0 0.0
        %v1142 = vand.u32 %v196, 4294901760
        %1143 = vmatpush1.xpose.msra.mxu0 %v1142
        %1144 = vmatprep.subr.mxu0 0.0
        %v1145 = vand.u32 %v197, 4294901760
        %1146 = vmatpush1.xpose.msra.mxu0 %v1145
        %1147 = vmatprep.subr.mxu0 0.0
        %v1148 = vand.u32 %v198, 4294901760
        %1149 = vmatpush1.xpose.msra.mxu0 %v1148
        %1150 = vmatprep.subr.mxu0 0.0
        %v1151 = vand.u32 %v199, 4294901760
        %1152 = vmatpush1.xpose.msra.mxu0 %v1151
        %1153 = vmatprep.subr.mxu0 0.0
        %v1154 = vand.u32 %v200, 4294901760
        %1155 = vmatpush1.xpose.msra.mxu0 %v1154
        %1156 = vmatprep.subr.mxu0 0.0
        %v1157 = vand.u32 %v201, 4294901760
        %1158 = vmatpush1.xpose.msra.mxu0 %v1157
        %1159 = vmatprep.subr.mxu0 0.0
        %v1160 = vand.u32 %v202, 4294901760
        %1161 = vmatpush1.xpose.msra.mxu0 %v1160
        %1162 = vmatprep.subr.mxu0 0.0
        %v1163 = vand.u32 %v203, 4294901760
        %1164 = vmatpush1.xpose.msra.mxu0 %v1163
        %1165 = vmatprep.subr.mxu0 0.0
        %v1166 = vand.u32 %v204, 4294901760
        %1167 = vmatpush1.xpose.msra.mxu0 %v1166
        %1168 = vmatprep.mubr.f32.mxu0 0.0
        %v1169 = vand.u32 %v157, 4294901760
        %v1170 = vsub.f32 %v157, %v1169
        %v1171 = vand.u32 %v1170, 4294901760
        %1172 = vmatmul.mubr.f32.gmra.mrb[0].mxu0 %v1171
        %v1173 = vpop.f32.mrb[0].mxu0
        %v1174 = vadd.f32 %v948, %v1173
        %v1175 = vpop.f32.mrb[0].mxu0
        %v1176 = vadd.f32 %v950, %v1175
        %1177 = vmatprep.mubr.f32.mxu0 0.0
        %v1178 = vand.u32 %v158, 4294901760
        %v1179 = vsub.f32 %v158, %v1178
        %v1180 = vand.u32 %v1179, 4294901760
        %1181 = vmatmul.mubr.f32.gmra.mrb[0].mxu0 %v1180
        %v1182 = vpop.f32.mrb[0].mxu0
        %v1183 = vadd.f32 %v956, %v1182
        %v1184 = vpop.f32.mrb[0].mxu0
        %v1185 = vadd.f32 %v958, %v1184
        %1186 = vmatprep.mubr.f32.mxu0 0.0
        %v1187 = vand.u32 %v159, 4294901760
        %v1188 = vsub.f32 %v159, %v1187
        %v1189 = vand.u32 %v1188, 4294901760
        %1190 = vmatmul.mubr.f32.gmra.mrb[0].mxu0 %v1189
        %v1191 = vpop.f32.mrb[0].mxu0
        %v1192 = vadd.f32 %v964, %v1191
        %v1193 = vpop.f32.mrb[0].mxu0
        %v1194 = vadd.f32 %v966, %v1193
        %1195 = vmatprep.mubr.f32.mxu0 0.0
        %v1196 = vand.u32 %v160, 4294901760
        %v1197 = vsub.f32 %v160, %v1196
        %v1198 = vand.u32 %v1197, 4294901760
        %1199 = vmatmul.mubr.f32.gmra.mrb[0].mxu0 %v1198
        %v1200 = vpop.f32.mrb[0].mxu0
        %v1201 = vadd.f32 %v972, %v1200
        %v1202 = vpop.f32.mrb[0].mxu0
        %v1203 = vadd.f32 %v974, %v1202
        %1204 = vmatprep.mubr.f32.mxu0 0.0
        %v1205 = vand.u32 %v161, 4294901760
        %v1206 = vsub.f32 %v161, %v1205
        %v1207 = vand.u32 %v1206, 4294901760
        %1208 = vmatmul.mubr.f32.gmra.mrb[0].mxu0 %v1207
        %v1209 = vpop.f32.mrb[0].mxu0
        %v1210 = vadd.f32 %v980, %v1209
        %v1211 = vpop.f32.mrb[0].mxu0
        %v1212 = vadd.f32 %v982, %v1211
        %1213 = vmatprep.mubr.f32.mxu0 0.0
        %v1214 = vand.u32 %v162, 4294901760
        %v1215 = vsub.f32 %v162, %v1214
        %v1216 = vand.u32 %v1215, 4294901760
        %1217 = vmatmul.mubr.f32.gmra.mrb[0].mxu0 %v1216
        %v1218 = vpop.f32.mrb[0].mxu0
        %v1219 = vadd.f32 %v988, %v1218
        %v1220 = vpop.f32.mrb[0].mxu0
        %v1221 = vadd.f32 %v990, %v1220
        %1222 = vmatprep.mubr.f32.mxu0 0.0
        %v1223 = vand.u32 %v163, 4294901760
        %v1224 = vsub.f32 %v163, %v1223
        %v1225 = vand.u32 %v1224, 4294901760
        %1226 = vmatmul.mubr.f32.gmra.mrb[0].mxu0 %v1225
        %v1227 = vpop.f32.mrb[0].mxu0
        %v1228 = vadd.f32 %v996, %v1227
        %v1229 = vpop.f32.mrb[0].mxu0
        %v1230 = vadd.f32 %v998, %v1229
        %1231 = vmatprep.mubr.f32.mxu0 0.0
        %v1232 = vand.u32 %v164, 4294901760
        %v1233 = vsub.f32 %v164, %v1232
        %v1234 = vand.u32 %v1233, 4294901760
        %1235 = vmatmul.mubr.f32.gmra.mrb[0].mxu0 %v1234
        %v1236 = vpop.f32.mrb[0].mxu0
        %v1237 = vadd.f32 %v1004, %v1236
        %v1238 = vpop.f32.mrb[0].mxu0
        %v1239 = vadd.f32 %v1006, %v1238
        %1240 = vmatprep.mubr.f32.mxu0 0.0
        %v1241 = vand.u32 %v165, 4294901760
        %v1242 = vsub.f32 %v165, %v1241
        %v1243 = vand.u32 %v1242, 4294901760
        %1244 = vmatmul.mubr.f32.gmra.mrb[0].mxu0 %v1243
        %v1245 = vpop.f32.mrb[0].mxu0
        %v1246 = vadd.f32 %v1012, %v1245
        %v1247 = vpop.f32.mrb[0].mxu0
        %v1248 = vadd.f32 %v1014, %v1247
        %1249 = vmatprep.mubr.f32.mxu0 0.0
        %v1250 = vand.u32 %v166, 4294901760
        %v1251 = vsub.f32 %v166, %v1250
        %v1252 = vand.u32 %v1251, 4294901760
        %1253 = vmatmul.mubr.f32.gmra.mrb[0].mxu0 %v1252
        %v1254 = vpop.f32.mrb[0].mxu0
        %v1255 = vadd.f32 %v1020, %v1254
        %v1256 = vpop.f32.mrb[0].mxu0
        %v1257 = vadd.f32 %v1022, %v1256
        %1258 = vmatprep.mubr.f32.mxu0 0.0
        %v1259 = vand.u32 %v167, 4294901760
        %v1260 = vsub.f32 %v167, %v1259
        %v1261 = vand.u32 %v1260, 4294901760
        %1262 = vmatmul.mubr.f32.gmra.mrb[0].mxu0 %v1261
        %v1263 = vpop.f32.mrb[0].mxu0
        %v1264 = vadd.f32 %v1028, %v1263
        %v1265 = vpop.f32.mrb[0].mxu0
        %v1266 = vadd.f32 %v1030, %v1265
        %1267 = vmatprep.mubr.f32.mxu0 0.0
        %v1268 = vand.u32 %v168, 4294901760
        %v1269 = vsub.f32 %v168, %v1268
        %v1270 = vand.u32 %v1269, 4294901760
        %1271 = vmatmul.mubr.f32.gmra.mrb[0].mxu0 %v1270
        %v1272 = vpop.f32.mrb[0].mxu0
        %v1273 = vadd.f32 %v1036, %v1272
        %v1274 = vpop.f32.mrb[0].mxu0
        %v1275 = vadd.f32 %v1038, %v1274
        %1276 = vmatprep.mubr.f32.mxu0 0.0
        %v1277 = vand.u32 %v169, 4294901760
        %v1278 = vsub.f32 %v169, %v1277
        %v1279 = vand.u32 %v1278, 4294901760
        %1280 = vmatmul.mubr.f32.gmra.mrb[0].mxu0 %v1279
        %v1281 = vpop.f32.mrb[0].mxu0
        %v1282 = vadd.f32 %v1044, %v1281
        %v1283 = vpop.f32.mrb[0].mxu0
        %v1284 = vadd.f32 %v1046, %v1283
        %1285 = vmatprep.mubr.f32.mxu0 0.0
        %v1286 = vand.u32 %v170, 4294901760
        %v1287 = vsub.f32 %v170, %v1286
        %v1288 = vand.u32 %v1287, 4294901760
        %1289 = vmatmul.mubr.f32.gmra.mrb[0].mxu0 %v1288
        %v1290 = vpop.f32.mrb[0].mxu0
        %v1291 = vadd.f32 %v1052, %v1290
        %v1292 = vpop.f32.mrb[0].mxu0
        %v1293 = vadd.f32 %v1054, %v1292
        %1294 = vmatprep.mubr.f32.mxu0 0.0
        %v1295 = vand.u32 %v171, 4294901760
        %v1296 = vsub.f32 %v171, %v1295
        %v1297 = vand.u32 %v1296, 4294901760
        %1298 = vmatmul.mubr.f32.gmra.mrb[0].mxu0 %v1297
        %v1299 = vpop.f32.mrb[0].mxu0
        %v1300 = vadd.f32 %v1060, %v1299
        %v1301 = vpop.f32.mrb[0].mxu0
        %v1302 = vadd.f32 %v1062, %v1301
        %1303 = vmatprep.mubr.f32.mxu0 0.0
        %v1304 = vand.u32 %v172, 4294901760
        %v1305 = vsub.f32 %v172, %v1304
        %v1306 = vand.u32 %v1305, 4294901760
        %1307 = vmatmul.mubr.f32.gmra.mrb[0].mxu0 %v1306
        %v1308 = vpop.f32.mrb[0].mxu0
        %v1309 = vadd.f32 %v1068, %v1308
        %v1310 = vpop.f32.mrb[0].mxu0
        %v1311 = vadd.f32 %v1070, %v1310
        %1312 = vdwg.mxu0
        %1313 = vmatprep.subr.mxu0 0.0
        %v1314 = vand.u32 %v173, 4294901760
        %v1315 = vsub.f32 %v173, %v1314
        %v1316 = vand.u32 %v1315, 4294901760
        %1317 = vmatpush1.xpose.msra.mxu0 %v1316
        %1318 = vmatprep.subr.mxu0 0.0
        %v1319 = vand.u32 %v174, 4294901760
        %v1320 = vsub.f32 %v174, %v1319
        %v1321 = vand.u32 %v1320, 4294901760
        %1322 = vmatpush1.xpose.msra.mxu0 %v1321
        %1323 = vmatprep.subr.mxu0 0.0
        %v1324 = vand.u32 %v175, 4294901760
        %v1325 = vsub.f32 %v175, %v1324
        %v1326 = vand.u32 %v1325, 4294901760
        %1327 = vmatpush1.xpose.msra.mxu0 %v1326
        %1328 = vmatprep.subr.mxu0 0.0
        %v1329 = vand.u32 %v176, 4294901760
        %v1330 = vsub.f32 %v176, %v1329
        %v1331 = vand.u32 %v1330, 4294901760
        %1332 = vmatpush1.xpose.msra.mxu0 %v1331
        %1333 = vmatprep.subr.mxu0 0.0
        %v1334 = vand.u32 %v177, 4294901760
        %v1335 = vsub.f32 %v177, %v1334
        %v1336 = vand.u32 %v1335, 4294901760
        %1337 = vmatpush1.xpose.msra.mxu0 %v1336
        %1338 = vmatprep.subr.mxu0 0.0
        %v1339 = vand.u32 %v178, 4294901760
        %v1340 = vsub.f32 %v178, %v1339
        %v1341 = vand.u32 %v1340, 4294901760
        %1342 = vmatpush1.xpose.msra.mxu0 %v1341
        %1343 = vmatprep.subr.mxu0 0.0
        %v1344 = vand.u32 %v179, 4294901760
        %v1345 = vsub.f32 %v179, %v1344
        %v1346 = vand.u32 %v1345, 4294901760
        %1347 = vmatpush1.xpose.msra.mxu0 %v1346
        %1348 = vmatprep.subr.mxu0 0.0
        %v1349 = vand.u32 %v180, 4294901760
        %v1350 = vsub.f32 %v180, %v1349
        %v1351 = vand.u32 %v1350, 4294901760
        %1352 = vmatpush1.xpose.msra.mxu0 %v1351
        %1353 = vmatprep.subr.mxu0 0.0
        %v1354 = vand.u32 %v181, 4294901760
        %v1355 = vsub.f32 %v181, %v1354
        %v1356 = vand.u32 %v1355, 4294901760
        %1357 = vmatpush1.xpose.msra.mxu0 %v1356
        %1358 = vmatprep.subr.mxu0 0.0
        %v1359 = vand.u32 %v182, 4294901760
        %v1360 = vsub.f32 %v182, %v1359
        %v1361 = vand.u32 %v1360, 4294901760
        %1362 = vmatpush1.xpose.msra.mxu0 %v1361
        %1363 = vmatprep.subr.mxu0 0.0
        %v1364 = vand.u32 %v183, 4294901760
        %v1365 = vsub.f32 %v183, %v1364
        %v1366 = vand.u32 %v1365, 4294901760
        %1367 = vmatpush1.xpose.msra.mxu0 %v1366
        %1368 = vmatprep.subr.mxu0 0.0
        %v1369 = vand.u32 %v184, 4294901760
        %v1370 = vsub.f32 %v184, %v1369
        %v1371 = vand.u32 %v1370, 4294901760
        %1372 = vmatpush1.xpose.msra.mxu0 %v1371
        %1373 = vmatprep.subr.mxu0 0.0
        %v1374 = vand.u32 %v185, 4294901760
        %v1375 = vsub.f32 %v185, %v1374
        %v1376 = vand.u32 %v1375, 4294901760
        %1377 = vmatpush1.xpose.msra.mxu0 %v1376
        %1378 = vmatprep.subr.mxu0 0.0
        %v1379 = vand.u32 %v186, 4294901760
        %v1380 = vsub.f32 %v186, %v1379
        %v1381 = vand.u32 %v1380, 4294901760
        %1382 = vmatpush1.xpose.msra.mxu0 %v1381
        %1383 = vmatprep.subr.mxu0 0.0
        %v1384 = vand.u32 %v187, 4294901760
        %v1385 = vsub.f32 %v187, %v1384
        %v1386 = vand.u32 %v1385, 4294901760
        %1387 = vmatpush1.xpose.msra.mxu0 %v1386
        %1388 = vmatprep.subr.mxu0 0.0
        %v1389 = vand.u32 %v188, 4294901760
        %v1390 = vsub.f32 %v188, %v1389
        %v1391 = vand.u32 %v1390, 4294901760
        %1392 = vmatpush1.xpose.msra.mxu0 %v1391
        %1393 = vmatprep.subr.mxu0 0.0
        %v1394 = vand.u32 %v189, 4294901760
        %v1395 = vsub.f32 %v189, %v1394
        %v1396 = vand.u32 %v1395, 4294901760
        %1397 = vmatpush1.xpose.msra.mxu0 %v1396
        %1398 = vmatprep.subr.mxu0 0.0
        %v1399 = vand.u32 %v190, 4294901760
        %v1400 = vsub.f32 %v190, %v1399
        %v1401 = vand.u32 %v1400, 4294901760
        %1402 = vmatpush1.xpose.msra.mxu0 %v1401
        %1403 = vmatprep.subr.mxu0 0.0
        %v1404 = vand.u32 %v191, 4294901760
        %v1405 = vsub.f32 %v191, %v1404
        %v1406 = vand.u32 %v1405, 4294901760
        %1407 = vmatpush1.xpose.msra.mxu0 %v1406
        %1408 = vmatprep.subr.mxu0 0.0
        %v1409 = vand.u32 %v192, 4294901760
        %v1410 = vsub.f32 %v192, %v1409
        %v1411 = vand.u32 %v1410, 4294901760
        %1412 = vmatpush1.xpose.msra.mxu0 %v1411
        %1413 = vmatprep.subr.mxu0 0.0
        %v1414 = vand.u32 %v193, 4294901760
        %v1415 = vsub.f32 %v193, %v1414
        %v1416 = vand.u32 %v1415, 4294901760
        %1417 = vmatpush1.xpose.msra.mxu0 %v1416
        %1418 = vmatprep.subr.mxu0 0.0
        %v1419 = vand.u32 %v194, 4294901760
        %v1420 = vsub.f32 %v194, %v1419
        %v1421 = vand.u32 %v1420, 4294901760
        %1422 = vmatpush1.xpose.msra.mxu0 %v1421
        %1423 = vmatprep.subr.mxu0 0.0
        %v1424 = vand.u32 %v195, 4294901760
        %v1425 = vsub.f32 %v195, %v1424
        %v1426 = vand.u32 %v1425, 4294901760
        %1427 = vmatpush1.xpose.msra.mxu0 %v1426
        %1428 = vmatprep.subr.mxu0 0.0
        %v1429 = vand.u32 %v196, 4294901760
        %v1430 = vsub.f32 %v196, %v1429
        %v1431 = vand.u32 %v1430, 4294901760
        %1432 = vmatpush1.xpose.msra.mxu0 %v1431
        %1433 = vmatprep.subr.mxu0 0.0
        %v1434 = vand.u32 %v197, 4294901760
        %v1435 = vsub.f32 %v197, %v1434
        %v1436 = vand.u32 %v1435, 4294901760
        %1437 = vmatpush1.xpose.msra.mxu0 %v1436
        %1438 = vmatprep.subr.mxu0 0.0
        %v1439 = vand.u32 %v198, 4294901760
        %v1440 = vsub.f32 %v198, %v1439
        %v1441 = vand.u32 %v1440, 4294901760
        %1442 = vmatpush1.xpose.msra.mxu0 %v1441
        %1443 = vmatprep.subr.mxu0 0.0
        %v1444 = vand.u32 %v199, 4294901760
        %v1445 = vsub.f32 %v199, %v1444
        %v1446 = vand.u32 %v1445, 4294901760
        %1447 = vmatpush1.xpose.msra.mxu0 %v1446
        %1448 = vmatprep.subr.mxu0 0.0
        %v1449 = vand.u32 %v200, 4294901760
        %v1450 = vsub.f32 %v200, %v1449
        %v1451 = vand.u32 %v1450, 4294901760
        %1452 = vmatpush1.xpose.msra.mxu0 %v1451
        %1453 = vmatprep.subr.mxu0 0.0
        %v1454 = vand.u32 %v201, 4294901760
        %v1455 = vsub.f32 %v201, %v1454
        %v1456 = vand.u32 %v1455, 4294901760
        %1457 = vmatpush1.xpose.msra.mxu0 %v1456
        %1458 = vmatprep.subr.mxu0 0.0
        %v1459 = vand.u32 %v202, 4294901760
        %v1460 = vsub.f32 %v202, %v1459
        %v1461 = vand.u32 %v1460, 4294901760
        %1462 = vmatpush1.xpose.msra.mxu0 %v1461
        %1463 = vmatprep.subr.mxu0 0.0
        %v1464 = vand.u32 %v203, 4294901760
        %v1465 = vsub.f32 %v203, %v1464
        %v1466 = vand.u32 %v1465, 4294901760
        %1467 = vmatpush1.xpose.msra.mxu0 %v1466
        %1468 = vmatprep.subr.mxu0 0.0
        %v1469 = vand.u32 %v204, 4294901760
        %v1470 = vsub.f32 %v204, %v1469
        %v1471 = vand.u32 %v1470, 4294901760
        %1472 = vmatpush1.xpose.msra.mxu0 %v1471
        %1473 = vmatprep.mubr.f32.mxu0 0.0
        %v1474 = vand.u32 %v157, 4294901760
        %1475 = vmatmul.mubr.f32.gmra.mrb[0].mxu0 %v1474
        %v1476 = vpop.f32.mrb[0].mxu0
        %v1477 = vadd.f32 %v1174, %v1476
        %v1478 = vpop.f32.mrb[0].mxu0
        %v1479 = vadd.f32 %v1176, %v1478
        %1480 = vmatprep.mubr.f32.mxu0 0.0
        %v1481 = vand.u32 %v158, 4294901760
        %1482 = vmatmul.mubr.f32.gmra.mrb[0].mxu0 %v1481
        %v1483 = vpop.f32.mrb[0].mxu0
        %v1484 = vadd.f32 %v1183, %v1483
        %v1485 = vpop.f32.mrb[0].mxu0
        %v1486 = vadd.f32 %v1185, %v1485
        %1487 = vmatprep.mubr.f32.mxu0 0.0
        %v1488 = vand.u32 %v159, 4294901760
        %1489 = vmatmul.mubr.f32.gmra.mrb[0].mxu0 %v1488
        %v1490 = vpop.f32.mrb[0].mxu0
        %v1491 = vadd.f32 %v1192, %v1490
        %v1492 = vpop.f32.mrb[0].mxu0
        %v1493 = vadd.f32 %v1194, %v1492
        %1494 = vmatprep.mubr.f32.mxu0 0.0
        %v1495 = vand.u32 %v160, 4294901760
        %1496 = vmatmul.mubr.f32.gmra.mrb[0].mxu0 %v1495
        %v1497 = vpop.f32.mrb[0].mxu0
        %v1498 = vadd.f32 %v1201, %v1497
        %v1499 = vpop.f32.mrb[0].mxu0
        %v1500 = vadd.f32 %v1203, %v1499
        %1501 = vmatprep.mubr.f32.mxu0 0.0
        %v1502 = vand.u32 %v161, 4294901760
        %1503 = vmatmul.mubr.f32.gmra.mrb[0].mxu0 %v1502
        %v1504 = vpop.f32.mrb[0].mxu0
        %v1505 = vadd.f32 %v1210, %v1504
        %v1506 = vpop.f32.mrb[0].mxu0
        %v1507 = vadd.f32 %v1212, %v1506
        %1508 = vmatprep.mubr.f32.mxu0 0.0
        %v1509 = vand.u32 %v162, 4294901760
        %1510 = vmatmul.mubr.f32.gmra.mrb[0].mxu0 %v1509
        %v1511 = vpop.f32.mrb[0].mxu0
        %v1512 = vadd.f32 %v1219, %v1511
        %v1513 = vpop.f32.mrb[0].mxu0
        %v1514 = vadd.f32 %v1221, %v1513
        %1515 = vmatprep.mubr.f32.mxu0 0.0
        %v1516 = vand.u32 %v163, 4294901760
        %1517 = vmatmul.mubr.f32.gmra.mrb[0].mxu0 %v1516
        %v1518 = vpop.f32.mrb[0].mxu0
        %v1519 = vadd.f32 %v1228, %v1518
        %v1520 = vpop.f32.mrb[0].mxu0
        %v1521 = vadd.f32 %v1230, %v1520
        %1522 = vmatprep.mubr.f32.mxu0 0.0
        %v1523 = vand.u32 %v164, 4294901760
        %1524 = vmatmul.mubr.f32.gmra.mrb[0].mxu0 %v1523
        %v1525 = vpop.f32.mrb[0].mxu0
        %v1526 = vadd.f32 %v1237, %v1525
        %v1527 = vpop.f32.mrb[0].mxu0
        %v1528 = vadd.f32 %v1239, %v1527
        %1529 = vmatprep.mubr.f32.mxu0 0.0
        %v1530 = vand.u32 %v165, 4294901760
        %1531 = vmatmul.mubr.f32.gmra.mrb[0].mxu0 %v1530
        %v1532 = vpop.f32.mrb[0].mxu0
        %v1533 = vadd.f32 %v1246, %v1532
        %v1534 = vpop.f32.mrb[0].mxu0
        %v1535 = vadd.f32 %v1248, %v1534
        %1536 = vmatprep.mubr.f32.mxu0 0.0
        %v1537 = vand.u32 %v166, 4294901760
        %1538 = vmatmul.mubr.f32.gmra.mrb[0].mxu0 %v1537
        %v1539 = vpop.f32.mrb[0].mxu0
        %v1540 = vadd.f32 %v1255, %v1539
        %v1541 = vpop.f32.mrb[0].mxu0
        %v1542 = vadd.f32 %v1257, %v1541
        %1543 = vmatprep.mubr.f32.mxu0 0.0
        %v1544 = vand.u32 %v167, 4294901760
        %1545 = vmatmul.mubr.f32.gmra.mrb[0].mxu0 %v1544
        %v1546 = vpop.f32.mrb[0].mxu0
        %v1547 = vadd.f32 %v1264, %v1546
        %v1548 = vpop.f32.mrb[0].mxu0
        %v1549 = vadd.f32 %v1266, %v1548
        %1550 = vmatprep.mubr.f32.mxu0 0.0
        %v1551 = vand.u32 %v168, 4294901760
        %1552 = vmatmul.mubr.f32.gmra.mrb[0].mxu0 %v1551
        %v1553 = vpop.f32.mrb[0].mxu0
        %v1554 = vadd.f32 %v1273, %v1553
        %v1555 = vpop.f32.mrb[0].mxu0
        %v1556 = vadd.f32 %v1275, %v1555
        %1557 = vmatprep.mubr.f32.mxu0 0.0
        %v1558 = vand.u32 %v169, 4294901760
        %1559 = vmatmul.mubr.f32.gmra.mrb[0].mxu0 %v1558
        %v1560 = vpop.f32.mrb[0].mxu0
        %v1561 = vadd.f32 %v1282, %v1560
        %v1562 = vpop.f32.mrb[0].mxu0
        %v1563 = vadd.f32 %v1284, %v1562
        %1564 = vmatprep.mubr.f32.mxu0 0.0
        %v1565 = vand.u32 %v170, 4294901760
        %1566 = vmatmul.mubr.f32.gmra.mrb[0].mxu0 %v1565
        %v1567 = vpop.f32.mrb[0].mxu0
        %v1568 = vadd.f32 %v1291, %v1567
        %v1569 = vpop.f32.mrb[0].mxu0
        %v1570 = vadd.f32 %v1293, %v1569
        %1571 = vmatprep.mubr.f32.mxu0 0.0
        %v1572 = vand.u32 %v171, 4294901760
        %1573 = vmatmul.mubr.f32.gmra.mrb[0].mxu0 %v1572
        %v1574 = vpop.f32.mrb[0].mxu0
        %v1575 = vadd.f32 %v1300, %v1574
        %v1576 = vpop.f32.mrb[0].mxu0
        %v1577 = vadd.f32 %v1302, %v1576
        %1578 = vmatprep.mubr.f32.mxu0 0.0
        %v1579 = vand.u32 %v172, 4294901760
        %1580 = vmatmul.mubr.f32.gmra.mrb[0].mxu0 %v1579
        %v1581 = vpop.f32.mrb[0].mxu0
        %v1582 = vadd.f32 %v1309, %v1581
        %v1583 = vpop.f32.mrb[0].mxu0
        %v1584 = vadd.f32 %v1311, %v1583
        %1585 = vdwg.mxu0
        %1586 = vmatprep.subr.mxu0 0.0
        %v1587 = vand.u32 %v173, 4294901760
        %1588 = vmatpush1.xpose.msra.mxu0 %v1587
        %1589 = vmatprep.subr.mxu0 0.0
        %v1590 = vand.u32 %v174, 4294901760
        %1591 = vmatpush1.xpose.msra.mxu0 %v1590
        %1592 = vmatprep.subr.mxu0 0.0
        %v1593 = vand.u32 %v175, 4294901760
        %1594 = vmatpush1.xpose.msra.mxu0 %v1593
        %1595 = vmatprep.subr.mxu0 0.0
        %v1596 = vand.u32 %v176, 4294901760
        %1597 = vmatpush1.xpose.msra.mxu0 %v1596
        %1598 = vmatprep.subr.mxu0 0.0
        %v1599 = vand.u32 %v177, 4294901760
        %1600 = vmatpush1.xpose.msra.mxu0 %v1599
        %1601 = vmatprep.subr.mxu0 0.0
        %v1602 = vand.u32 %v178, 4294901760
        %1603 = vmatpush1.xpose.msra.mxu0 %v1602
        %1604 = vmatprep.subr.mxu0 0.0
        %v1605 = vand.u32 %v179, 4294901760
        %1606 = vmatpush1.xpose.msra.mxu0 %v1605
        %1607 = vmatprep.subr.mxu0 0.0
        %v1608 = vand.u32 %v180, 4294901760
        %1609 = vmatpush1.xpose.msra.mxu0 %v1608
        %1610 = vmatprep.subr.mxu0 0.0
        %v1611 = vand.u32 %v181, 4294901760
        %1612 = vmatpush1.xpose.msra.mxu0 %v1611
        %1613 = vmatprep.subr.mxu0 0.0
        %v1614 = vand.u32 %v182, 4294901760
        %1615 = vmatpush1.xpose.msra.mxu0 %v1614
        %1616 = vmatprep.subr.mxu0 0.0
        %v1617 = vand.u32 %v183, 4294901760
        %1618 = vmatpush1.xpose.msra.mxu0 %v1617
        %1619 = vmatprep.subr.mxu0 0.0
        %v1620 = vand.u32 %v184, 4294901760
        %1621 = vmatpush1.xpose.msra.mxu0 %v1620
        %1622 = vmatprep.subr.mxu0 0.0
        %v1623 = vand.u32 %v185, 4294901760
        %1624 = vmatpush1.xpose.msra.mxu0 %v1623
        %1625 = vmatprep.subr.mxu0 0.0
        %v1626 = vand.u32 %v186, 4294901760
        %1627 = vmatpush1.xpose.msra.mxu0 %v1626
        %1628 = vmatprep.subr.mxu0 0.0
        %v1629 = vand.u32 %v187, 4294901760
        %1630 = vmatpush1.xpose.msra.mxu0 %v1629
        %1631 = vmatprep.subr.mxu0 0.0
        %v1632 = vand.u32 %v188, 4294901760
        %1633 = vmatpush1.xpose.msra.mxu0 %v1632
        %1634 = vmatprep.subr.mxu0 0.0
        %v1635 = vand.u32 %v189, 4294901760
        %1636 = vmatpush1.xpose.msra.mxu0 %v1635
        %1637 = vmatprep.subr.mxu0 0.0
        %v1638 = vand.u32 %v190, 4294901760
        %1639 = vmatpush1.xpose.msra.mxu0 %v1638
        %1640 = vmatprep.subr.mxu0 0.0
        %v1641 = vand.u32 %v191, 4294901760
        %1642 = vmatpush1.xpose.msra.mxu0 %v1641
        %1643 = vmatprep.subr.mxu0 0.0
        %v1644 = vand.u32 %v192, 4294901760
        %1645 = vmatpush1.xpose.msra.mxu0 %v1644
        %1646 = vmatprep.subr.mxu0 0.0
        %v1647 = vand.u32 %v193, 4294901760
        %1648 = vmatpush1.xpose.msra.mxu0 %v1647
        %1649 = vmatprep.subr.mxu0 0.0
        %v1650 = vand.u32 %v194, 4294901760
        %1651 = vmatpush1.xpose.msra.mxu0 %v1650
        %1652 = vmatprep.subr.mxu0 0.0
        %v1653 = vand.u32 %v195, 4294901760
        %1654 = vmatpush1.xpose.msra.mxu0 %v1653
        %1655 = vmatprep.subr.mxu0 0.0
        %v1656 = vand.u32 %v196, 4294901760
        %1657 = vmatpush1.xpose.msra.mxu0 %v1656
        %1658 = vmatprep.subr.mxu0 0.0
        %v1659 = vand.u32 %v197, 4294901760
        %1660 = vmatpush1.xpose.msra.mxu0 %v1659
        %1661 = vmatprep.subr.mxu0 0.0
        %v1662 = vand.u32 %v198, 4294901760
        %1663 = vmatpush1.xpose.msra.mxu0 %v1662
        %1664 = vmatprep.subr.mxu0 0.0
        %v1665 = vand.u32 %v199, 4294901760
        %1666 = vmatpush1.xpose.msra.mxu0 %v1665
        %1667 = vmatprep.subr.mxu0 0.0
        %v1668 = vand.u32 %v200, 4294901760
        %1669 = vmatpush1.xpose.msra.mxu0 %v1668
        %1670 = vmatprep.subr.mxu0 0.0
        %v1671 = vand.u32 %v201, 4294901760
        %1672 = vmatpush1.xpose.msra.mxu0 %v1671
        %1673 = vmatprep.subr.mxu0 0.0
        %v1674 = vand.u32 %v202, 4294901760
        %1675 = vmatpush1.xpose.msra.mxu0 %v1674
        %1676 = vmatprep.subr.mxu0 0.0
        %v1677 = vand.u32 %v203, 4294901760
        %1678 = vmatpush1.xpose.msra.mxu0 %v1677
        %1679 = vmatprep.subr.mxu0 0.0
        %v1680 = vand.u32 %v204, 4294901760
        %1681 = vmatpush1.xpose.msra.mxu0 %v1680
        %1682 = vmatprep.mubr.f32.mxu0 0.0
        %v1683 = vand.u32 %v157, 4294901760
        %1684 = vmatmul.mubr.f32.gmra.mrb[0].mxu0 %v1683
        %v1685 = vpop.f32.mrb[0].mxu0
        %v1686 = vadd.f32 %v1477, %v1685
        %v1687 = vpop.f32.mrb[0].mxu0
        %v1688 = vadd.f32 %v1479, %v1687
        %1689 = vmatprep.mubr.f32.mxu0 0.0
        %v1690 = vand.u32 %v158, 4294901760
        %1691 = vmatmul.mubr.f32.gmra.mrb[0].mxu0 %v1690
        %v1692 = vpop.f32.mrb[0].mxu0
        %v1693 = vadd.f32 %v1484, %v1692
        %v1694 = vpop.f32.mrb[0].mxu0
        %v1695 = vadd.f32 %v1486, %v1694
        %1696 = vmatprep.mubr.f32.mxu0 0.0
        %v1697 = vand.u32 %v159, 4294901760
        %1698 = vmatmul.mubr.f32.gmra.mrb[0].mxu0 %v1697
        %v1699 = vpop.f32.mrb[0].mxu0
        %v1700 = vadd.f32 %v1491, %v1699
        %v1701 = vpop.f32.mrb[0].mxu0
        %v1702 = vadd.f32 %v1493, %v1701
        %1703 = vmatprep.mubr.f32.mxu0 0.0
        %v1704 = vand.u32 %v160, 4294901760
        %1705 = vmatmul.mubr.f32.gmra.mrb[0].mxu0 %v1704
        %v1706 = vpop.f32.mrb[0].mxu0
        %v1707 = vadd.f32 %v1498, %v1706
        %v1708 = vpop.f32.mrb[0].mxu0
        %v1709 = vadd.f32 %v1500, %v1708
        %1710 = vmatprep.mubr.f32.mxu0 0.0
        %v1711 = vand.u32 %v161, 4294901760
        %1712 = vmatmul.mubr.f32.gmra.mrb[0].mxu0 %v1711
        %v1713 = vpop.f32.mrb[0].mxu0
        %v1714 = vadd.f32 %v1505, %v1713
        %v1715 = vpop.f32.mrb[0].mxu0
        %v1716 = vadd.f32 %v1507, %v1715
        %1717 = vmatprep.mubr.f32.mxu0 0.0
        %v1718 = vand.u32 %v162, 4294901760
        %1719 = vmatmul.mubr.f32.gmra.mrb[0].mxu0 %v1718
        %v1720 = vpop.f32.mrb[0].mxu0
        %v1721 = vadd.f32 %v1512, %v1720
        %v1722 = vpop.f32.mrb[0].mxu0
        %v1723 = vadd.f32 %v1514, %v1722
        %1724 = vmatprep.mubr.f32.mxu0 0.0
        %v1725 = vand.u32 %v163, 4294901760
        %1726 = vmatmul.mubr.f32.gmra.mrb[0].mxu0 %v1725
        %v1727 = vpop.f32.mrb[0].mxu0
        %v1728 = vadd.f32 %v1519, %v1727
        %v1729 = vpop.f32.mrb[0].mxu0
        %v1730 = vadd.f32 %v1521, %v1729
        %1731 = vmatprep.mubr.f32.mxu0 0.0
        %v1732 = vand.u32 %v164, 4294901760
        %1733 = vmatmul.mubr.f32.gmra.mrb[0].mxu0 %v1732
        %v1734 = vpop.f32.mrb[0].mxu0
        %v1735 = vadd.f32 %v1526, %v1734
        %v1736 = vpop.f32.mrb[0].mxu0
        %v1737 = vadd.f32 %v1528, %v1736
        %1738 = vmatprep.mubr.f32.mxu0 0.0
        %v1739 = vand.u32 %v165, 4294901760
        %1740 = vmatmul.mubr.f32.gmra.mrb[0].mxu0 %v1739
        %v1741 = vpop.f32.mrb[0].mxu0
        %v1742 = vadd.f32 %v1533, %v1741
        %v1743 = vpop.f32.mrb[0].mxu0
        %v1744 = vadd.f32 %v1535, %v1743
        %1745 = vmatprep.mubr.f32.mxu0 0.0
        %v1746 = vand.u32 %v166, 4294901760
        %1747 = vmatmul.mubr.f32.gmra.mrb[0].mxu0 %v1746
        %v1748 = vpop.f32.mrb[0].mxu0
        %v1749 = vadd.f32 %v1540, %v1748
        %v1750 = vpop.f32.mrb[0].mxu0
        %v1751 = vadd.f32 %v1542, %v1750
        %1752 = vmatprep.mubr.f32.mxu0 0.0
        %v1753 = vand.u32 %v167, 4294901760
        %1754 = vmatmul.mubr.f32.gmra.mrb[0].mxu0 %v1753
        %v1755 = vpop.f32.mrb[0].mxu0
        %v1756 = vadd.f32 %v1547, %v1755
        %v1757 = vpop.f32.mrb[0].mxu0
        %v1758 = vadd.f32 %v1549, %v1757
        %1759 = vmatprep.mubr.f32.mxu0 0.0
        %v1760 = vand.u32 %v168, 4294901760
        %1761 = vmatmul.mubr.f32.gmra.mrb[0].mxu0 %v1760
        %v1762 = vpop.f32.mrb[0].mxu0
        %v1763 = vadd.f32 %v1554, %v1762
        %v1764 = vpop.f32.mrb[0].mxu0
        %v1765 = vadd.f32 %v1556, %v1764
        %1766 = vmatprep.mubr.f32.mxu0 0.0
        %v1767 = vand.u32 %v169, 4294901760
        %1768 = vmatmul.mubr.f32.gmra.mrb[0].mxu0 %v1767
        %v1769 = vpop.f32.mrb[0].mxu0
        %v1770 = vadd.f32 %v1561, %v1769
        %v1771 = vpop.f32.mrb[0].mxu0
        %v1772 = vadd.f32 %v1563, %v1771
        %1773 = vmatprep.mubr.f32.mxu0 0.0
        %v1774 = vand.u32 %v170, 4294901760
        %1775 = vmatmul.mubr.f32.gmra.mrb[0].mxu0 %v1774
        %v1776 = vpop.f32.mrb[0].mxu0
        %v1777 = vadd.f32 %v1568, %v1776
        %v1778 = vpop.f32.mrb[0].mxu0
        %v1779 = vadd.f32 %v1570, %v1778
        %1780 = vmatprep.mubr.f32.mxu0 0.0
        %v1781 = vand.u32 %v171, 4294901760
        %1782 = vmatmul.mubr.f32.gmra.mrb[0].mxu0 %v1781
        %v1783 = vpop.f32.mrb[0].mxu0
        %v1784 = vadd.f32 %v1575, %v1783
        %v1785 = vpop.f32.mrb[0].mxu0
        %v1786 = vadd.f32 %v1577, %v1785
        %1787 = vmatprep.mubr.f32.mxu0 0.0
        %v1788 = vand.u32 %v172, 4294901760
        %1789 = vmatmul.mubr.f32.gmra.mrb[0].mxu0 %v1788
        %v1790 = vpop.f32.mrb[0].mxu0
        %v1791 = vadd.f32 %v1582, %v1790
        %v1792 = vpop.f32.mrb[0].mxu0
        %v1793 = vadd.f32 %v1584, %v1792
        %1794 = vdwg.mxu0
        %v1795 = vmul.f32 %v1686, 14.285714
        %v1796 = vmul.f32 %v1688, 14.285714
        %v1797 = vmul.f32 %v1693, 14.285714
        %v1798 = vmul.f32 %v1695, 14.285714
        %v1799 = vmul.f32 %v1700, 14.285714
        %v1800 = vmul.f32 %v1702, 14.285714
        %v1801 = vmul.f32 %v1707, 14.285714
        %v1802 = vmul.f32 %v1709, 14.285714
        %v1803 = vmul.f32 %v1714, 14.285714
        %v1804 = vmul.f32 %v1716, 14.285714
        %v1805 = vmul.f32 %v1721, 14.285714
        %v1806 = vmul.f32 %v1723, 14.285714
        %v1807 = vmul.f32 %v1728, 14.285714
        %v1808 = vmul.f32 %v1730, 14.285714
        %v1809 = vmul.f32 %v1735, 14.285714
        %v1810 = vmul.f32 %v1737, 14.285714
        %v1811 = vmul.f32 %v1742, 14.285714
        %v1812 = vmul.f32 %v1744, 14.285714
        %v1813 = vmul.f32 %v1749, 14.285714
        %v1814 = vmul.f32 %v1751, 14.285714
        %v1815 = vmul.f32 %v1756, 14.285714
        %v1816 = vmul.f32 %v1758, 14.285714
        %v1817 = vmul.f32 %v1763, 14.285714
        %v1818 = vmul.f32 %v1765, 14.285714
        %v1819 = vmul.f32 %v1770, 14.285714
        %v1820 = vmul.f32 %v1772, 14.285714
        %v1821 = vmul.f32 %v1777, 14.285714
        %v1822 = vmul.f32 %v1779, 14.285714
        %v1823 = vmul.f32 %v1784, 14.285714
        %v1824 = vmul.f32 %v1786, 14.285714
        %v1825 = vmul.f32 %v1791, 14.285714
        %v1826 = vmul.f32 %v1793, 14.285714
        %v1827 = vlaneseq
        %v1828 = vand.u32 %v1827, 127
        %v1829 = vadd.s32 %v1828, 128
        %v1830 = vlaneseq
        %v1831 = vshrl.u32 %v1830, 7
        %v1832 = vadd.s32 %v1831, 8
        %v1833 = vadd.s32 %v1831, 16
        %v1834 = vadd.s32 %v1831, 24
        %v1835 = vadd.s32 %v1831, 32
        %v1836 = vadd.s32 %v1831, 40
        %v1837 = vadd.s32 %v1831, 48
        %v1838 = vadd.s32 %v1831, 56
        %v1839 = vadd.s32 %v1831, 64
        %v1840 = vadd.s32 %v1831, 72
        %v1841 = vadd.s32 %v1831, 80
        %v1842 = vadd.s32 %v1831, 88
        %v1843 = vadd.s32 %v1831, 96
        %v1844 = vadd.s32 %v1831, 104
        %v1845 = vadd.s32 %v1831, 112
        %v1846 = vadd.s32 %v1831, 120
        %v1847 = vstv %s155
        %v1848 = vadd.s32 %v1847, %v1831
        %v1849 = vadd.s32 %v1847, %v1832
        %v1850 = vadd.s32 %v1847, %v1833
        %v1851 = vadd.s32 %v1847, %v1834
        %v1852 = vadd.s32 %v1847, %v1835
        %v1853 = vadd.s32 %v1847, %v1836
        %v1854 = vadd.s32 %v1847, %v1837
        %v1855 = vadd.s32 %v1847, %v1838
        %v1856 = vadd.s32 %v1847, %v1839
        %v1857 = vadd.s32 %v1847, %v1840
        %v1858 = vadd.s32 %v1847, %v1841
        %v1859 = vadd.s32 %v1847, %v1842
        %v1860 = vadd.s32 %v1847, %v1843
        %v1861 = vadd.s32 %v1847, %v1844
        %v1862 = vadd.s32 %v1847, %v1845
        %v1863 = vadd.s32 %v1847, %v1846
        %vm1864 = vcmp.lt.s32.totalorder %v1828, 0
        %vm1865 = vcmp.lt.s32.totalorder %v1829, 0
        %vm1866 = vcmp.ge.s32.totalorder %v1828, 0
        %vm1867 = vcmp.ge.s32.totalorder %v1829, 0
        %vm1868 = vcmp.lt.s32.totalorder %v1828, 8
        %vm1869 = vcmp.lt.s32.totalorder %v1829, 8
        %vm1870 = vmand %vm1866, %vm1868
        %vm1871 = vmand %vm1867, %vm1869
        %vm1872 = vmor %vm1864, %vm1870
        %vm1873 = vmor %vm1865, %vm1871
        %vm1874 = vcmp.ge.s32.totalorder %v1828, 128
        %vm1875 = vcmp.ge.s32.totalorder %v1829, 128
        %vm1876 = vcmp.lt.s32.totalorder %v1828, 136
        %vm1877 = vcmp.lt.s32.totalorder %v1829, 136
        %vm1878 = vmand %vm1874, %vm1876
        %vm1879 = vmand %vm1875, %vm1877
        %vm1880 = vmor %vm1872, %vm1878
        %vm1881 = vmor %vm1873, %vm1879
        %vm1882 = vcmp.ne.s32.totalorder %v1828, %v1848
        %vm1883 = vcmp.ne.s32.totalorder %v1829, %v1848
        %vm1884 = vcmp.ne.s32.totalorder %v1828, %v1849
        %vm1885 = vcmp.ne.s32.totalorder %v1829, %v1849
        %vm1886 = vcmp.ne.s32.totalorder %v1828, %v1850
        %vm1887 = vcmp.ne.s32.totalorder %v1829, %v1850
        %vm1888 = vcmp.ne.s32.totalorder %v1828, %v1851
        %vm1889 = vcmp.ne.s32.totalorder %v1829, %v1851
        %vm1890 = vcmp.ne.s32.totalorder %v1828, %v1852
        %vm1891 = vcmp.ne.s32.totalorder %v1829, %v1852
        %vm1892 = vcmp.ne.s32.totalorder %v1828, %v1853
        %vm1893 = vcmp.ne.s32.totalorder %v1829, %v1853
        %vm1894 = vcmp.ne.s32.totalorder %v1828, %v1854
        %vm1895 = vcmp.ne.s32.totalorder %v1829, %v1854
        %vm1896 = vcmp.ne.s32.totalorder %v1828, %v1855
        %vm1897 = vcmp.ne.s32.totalorder %v1829, %v1855
        %vm1898 = vcmp.ne.s32.totalorder %v1828, %v1856
        %vm1899 = vcmp.ne.s32.totalorder %v1829, %v1856
        %vm1900 = vcmp.ne.s32.totalorder %v1828, %v1857
        %vm1901 = vcmp.ne.s32.totalorder %v1829, %v1857
        %vm1902 = vcmp.ne.s32.totalorder %v1828, %v1858
        %vm1903 = vcmp.ne.s32.totalorder %v1829, %v1858
        %vm1904 = vcmp.ne.s32.totalorder %v1828, %v1859
        %vm1905 = vcmp.ne.s32.totalorder %v1829, %v1859
        %vm1906 = vcmp.ne.s32.totalorder %v1828, %v1860
        %vm1907 = vcmp.ne.s32.totalorder %v1829, %v1860
        %vm1908 = vcmp.ne.s32.totalorder %v1828, %v1861
        %vm1909 = vcmp.ne.s32.totalorder %v1829, %v1861
        %vm1910 = vcmp.ne.s32.totalorder %v1828, %v1862
        %vm1911 = vcmp.ne.s32.totalorder %v1829, %v1862
        %vm1912 = vcmp.ne.s32.totalorder %v1828, %v1863
        %vm1913 = vcmp.ne.s32.totalorder %v1829, %v1863
        %vm1914 = vmand %vm1880, %vm1882
        %vm1915 = vmand %vm1881, %vm1883
        %vm1916 = vmand %vm1880, %vm1884
        %vm1917 = vmand %vm1881, %vm1885
        %vm1918 = vmand %vm1880, %vm1886
        %vm1919 = vmand %vm1881, %vm1887
        %vm1920 = vmand %vm1880, %vm1888
        %vm1921 = vmand %vm1881, %vm1889
        %vm1922 = vmand %vm1880, %vm1890
        %vm1923 = vmand %vm1881, %vm1891
        %vm1924 = vmand %vm1880, %vm1892
        %vm1925 = vmand %vm1881, %vm1893
        %vm1926 = vmand %vm1880, %vm1894
        %vm1927 = vmand %vm1881, %vm1895
        %vm1928 = vmand %vm1880, %vm1896
        %vm1929 = vmand %vm1881, %vm1897
        %vm1930 = vmand %vm1880, %vm1898
        %vm1931 = vmand %vm1881, %vm1899
        %vm1932 = vmand %vm1880, %vm1900
        %vm1933 = vmand %vm1881, %vm1901
        %vm1934 = vmand %vm1880, %vm1902
        %vm1935 = vmand %vm1881, %vm1903
        %vm1936 = vmand %vm1880, %vm1904
        %vm1937 = vmand %vm1881, %vm1905
        %vm1938 = vmand %vm1880, %vm1906
        %vm1939 = vmand %vm1881, %vm1907
        %vm1940 = vmand %vm1880, %vm1908
        %vm1941 = vmand %vm1881, %vm1909
        %vm1942 = vmand %vm1880, %vm1910
        %vm1943 = vmand %vm1881, %vm1911
        %vm1944 = vmand %vm1880, %vm1912
        %vm1945 = vmand %vm1881, %vm1913
        %v1946 = vsel %vm1880, %v1795, -inf
        %v1947 = vsel %vm1881, %v1796, -inf
        %v1948 = vsel %vm1880, %v1797, -inf
        %v1949 = vsel %vm1881, %v1798, -inf
        %v1950 = vsel %vm1880, %v1799, -inf
        %v1951 = vsel %vm1881, %v1800, -inf
        %v1952 = vsel %vm1880, %v1801, -inf
        %v1953 = vsel %vm1881, %v1802, -inf
        %v1954 = vsel %vm1880, %v1803, -inf
        %v1955 = vsel %vm1881, %v1804, -inf
        %v1956 = vsel %vm1880, %v1805, -inf
        %v1957 = vsel %vm1881, %v1806, -inf
        %v1958 = vsel %vm1880, %v1807, -inf
        %v1959 = vsel %vm1881, %v1808, -inf
        %v1960 = vsel %vm1880, %v1809, -inf
        %v1961 = vsel %vm1881, %v1810, -inf
        %v1962 = vsel %vm1880, %v1811, -inf
        %v1963 = vsel %vm1881, %v1812, -inf
        %v1964 = vsel %vm1880, %v1813, -inf
        %v1965 = vsel %vm1881, %v1814, -inf
        %v1966 = vsel %vm1880, %v1815, -inf
        %v1967 = vsel %vm1881, %v1816, -inf
        %v1968 = vsel %vm1880, %v1817, -inf
        %v1969 = vsel %vm1881, %v1818, -inf
        %v1970 = vsel %vm1880, %v1819, -inf
        %v1971 = vsel %vm1881, %v1820, -inf
        %v1972 = vsel %vm1880, %v1821, -inf
        %v1973 = vsel %vm1881, %v1822, -inf
        %v1974 = vsel %vm1880, %v1823, -inf
        %v1975 = vsel %vm1881, %v1824, -inf
        %v1976 = vsel %vm1880, %v1825, -inf
        %v1977 = vsel %vm1881, %v1826, -inf
        %v1978 = vmax.f32 %v1946, %v1947
        %1979 = vmax.xlane.f32.xlu0 %v1978
        %v1980 = vpop.xlane.xlu0 %1979
        %v1981 = vmax.f32 %v1948, %v1949
        %1982 = vmax.xlane.f32.xlu0 %v1981
        %v1983 = vpop.xlane.xlu0 %1982
        %v1984 = vmax.f32 %v1950, %v1951
        %1985 = vmax.xlane.f32.xlu0 %v1984
        %v1986 = vpop.xlane.xlu0 %1985
        %v1987 = vmax.f32 %v1952, %v1953
        %1988 = vmax.xlane.f32.xlu0 %v1987
        %v1989 = vpop.xlane.xlu0 %1988
        %v1990 = vmax.f32 %v1954, %v1955
        %1991 = vmax.xlane.f32.xlu0 %v1990
        %v1992 = vpop.xlane.xlu0 %1991
        %v1993 = vmax.f32 %v1956, %v1957
        %1994 = vmax.xlane.f32.xlu0 %v1993
        %v1995 = vpop.xlane.xlu0 %1994
        %v1996 = vmax.f32 %v1958, %v1959
        %1997 = vmax.xlane.f32.xlu0 %v1996
        %v1998 = vpop.xlane.xlu0 %1997
        %v1999 = vmax.f32 %v1960, %v1961
        %2000 = vmax.xlane.f32.xlu0 %v1999
        %v2001 = vpop.xlane.xlu0 %2000
        %v2002 = vmax.f32 %v1962, %v1963
        %2003 = vmax.xlane.f32.xlu0 %v2002
        %v2004 = vpop.xlane.xlu0 %2003
        %v2005 = vmax.f32 %v1964, %v1965
        %2006 = vmax.xlane.f32.xlu0 %v2005
        %v2007 = vpop.xlane.xlu0 %2006
        %v2008 = vmax.f32 %v1966, %v1967
        %2009 = vmax.xlane.f32.xlu0 %v2008
        %v2010 = vpop.xlane.xlu0 %2009
        %v2011 = vmax.f32 %v1968, %v1969
        %2012 = vmax.xlane.f32.xlu0 %v2011
        %v2013 = vpop.xlane.xlu0 %2012
        %v2014 = vmax.f32 %v1970, %v1971
        %2015 = vmax.xlane.f32.xlu0 %v2014
        %v2016 = vpop.xlane.xlu0 %2015
        %v2017 = vmax.f32 %v1972, %v1973
        %2018 = vmax.xlane.f32.xlu0 %v2017
        %v2019 = vpop.xlane.xlu0 %2018
        %v2020 = vmax.f32 %v1974, %v1975
        %2021 = vmax.xlane.f32.xlu0 %v2020
        %v2022 = vpop.xlane.xlu0 %2021
        %v2023 = vmax.f32 %v1976, %v1977
        %2024 = vmax.xlane.f32.xlu0 %v2023
        %v2025 = vpop.xlane.xlu0 %2024
        %v2026 = vsub.f32 %v1795, %v1980
        %v2027 = vsub.f32 %v1796, %v1980
        %v2028 = vsub.f32 %v1797, %v1983
        %v2029 = vsub.f32 %v1798, %v1983
        %v2030 = vsub.f32 %v1799, %v1986
        %v2031 = vsub.f32 %v1800, %v1986
        %v2032 = vsub.f32 %v1801, %v1989
        %v2033 = vsub.f32 %v1802, %v1989
        %v2034 = vsub.f32 %v1803, %v1992
        %v2035 = vsub.f32 %v1804, %v1992
        %v2036 = vsub.f32 %v1805, %v1995
        %v2037 = vsub.f32 %v1806, %v1995
        %v2038 = vsub.f32 %v1807, %v1998
        %v2039 = vsub.f32 %v1808, %v1998
        %v2040 = vsub.f32 %v1809, %v2001
        %v2041 = vsub.f32 %v1810, %v2001
        %v2042 = vsub.f32 %v1811, %v2004
        %v2043 = vsub.f32 %v1812, %v2004
        %v2044 = vsub.f32 %v1813, %v2007
        %v2045 = vsub.f32 %v1814, %v2007
        %v2046 = vsub.f32 %v1815, %v2010
        %v2047 = vsub.f32 %v1816, %v2010
        %v2048 = vsub.f32 %v1817, %v2013
        %v2049 = vsub.f32 %v1818, %v2013
        %v2050 = vsub.f32 %v1819, %v2016
        %v2051 = vsub.f32 %v1820, %v2016
        %v2052 = vsub.f32 %v1821, %v2019
        %v2053 = vsub.f32 %v1822, %v2019
        %v2054 = vsub.f32 %v1823, %v2022
        %v2055 = vsub.f32 %v1824, %v2022
        %v2056 = vsub.f32 %v1825, %v2025
        %v2057 = vsub.f32 %v1826, %v2025
        %v2058 = vsel %vm1914, %v2026, -inf
        %v2059 = vsel %vm1915, %v2027, -inf
        %v2060 = vsel %vm1916, %v2028, -inf
        %v2061 = vsel %vm1917, %v2029, -inf
        %v2062 = vsel %vm1918, %v2030, -inf
        %v2063 = vsel %vm1919, %v2031, -inf
        %v2064 = vsel %vm1920, %v2032, -inf
        %v2065 = vsel %vm1921, %v2033, -inf
        %v2066 = vsel %vm1922, %v2034, -inf
        %v2067 = vsel %vm1923, %v2035, -inf
        %v2068 = vsel %vm1924, %v2036, -inf
        %v2069 = vsel %vm1925, %v2037, -inf
        %v2070 = vsel %vm1926, %v2038, -inf
        %v2071 = vsel %vm1927, %v2039, -inf
        %v2072 = vsel %vm1928, %v2040, -inf
        %v2073 = vsel %vm1929, %v2041, -inf
        %v2074 = vsel %vm1930, %v2042, -inf
        %v2075 = vsel %vm1931, %v2043, -inf
        %v2076 = vsel %vm1932, %v2044, -inf
        %v2077 = vsel %vm1933, %v2045, -inf
        %v2078 = vsel %vm1934, %v2046, -inf
        %v2079 = vsel %vm1935, %v2047, -inf
        %v2080 = vsel %vm1936, %v2048, -inf
        %v2081 = vsel %vm1937, %v2049, -inf
        %v2082 = vsel %vm1938, %v2050, -inf
        %v2083 = vsel %vm1939, %v2051, -inf
        %v2084 = vsel %vm1940, %v2052, -inf
        %v2085 = vsel %vm1941, %v2053, -inf
        %v2086 = vsel %vm1942, %v2054, -inf
        %v2087 = vsel %vm1943, %v2055, -inf
        %v2088 = vsel %vm1944, %v2056, -inf
        %v2089 = vsel %vm1945, %v2057, -inf
        %v2090 = vmul.f32 %v2058, 1.442695
        %v2091 = vpow.pop %v2090
        %v2092 = vmul.f32 %v2059, 1.442695
        %v2093 = vpow.pop %v2092
        %v2094 = vmul.f32 %v2060, 1.442695
        %v2095 = vpow.pop %v2094
        %v2096 = vmul.f32 %v2061, 1.442695
        %v2097 = vpow.pop %v2096
        %v2098 = vmul.f32 %v2062, 1.442695
        %v2099 = vpow.pop %v2098
        %v2100 = vmul.f32 %v2063, 1.442695
        %v2101 = vpow.pop %v2100
        %v2102 = vmul.f32 %v2064, 1.442695
        %v2103 = vpow.pop %v2102
        %v2104 = vmul.f32 %v2065, 1.442695
        %v2105 = vpow.pop %v2104
        %v2106 = vmul.f32 %v2066, 1.442695
        %v2107 = vpow.pop %v2106
        %v2108 = vmul.f32 %v2067, 1.442695
        %v2109 = vpow.pop %v2108
        %v2110 = vmul.f32 %v2068, 1.442695
        %v2111 = vpow.pop %v2110
        %v2112 = vmul.f32 %v2069, 1.442695
        %v2113 = vpow.pop %v2112
        %v2114 = vmul.f32 %v2070, 1.442695
        %v2115 = vpow.pop %v2114
        %v2116 = vmul.f32 %v2071, 1.442695
        %v2117 = vpow.pop %v2116
        %v2118 = vmul.f32 %v2072, 1.442695
        %v2119 = vpow.pop %v2118
        %v2120 = vmul.f32 %v2073, 1.442695
        %v2121 = vpow.pop %v2120
        %v2122 = vmul.f32 %v2074, 1.442695
        %v2123 = vpow.pop %v2122
        %v2124 = vmul.f32 %v2075, 1.442695
        %v2125 = vpow.pop %v2124
        %v2126 = vmul.f32 %v2076, 1.442695
        %v2127 = vpow.pop %v2126
        %v2128 = vmul.f32 %v2077, 1.442695
        %v2129 = vpow.pop %v2128
        %v2130 = vmul.f32 %v2078, 1.442695
        %v2131 = vpow.pop %v2130
        %v2132 = vmul.f32 %v2079, 1.442695
        %v2133 = vpow.pop %v2132
        %v2134 = vmul.f32 %v2080, 1.442695
        %v2135 = vpow.pop %v2134
        %v2136 = vmul.f32 %v2081, 1.442695
        %v2137 = vpow.pop %v2136
        %v2138 = vmul.f32 %v2082, 1.442695
        %v2139 = vpow.pop %v2138
        %v2140 = vmul.f32 %v2083, 1.442695
        %v2141 = vpow.pop %v2140
        %v2142 = vmul.f32 %v2084, 1.442695
        %v2143 = vpow.pop %v2142
        %v2144 = vmul.f32 %v2085, 1.442695
        %v2145 = vpow.pop %v2144
        %v2146 = vmul.f32 %v2086, 1.442695
        %v2147 = vpow.pop %v2146
        %v2148 = vmul.f32 %v2087, 1.442695
        %v2149 = vpow.pop %v2148
        %v2150 = vmul.f32 %v2088, 1.442695
        %v2151 = vpow.pop %v2150
        %v2152 = vmul.f32 %v2089, 1.442695
        %v2153 = vpow.pop %v2152
        %v2154 = vadd.f32 %v2091, %v2093
        %2155 = vadd.xlane.f32.xlu0 %v2154
        %v2156 = vpop.xlane.xlu0 %2155
        %v2157 = vadd.f32 %v2095, %v2097
        %2158 = vadd.xlane.f32.xlu0 %v2157
        %v2159 = vpop.xlane.xlu0 %2158
        %v2160 = vadd.f32 %v2099, %v2101
        %2161 = vadd.xlane.f32.xlu0 %v2160
        %v2162 = vpop.xlane.xlu0 %2161
        %v2163 = vadd.f32 %v2103, %v2105
        %2164 = vadd.xlane.f32.xlu0 %v2163
        %v2165 = vpop.xlane.xlu0 %2164
        %v2166 = vadd.f32 %v2107, %v2109
        %2167 = vadd.xlane.f32.xlu0 %v2166
        %v2168 = vpop.xlane.xlu0 %2167
        %v2169 = vadd.f32 %v2111, %v2113
        %2170 = vadd.xlane.f32.xlu0 %v2169
        %v2171 = vpop.xlane.xlu0 %2170
        %v2172 = vadd.f32 %v2115, %v2117
        %2173 = vadd.xlane.f32.xlu0 %v2172
        %v2174 = vpop.xlane.xlu0 %2173
        %v2175 = vadd.f32 %v2119, %v2121
        %2176 = vadd.xlane.f32.xlu0 %v2175
        %v2177 = vpop.xlane.xlu0 %2176
        %v2178 = vadd.f32 %v2123, %v2125
        %2179 = vadd.xlane.f32.xlu0 %v2178
        %v2180 = vpop.xlane.xlu0 %2179
        %v2181 = vadd.f32 %v2127, %v2129
        %2182 = vadd.xlane.f32.xlu0 %v2181
        %v2183 = vpop.xlane.xlu0 %2182
        %v2184 = vadd.f32 %v2131, %v2133
        %2185 = vadd.xlane.f32.xlu0 %v2184
        %v2186 = vpop.xlane.xlu0 %2185
        %v2187 = vadd.f32 %v2135, %v2137
        %2188 = vadd.xlane.f32.xlu0 %v2187
        %v2189 = vpop.xlane.xlu0 %2188
        %v2190 = vadd.f32 %v2139, %v2141
        %2191 = vadd.xlane.f32.xlu0 %v2190
        %v2192 = vpop.xlane.xlu0 %2191
        %v2193 = vadd.f32 %v2143, %v2145
        %2194 = vadd.xlane.f32.xlu0 %v2193
        %v2195 = vpop.xlane.xlu0 %2194
        %v2196 = vadd.f32 %v2147, %v2149
        %2197 = vadd.xlane.f32.xlu0 %v2196
        %v2198 = vpop.xlane.xlu0 %2197
        %v2199 = vadd.f32 %v2151, %v2153
        %2200 = vadd.xlane.f32.xlu0 %v2199
        %v2201 = vpop.xlane.xlu0 %2200
        %v2202 = vld [vmem:[#allocation4] sm:$0xff]
        %v2203 = vld [vmem:[#allocation4 + $0x8] sm:$0xff]
        %v2204 = vld [vmem:[#allocation4 + $0x10] sm:$0xff]
        %v2205 = vld [vmem:[#allocation4 + $0x18] sm:$0xff]
        %v2206 = vld [vmem:[#allocation4 + $0x20] sm:$0xff]
        %v2207 = vld [vmem:[#allocation4 + $0x28] sm:$0xff]
        %v2208 = vld [vmem:[#allocation4 + $0x30] sm:$0xff]
        %v2209 = vld [vmem:[#allocation4 + $0x38] sm:$0xff]
        %v2210 = vld [vmem:[#allocation4 + $0x40] sm:$0xff]
        %v2211 = vld [vmem:[#allocation4 + $0x48] sm:$0xff]
        %v2212 = vld [vmem:[#allocation4 + $0x50] sm:$0xff]
        %v2213 = vld [vmem:[#allocation4 + $0x58] sm:$0xff]
        %v2214 = vld [vmem:[#allocation4 + $0x60] sm:$0xff]
        %v2215 = vld [vmem:[#allocation4 + $0x68] sm:$0xff]
        %v2216 = vld [vmem:[#allocation4 + $0x70] sm:$0xff]
        %v2217 = vld [vmem:[#allocation4 + $0x78] sm:$0xff]
        %v2218 = vsel %vm1914, %v2202, 0.0
        %v2219 = vsel %vm1916, %v2203, 0.0
        %v2220 = vsel %vm1918, %v2204, 0.0
        %v2221 = vsel %vm1920, %v2205, 0.0
        %v2222 = vsel %vm1922, %v2206, 0.0
        %v2223 = vsel %vm1924, %v2207, 0.0
        %v2224 = vsel %vm1926, %v2208, 0.0
        %v2225 = vsel %vm1928, %v2209, 0.0
        %v2226 = vsel %vm1930, %v2210, 0.0
        %v2227 = vsel %vm1932, %v2211, 0.0
        %v2228 = vsel %vm1934, %v2212, 0.0
        %v2229 = vsel %vm1936, %v2213, 0.0
        %v2230 = vsel %vm1938, %v2214, 0.0
        %v2231 = vsel %vm1940, %v2215, 0.0
        %v2232 = vsel %vm1942, %v2216, 0.0
        %v2233 = vsel %vm1944, %v2217, 0.0
        %2234 = vadd.xlane.f32.xlu0 %v2218
        %v2235 = vpop.xlane.xlu0 %2234
        %2236 = vadd.xlane.f32.xlu0 %v2219
        %v2237 = vpop.xlane.xlu0 %2236
        %2238 = vadd.xlane.f32.xlu0 %v2220
        %v2239 = vpop.xlane.xlu0 %2238
        %2240 = vadd.xlane.f32.xlu0 %v2221
        %v2241 = vpop.xlane.xlu0 %2240
        %2242 = vadd.xlane.f32.xlu0 %v2222
        %v2243 = vpop.xlane.xlu0 %2242
        %2244 = vadd.xlane.f32.xlu0 %v2223
        %v2245 = vpop.xlane.xlu0 %2244
        %2246 = vadd.xlane.f32.xlu0 %v2224
        %v2247 = vpop.xlane.xlu0 %2246
        %2248 = vadd.xlane.f32.xlu0 %v2225
        %v2249 = vpop.xlane.xlu0 %2248
        %2250 = vadd.xlane.f32.xlu0 %v2226
        %v2251 = vpop.xlane.xlu0 %2250
        %2252 = vadd.xlane.f32.xlu0 %v2227
        %v2253 = vpop.xlane.xlu0 %2252
        %2254 = vadd.xlane.f32.xlu0 %v2228
        %v2255 = vpop.xlane.xlu0 %2254
        %2256 = vadd.xlane.f32.xlu0 %v2229
        %v2257 = vpop.xlane.xlu0 %2256
        %2258 = vadd.xlane.f32.xlu0 %v2230
        %v2259 = vpop.xlane.xlu0 %2258
        %2260 = vadd.xlane.f32.xlu0 %v2231
        %v2261 = vpop.xlane.xlu0 %2260
        %2262 = vadd.xlane.f32.xlu0 %v2232
        %v2263 = vpop.xlane.xlu0 %2262
        %2264 = vadd.xlane.f32.xlu0 %v2233
        %v2265 = vpop.xlane.xlu0 %2264
        %v2266 = vadd.f32 %v2235, 0.0
        %v2267 = vadd.f32 %v2237, 0.0
        %v2268 = vadd.f32 %v2239, 0.0
        %v2269 = vadd.f32 %v2241, 0.0
        %v2270 = vadd.f32 %v2243, 0.0
        %v2271 = vadd.f32 %v2245, 0.0
        %v2272 = vadd.f32 %v2247, 0.0
        %v2273 = vadd.f32 %v2249, 0.0
        %v2274 = vadd.f32 %v2251, 0.0
        %v2275 = vadd.f32 %v2253, 0.0
        %v2276 = vadd.f32 %v2255, 0.0
        %v2277 = vadd.f32 %v2257, 0.0
        %v2278 = vadd.f32 %v2259, 0.0
        %v2279 = vadd.f32 %v2261, 0.0
        %v2280 = vadd.f32 %v2263, 0.0
        %v2281 = vadd.f32 %v2265, 0.0
        %v2282 = vmul.f32 %v2218, %v2026
        %v2283 = vmul.f32 %v2219, %v2028
        %v2284 = vmul.f32 %v2220, %v2030
        %v2285 = vmul.f32 %v2221, %v2032
        %v2286 = vmul.f32 %v2222, %v2034
        %v2287 = vmul.f32 %v2223, %v2036
        %v2288 = vmul.f32 %v2224, %v2038
        %v2289 = vmul.f32 %v2225, %v2040
        %v2290 = vmul.f32 %v2226, %v2042
        %v2291 = vmul.f32 %v2227, %v2044
        %v2292 = vmul.f32 %v2228, %v2046
        %v2293 = vmul.f32 %v2229, %v2048
        %v2294 = vmul.f32 %v2230, %v2050
        %v2295 = vmul.f32 %v2231, %v2052
        %v2296 = vmul.f32 %v2232, %v2054
        %v2297 = vmul.f32 %v2233, %v2056
        %2298 = vadd.xlane.f32.xlu0 %v2282
        %v2299 = vpop.xlane.xlu0 %2298
        %2300 = vadd.xlane.f32.xlu0 %v2283
        %v2301 = vpop.xlane.xlu0 %2300
        %2302 = vadd.xlane.f32.xlu0 %v2284
        %v2303 = vpop.xlane.xlu0 %2302
        %2304 = vadd.xlane.f32.xlu0 %v2285
        %v2305 = vpop.xlane.xlu0 %2304
        %2306 = vadd.xlane.f32.xlu0 %v2286
        %v2307 = vpop.xlane.xlu0 %2306
        %2308 = vadd.xlane.f32.xlu0 %v2287
        %v2309 = vpop.xlane.xlu0 %2308
        %2310 = vadd.xlane.f32.xlu0 %v2288
        %v2311 = vpop.xlane.xlu0 %2310
        %2312 = vadd.xlane.f32.xlu0 %v2289
        %v2313 = vpop.xlane.xlu0 %2312
        %2314 = vadd.xlane.f32.xlu0 %v2290
        %v2315 = vpop.xlane.xlu0 %2314
        %2316 = vadd.xlane.f32.xlu0 %v2291
        %v2317 = vpop.xlane.xlu0 %2316
        %2318 = vadd.xlane.f32.xlu0 %v2292
        %v2319 = vpop.xlane.xlu0 %2318
        %2320 = vadd.xlane.f32.xlu0 %v2293
        %v2321 = vpop.xlane.xlu0 %2320
        %2322 = vadd.xlane.f32.xlu0 %v2294
        %v2323 = vpop.xlane.xlu0 %2322
        %2324 = vadd.xlane.f32.xlu0 %v2295
        %v2325 = vpop.xlane.xlu0 %2324
        %2326 = vadd.xlane.f32.xlu0 %v2296
        %v2327 = vpop.xlane.xlu0 %2326
        %2328 = vadd.xlane.f32.xlu0 %v2297
        %v2329 = vpop.xlane.xlu0 %2328
        %v2330 = vadd.f32 %v2299, 0.0
        %v2331 = vadd.f32 %v2301, 0.0
        %v2332 = vadd.f32 %v2303, 0.0
        %v2333 = vadd.f32 %v2305, 0.0
        %v2334 = vadd.f32 %v2307, 0.0
        %v2335 = vadd.f32 %v2309, 0.0
        %v2336 = vadd.f32 %v2311, 0.0
        %v2337 = vadd.f32 %v2313, 0.0
        %v2338 = vadd.f32 %v2315, 0.0
        %v2339 = vadd.f32 %v2317, 0.0
        %v2340 = vadd.f32 %v2319, 0.0
        %v2341 = vadd.f32 %v2321, 0.0
        %v2342 = vadd.f32 %v2323, 0.0
        %v2343 = vadd.f32 %v2325, 0.0
        %v2344 = vadd.f32 %v2327, 0.0
        %v2345 = vadd.f32 %v2329, 0.0
        %v2346 = vsel %vm1915, %v2202, 0.0
        %v2347 = vsel %vm1917, %v2203, 0.0
        %v2348 = vsel %vm1919, %v2204, 0.0
        %v2349 = vsel %vm1921, %v2205, 0.0
        %v2350 = vsel %vm1923, %v2206, 0.0
        %v2351 = vsel %vm1925, %v2207, 0.0
        %v2352 = vsel %vm1927, %v2208, 0.0
        %v2353 = vsel %vm1929, %v2209, 0.0
        %v2354 = vsel %vm1931, %v2210, 0.0
        %v2355 = vsel %vm1933, %v2211, 0.0
        %v2356 = vsel %vm1935, %v2212, 0.0
        %v2357 = vsel %vm1937, %v2213, 0.0
        %v2358 = vsel %vm1939, %v2214, 0.0
        %v2359 = vsel %vm1941, %v2215, 0.0
        %v2360 = vsel %vm1943, %v2216, 0.0
        %v2361 = vsel %vm1945, %v2217, 0.0
        %2362 = vadd.xlane.f32.xlu0 %v2346
        %v2363 = vpop.xlane.xlu0 %2362
        %2364 = vadd.xlane.f32.xlu0 %v2347
        %v2365 = vpop.xlane.xlu0 %2364
        %2366 = vadd.xlane.f32.xlu0 %v2348
        %v2367 = vpop.xlane.xlu0 %2366
        %2368 = vadd.xlane.f32.xlu0 %v2349
        %v2369 = vpop.xlane.xlu0 %2368
        %2370 = vadd.xlane.f32.xlu0 %v2350
        %v2371 = vpop.xlane.xlu0 %2370
        %2372 = vadd.xlane.f32.xlu0 %v2351
        %v2373 = vpop.xlane.xlu0 %2372
        %2374 = vadd.xlane.f32.xlu0 %v2352
        %v2375 = vpop.xlane.xlu0 %2374
        %2376 = vadd.xlane.f32.xlu0 %v2353
        %v2377 = vpop.xlane.xlu0 %2376
        %2378 = vadd.xlane.f32.xlu0 %v2354
        %v2379 = vpop.xlane.xlu0 %2378
        %2380 = vadd.xlane.f32.xlu0 %v2355
        %v2381 = vpop.xlane.xlu0 %2380
        %2382 = vadd.xlane.f32.xlu0 %v2356
        %v2383 = vpop.xlane.xlu0 %2382
        %2384 = vadd.xlane.f32.xlu0 %v2357
        %v2385 = vpop.xlane.xlu0 %2384
        %2386 = vadd.xlane.f32.xlu0 %v2358
        %v2387 = vpop.xlane.xlu0 %2386
        %2388 = vadd.xlane.f32.xlu0 %v2359
        %v2389 = vpop.xlane.xlu0 %2388
        %2390 = vadd.xlane.f32.xlu0 %v2360
        %v2391 = vpop.xlane.xlu0 %2390
        %2392 = vadd.xlane.f32.xlu0 %v2361
        %v2393 = vpop.xlane.xlu0 %2392
        %v2394 = vadd.f32 %v2266, %v2363
        %v2395 = vadd.f32 %v2267, %v2365
        %v2396 = vadd.f32 %v2268, %v2367
        %v2397 = vadd.f32 %v2269, %v2369
        %v2398 = vadd.f32 %v2270, %v2371
        %v2399 = vadd.f32 %v2271, %v2373
        %v2400 = vadd.f32 %v2272, %v2375
        %v2401 = vadd.f32 %v2273, %v2377
        %v2402 = vadd.f32 %v2274, %v2379
        %v2403 = vadd.f32 %v2275, %v2381
        %v2404 = vadd.f32 %v2276, %v2383
        %v2405 = vadd.f32 %v2277, %v2385
        %v2406 = vadd.f32 %v2278, %v2387
        %v2407 = vadd.f32 %v2279, %v2389
        %v2408 = vadd.f32 %v2280, %v2391
        %v2409 = vadd.f32 %v2281, %v2393
        %v2410 = vmul.f32 %v2346, %v2027
        %v2411 = vmul.f32 %v2347, %v2029
        %v2412 = vmul.f32 %v2348, %v2031
        %v2413 = vmul.f32 %v2349, %v2033
        %v2414 = vmul.f32 %v2350, %v2035
        %v2415 = vmul.f32 %v2351, %v2037
        %v2416 = vmul.f32 %v2352, %v2039
        %v2417 = vmul.f32 %v2353, %v2041
        %v2418 = vmul.f32 %v2354, %v2043
        %v2419 = vmul.f32 %v2355, %v2045
        %v2420 = vmul.f32 %v2356, %v2047
        %v2421 = vmul.f32 %v2357, %v2049
        %v2422 = vmul.f32 %v2358, %v2051
        %v2423 = vmul.f32 %v2359, %v2053
        %v2424 = vmul.f32 %v2360, %v2055
        %v2425 = vmul.f32 %v2361, %v2057
        %2426 = vadd.xlane.f32.xlu0 %v2410
        %v2427 = vpop.xlane.xlu0 %2426
        %2428 = vadd.xlane.f32.xlu0 %v2411
        %v2429 = vpop.xlane.xlu0 %2428
        %2430 = vadd.xlane.f32.xlu0 %v2412
        %v2431 = vpop.xlane.xlu0 %2430
        %2432 = vadd.xlane.f32.xlu0 %v2413
        %v2433 = vpop.xlane.xlu0 %2432
        %2434 = vadd.xlane.f32.xlu0 %v2414
        %v2435 = vpop.xlane.xlu0 %2434
        %2436 = vadd.xlane.f32.xlu0 %v2415
        %v2437 = vpop.xlane.xlu0 %2436
        %2438 = vadd.xlane.f32.xlu0 %v2416
        %v2439 = vpop.xlane.xlu0 %2438
        %2440 = vadd.xlane.f32.xlu0 %v2417
        %v2441 = vpop.xlane.xlu0 %2440
        %2442 = vadd.xlane.f32.xlu0 %v2418
        %v2443 = vpop.xlane.xlu0 %2442
        %2444 = vadd.xlane.f32.xlu0 %v2419
        %v2445 = vpop.xlane.xlu0 %2444
        %2446 = vadd.xlane.f32.xlu0 %v2420
        %v2447 = vpop.xlane.xlu0 %2446
        %2448 = vadd.xlane.f32.xlu0 %v2421
        %v2449 = vpop.xlane.xlu0 %2448
        %2450 = vadd.xlane.f32.xlu0 %v2422
        %v2451 = vpop.xlane.xlu0 %2450
        %2452 = vadd.xlane.f32.xlu0 %v2423
        %v2453 = vpop.xlane.xlu0 %2452
        %2454 = vadd.xlane.f32.xlu0 %v2424
        %v2455 = vpop.xlane.xlu0 %2454
        %2456 = vadd.xlane.f32.xlu0 %v2425
        %v2457 = vpop.xlane.xlu0 %2456
        %v2458 = vadd.f32 %v2330, %v2427
        %v2459 = vadd.f32 %v2331, %v2429
        %v2460 = vadd.f32 %v2332, %v2431
        %v2461 = vadd.f32 %v2333, %v2433
        %v2462 = vadd.f32 %v2334, %v2435
        %v2463 = vadd.f32 %v2335, %v2437
        %v2464 = vadd.f32 %v2336, %v2439
        %v2465 = vadd.f32 %v2337, %v2441
        %v2466 = vadd.f32 %v2338, %v2443
        %v2467 = vadd.f32 %v2339, %v2445
        %v2468 = vadd.f32 %v2340, %v2447
        %v2469 = vadd.f32 %v2341, %v2449
        %v2470 = vadd.f32 %v2342, %v2451
        %v2471 = vadd.f32 %v2343, %v2453
        %v2472 = vadd.f32 %v2344, %v2455
        %v2473 = vadd.f32 %v2345, %v2457
        %vm2474 = vcmp.lt.f32.partialorder %v2394, 1e-06
        %vm2475 = vcmp.lt.f32.partialorder %v2395, 1e-06
        %vm2476 = vcmp.lt.f32.partialorder %v2396, 1e-06
        %vm2477 = vcmp.lt.f32.partialorder %v2397, 1e-06
        %vm2478 = vcmp.lt.f32.partialorder %v2398, 1e-06
        %vm2479 = vcmp.lt.f32.partialorder %v2399, 1e-06
        %vm2480 = vcmp.lt.f32.partialorder %v2400, 1e-06
        %vm2481 = vcmp.lt.f32.partialorder %v2401, 1e-06
        %vm2482 = vcmp.lt.f32.partialorder %v2402, 1e-06
        %vm2483 = vcmp.lt.f32.partialorder %v2403, 1e-06
        %vm2484 = vcmp.lt.f32.partialorder %v2404, 1e-06
        %vm2485 = vcmp.lt.f32.partialorder %v2405, 1e-06
        %vm2486 = vcmp.lt.f32.partialorder %v2406, 1e-06
        %vm2487 = vcmp.lt.f32.partialorder %v2407, 1e-06
        %vm2488 = vcmp.lt.f32.partialorder %v2408, 1e-06
        %vm2489 = vcmp.lt.f32.partialorder %v2409, 1e-06
        %v2490 = vsel %vm2474, 1.0, %v2394
        %v2491 = vsel %vm2475, 1.0, %v2395
        %v2492 = vsel %vm2476, 1.0, %v2396
        %v2493 = vsel %vm2477, 1.0, %v2397
        %v2494 = vsel %vm2478, 1.0, %v2398
        %v2495 = vsel %vm2479, 1.0, %v2399
        %v2496 = vsel %vm2480, 1.0, %v2400
        %v2497 = vsel %vm2481, 1.0, %v2401
        %v2498 = vsel %vm2482, 1.0, %v2402
        %v2499 = vsel %vm2483, 1.0, %v2403
        %v2500 = vsel %vm2484, 1.0, %v2404
        %v2501 = vsel %vm2485, 1.0, %v2405
        %v2502 = vsel %vm2486, 1.0, %v2406
        %v2503 = vsel %vm2487, 1.0, %v2407
        %v2504 = vsel %vm2488, 1.0, %v2408
        %v2505 = vsel %vm2489, 1.0, %v2409
        %v2506 = vlog2.pop %v2156
        %v2507 = vmul.f32 %v2506, 0.6931472
        %v2508 = vlog2.pop %v2159
        %v2509 = vmul.f32 %v2508, 0.6931472
        %v2510 = vlog2.pop %v2162
        %v2511 = vmul.f32 %v2510, 0.6931472
        %v2512 = vlog2.pop %v2165
        %v2513 = vmul.f32 %v2512, 0.6931472
        %v2514 = vlog2.pop %v2168
        %v2515 = vmul.f32 %v2514, 0.6931472
        %v2516 = vlog2.pop %v2171
        %v2517 = vmul.f32 %v2516, 0.6931472
        %v2518 = vlog2.pop %v2174
        %v2519 = vmul.f32 %v2518, 0.6931472
        %v2520 = vlog2.pop %v2177
        %v2521 = vmul.f32 %v2520, 0.6931472
        %v2522 = vlog2.pop %v2180
        %v2523 = vmul.f32 %v2522, 0.6931472
        %v2524 = vlog2.pop %v2183
        %v2525 = vmul.f32 %v2524, 0.6931472
        %v2526 = vlog2.pop %v2186
        %v2527 = vmul.f32 %v2526, 0.6931472
        %v2528 = vlog2.pop %v2189
        %v2529 = vmul.f32 %v2528, 0.6931472
        %v2530 = vlog2.pop %v2192
        %v2531 = vmul.f32 %v2530, 0.6931472
        %v2532 = vlog2.pop %v2195
        %v2533 = vmul.f32 %v2532, 0.6931472
        %v2534 = vlog2.pop %v2198
        %v2535 = vmul.f32 %v2534, 0.6931472
        %v2536 = vlog2.pop %v2201
        %v2537 = vmul.f32 %v2536, 0.6931472
        %v2538 = vmul.f32 %v2394, %v2507
        %v2539 = vmul.f32 %v2395, %v2509
        %v2540 = vmul.f32 %v2396, %v2511
        %v2541 = vmul.f32 %v2397, %v2513
        %v2542 = vmul.f32 %v2398, %v2515
        %v2543 = vmul.f32 %v2399, %v2517
        %v2544 = vmul.f32 %v2400, %v2519
        %v2545 = vmul.f32 %v2401, %v2521
        %v2546 = vmul.f32 %v2402, %v2523
        %v2547 = vmul.f32 %v2403, %v2525
        %v2548 = vmul.f32 %v2404, %v2527
        %v2549 = vmul.f32 %v2405, %v2529
        %v2550 = vmul.f32 %v2406, %v2531
        %v2551 = vmul.f32 %v2407, %v2533
        %v2552 = vmul.f32 %v2408, %v2535
        %v2553 = vmul.f32 %v2409, %v2537
        %v2554 = vsub.f32 %v2458, %v2538
        %v2555 = vsub.f32 %v2459, %v2539
        %v2556 = vsub.f32 %v2460, %v2540
        %v2557 = vsub.f32 %v2461, %v2541
        %v2558 = vsub.f32 %v2462, %v2542
        %v2559 = vsub.f32 %v2463, %v2543
        %v2560 = vsub.f32 %v2464, %v2544
        %v2561 = vsub.f32 %v2465, %v2545
        %v2562 = vsub.f32 %v2466, %v2546
        %v2563 = vsub.f32 %v2467, %v2547
        %v2564 = vsub.f32 %v2468, %v2548
        %v2565 = vsub.f32 %v2469, %v2549
        %v2566 = vsub.f32 %v2470, %v2550
        %v2567 = vsub.f32 %v2471, %v2551
        %v2568 = vsub.f32 %v2472, %v2552
        %v2569 = vsub.f32 %v2473, %v2553
        %v2570 = vrcp.pop %v2490
        %v2571 = vmul.f32 %v2554, %v2570
        %v2572 = vrcp.pop %v2491
        %v2573 = vmul.f32 %v2555, %v2572
        %v2574 = vrcp.pop %v2492
        %v2575 = vmul.f32 %v2556, %v2574
        %v2576 = vrcp.pop %v2493
        %v2577 = vmul.f32 %v2557, %v2576
        %v2578 = vrcp.pop %v2494
        %v2579 = vmul.f32 %v2558, %v2578
        %v2580 = vrcp.pop %v2495
        %v2581 = vmul.f32 %v2559, %v2580
        %v2582 = vrcp.pop %v2496
        %v2583 = vmul.f32 %v2560, %v2582
        %v2584 = vrcp.pop %v2497
        %v2585 = vmul.f32 %v2561, %v2584
        %v2586 = vrcp.pop %v2498
        %v2587 = vmul.f32 %v2562, %v2586
        %v2588 = vrcp.pop %v2499
        %v2589 = vmul.f32 %v2563, %v2588
        %v2590 = vrcp.pop %v2500
        %v2591 = vmul.f32 %v2564, %v2590
        %v2592 = vrcp.pop %v2501
        %v2593 = vmul.f32 %v2565, %v2592
        %v2594 = vrcp.pop %v2502
        %v2595 = vmul.f32 %v2566, %v2594
        %v2596 = vrcp.pop %v2503
        %v2597 = vmul.f32 %v2567, %v2596
        %v2598 = vrcp.pop %v2504
        %v2599 = vmul.f32 %v2568, %v2598
        %v2600 = vrcp.pop %v2505
        %v2601 = vmul.f32 %v2569, %v2600
        %v2602 = vmul.f32 %v2571, -1.0
        %v2603 = vmul.f32 %v2573, -1.0
        %v2604 = vmul.f32 %v2575, -1.0
        %v2605 = vmul.f32 %v2577, -1.0
        %v2606 = vmul.f32 %v2579, -1.0
        %v2607 = vmul.f32 %v2581, -1.0
        %v2608 = vmul.f32 %v2583, -1.0
        %v2609 = vmul.f32 %v2585, -1.0
        %v2610 = vmul.f32 %v2587, -1.0
        %v2611 = vmul.f32 %v2589, -1.0
        %v2612 = vmul.f32 %v2591, -1.0
        %v2613 = vmul.f32 %v2593, -1.0
        %v2614 = vmul.f32 %v2595, -1.0
        %v2615 = vmul.f32 %v2597, -1.0
        %v2616 = vmul.f32 %v2599, -1.0
        %v2617 = vmul.f32 %v2601, -1.0
        %vm2618 = vcmask 7168
        %2619 = vst.msk [vmem:[%s153] sm:$0xff] %vm2618, %v2602
        %2620 = vst.msk [vmem:[%s153 + $0x8] sm:$0xff] %vm2618, %v2603
        %2621 = vst.msk [vmem:[%s153 + $0x10] sm:$0xff] %vm2618, %v2604
        %2622 = vst.msk [vmem:[%s153 + $0x18] sm:$0xff] %vm2618, %v2605
        %2623 = vst.msk [vmem:[%s153 + $0x20] sm:$0xff] %vm2618, %v2606
        %2624 = vst.msk [vmem:[%s153 + $0x28] sm:$0xff] %vm2618, %v2607
        %2625 = vst.msk [vmem:[%s153 + $0x30] sm:$0xff] %vm2618, %v2608
        %2626 = vst.msk [vmem:[%s153 + $0x38] sm:$0xff] %vm2618, %v2609
        %2627 = vst.msk [vmem:[%s153 + $0x40] sm:$0xff] %vm2618, %v2610
        %2628 = vst.msk [vmem:[%s153 + $0x48] sm:$0xff] %vm2618, %v2611
        %2629 = vst.msk [vmem:[%s153 + $0x50] sm:$0xff] %vm2618, %v2612
        %2630 = vst.msk [vmem:[%s153 + $0x58] sm:$0xff] %vm2618, %v2613
        %2631 = vst.msk [vmem:[%s153 + $0x60] sm:$0xff] %vm2618, %v2614
        %2632 = vst.msk [vmem:[%s153 + $0x68] sm:$0xff] %vm2618, %v2615
        %2633 = vst.msk [vmem:[%s153 + $0x70] sm:$0xff] %vm2618, %v2616
        %2634 = vst.msk [vmem:[%s153 + $0x78] sm:$0xff] %vm2618, %v2617
        %s2635 = smul.u32 16, %s15
        %p2636 = scmp.lt.s32.totalorder %s2635, 31
        %s2637 = scalar_select %p2636, %s2635, 31
        %s2638 = smul.addr %s2637, 8
        %s2639 = scalar_lea.vmem %s2, %s2638
        // Predicated region
        $region37: #{tpu_custom_call.1} parent=27 // pred_check
          %p2640 = pneg %p75
        $region38: #{tpu_custom_call.1} parent=27 // pred_check_branch
          %2642 = sbr.rel (%p2640) target = $region40
        $region39: #{tpu_custom_call.1} parent=27 // pred_region
          %s2643 = smul.u32 16, %s15
        $region40: #{tpu_custom_call.1} parent=27 // pred_fallthru
          _
      $region28: #{tpu_custom_call.1} parent=5 // pred_fallthru
        _
      %p2644 = scmp.le.s32.totalorder 2, %s10
      // Predicated region
      $region41: #{tpu_custom_call.1} parent=5 // pred_check
        %p2645 = pneg %p2644
      $region42: #{tpu_custom_call.1} parent=5 // pred_check_branch
        %2647 = sbr.rel (%p2645) target = $region44
      $region43: #{tpu_custom_call.1} parent=5 // pred_region
        %s2648 = ssub.s32 %s10, 2
        // Predicated region
        $region45: #{tpu_custom_call.1} parent=43 // pred_check
          %p2649 = pneg %p81
        $region46: #{tpu_custom_call.1} parent=43 // pred_check_branch
          %2651 = sbr.rel (%p2649) target = $region48
        $region47: #{tpu_custom_call.1} parent=43 // pred_region
          %s2652 = smul.u32 16, %s16
          %p2653 = scmp.lt.s32.totalorder %s2652, 31
          %s2654 = scalar_select %p2653, %s2652, 31
          %s2655 = smul.addr %s2654, 8
          %s2656 = scalar_lea.vmem %s2, %s2655
        $region48: #{tpu_custom_call.1} parent=43 // pred_fallthru
          _
      $region44: #{tpu_custom_call.1} parent=5 // pred_fallthru
        _
    $region6: #{tpu_custom_call.1} parent=1 // loop_footer
      %s14 = sadd.s32 1, %s10
    $region7: #{tpu_custom_call.1} parent=1 // loop_footer_branch
      %9 = sbr.rel target = $region3
    $region8: #{tpu_custom_call.1} parent=1 // loop_exit
      _
    %2657 = vsyncpa [#allocation3], 1
    %s2658 = scalar_lea.sflag [#allocation3], 1
    %2659 = vsyncpa %s2658, 1
    %2660 = vsyncpa [#allocation5], 1

// kernel: tpu_custom_call.1
$region0: #{tpu_custom_call.1}
  #allocation0 [shape = 'u32[]', space=smem, size = 0x4, offset = 0x4, fixed_abs, tag = 'smem constant byte address 0x4 - core index']
  #allocation1 [shape = 'u32[144,128]{1,0:T(1,128)}', space=vmem, size = 0x12000, scoped, tag = 'internal scratch']
  %s0 = inlined_call_operand.hbm [shape: f32[256,128], index: 0, kind: input, shape index: {}]
  %s1 = inlined_call_operand.hbm [shape: f32[128,128], index: 1, kind: input, shape index: {}]
  %s2 = inlined_call_operand.vmem [shape: f32[256,1], index: 2, kind: output, shape index: {}]
  %s3 = sld [smem:[#allocation0]]
  $region49: #{tpu_custom_call.1} parent=0
    _
  %s5 = ssub.s32 1, %s3
  %s6 = scalar_select 0, %s5, %s3
  $region1: #{tpu_custom_call.1} parent=0
    #allocation2 [shape = 'u8[131072]{0}', space=vmem, size = 0x20000, scoped, tag = 'input window, operand 0, single buffered']
    #allocation3 [shape = 's32[2]{0}', space=sflag, size = 0x8, scoped, tag = 'scoped memory for tpu_custom_call.1']
    #allocation4 [shape = 'u8[65536]{0}', space=vmem, size = 0x10000, scoped, tag = 'input window, operand 1, single buffered']
    #allocation5 [shape = 's32[1]{0}', space=sflag, size = 0x4, scoped, tag = 'scoped memory for tpu_custom_call.1']
    %7 = vsyncpa [#allocation3], 0
    %8 = vsyncpa [#allocation5], 0
    loop: start=0, step=1, limit=4
    $region2: #{tpu_custom_call.1} parent=1 // loop_pre_header
      _
    $region3: #{tpu_custom_call.1} parent=1 // loop_header
      %s10 = sphi 0, %s14
      %p11 = scmp.ge.s32.totalorder %s10, 4
      %s18 = sphi 0, %s18
      %s20 = sphi 0, %s18
      %s21 = sphi 0, %s20
      %s35 = sphi 0, %s21
      %s39 = sphi 0, %s39
      %s41 = sphi 0, %s39
      %s42 = sphi 0, %s41
      %s56 = sphi 0, %s42
      %s62 = sphi 0, %s64
      %s65 = sphi 0, %s62
      %s66 = sphi 0, %s65
      %s82 = sphi 0, %s66
    $region4: #{tpu_custom_call.1} parent=1 // loop_header_branch
      %13 = sbr.rel (%p11) target = $region8
    $region5: #{tpu_custom_call.1} parent=1 // loop_body
      %s15 = ssub.s32 %s10, 1
      %s16 = ssub.s32 %s10, 2
      %s17 = sadd.s32 %s10, 1
      %s19 = sadd.s32 %s18, 1
      %p22 = scmp.eq.s32.totalorder %s10, 1
      %p23 = scmp.ne.s32.totalorder %s18, %s20
      %p24 = scmp.eq.s32.totalorder %s10, 0
      %p25 = por %p23, %p24
      %p26 = scmp.ne.s32.totalorder %s18, %s20
      %p27 = scmp.eq.s32.totalorder %s15, 1
      %p28 = por %p26, %p27
      %p29 = scmp.ne.s32.totalorder %s20, %s21
      %p30 = scmp.eq.s32.totalorder %s15, 0
      %p31 = por %p29, %p30
      %p32 = scmp.ne.s32.totalorder %s20, %s21
      %p33 = scmp.eq.s32.totalorder %s16, 1
      %p34 = por %p32, %p33
      %p36 = scmp.ne.s32.totalorder %s21, %s35
      %p37 = scmp.eq.s32.totalorder %s16, 0
      %p38 = por %p36, %p37
      %s40 = sadd.s32 %s39, 1
      %p43 = scmp.eq.s32.totalorder %s10, 1
      %p44 = scmp.ne.s32.totalorder %s39, %s41
      %p45 = scmp.eq.s32.totalorder %s10, 0
      %p46 = por %p44, %p45
      %p47 = scmp.ne.s32.totalorder %s39, %s41
      %p48 = scmp.eq.s32.totalorder %s15, 1
      %p49 = por %p47, %p48
      %p50 = scmp.ne.s32.totalorder %s41, %s42
      %p51 = scmp.eq.s32.totalorder %s15, 0
      %p52 = por %p50, %p51
      %p53 = scmp.ne.s32.totalorder %s41, %s42
      %p54 = scmp.eq.s32.totalorder %s16, 1
      %p55 = por %p53, %p54
      %p57 = scmp.ne.s32.totalorder %s42, %s56
      %p58 = scmp.eq.s32.totalorder %s16, 0
      %p59 = por %p57, %p58
      %s60 = ssub.s32 %s10, %s17
      %p61 = scmp.eq.s32.totalorder %s60, 0
      %s63 = sadd.s32 %s62, 1
      %s64 = scalar_select %p61, %s62, %s63
      %p67 = pneg %p61
      %p68 = scmp.eq.s32.totalorder %s10, 1
      %p69 = por %p67, %p68
      %p70 = scmp.ne.s32.totalorder %s62, %s65
      %p71 = scmp.eq.s32.totalorder %s10, 0
      %p72 = por %p70, %p71
      %p73 = scmp.ne.s32.totalorder %s62, %s65
      %p74 = scmp.eq.s32.totalorder %s15, 1
      %p75 = por %p73, %p74
      %p76 = scmp.ne.s32.totalorder %s65, %s66
      %p77 = scmp.eq.s32.totalorder %s15, 0
      %p78 = por %p76, %p77
      %p79 = scmp.ne.s32.totalorder %s65, %s66
      %p80 = scmp.eq.s32.totalorder %s16, 1
      %p81 = por %p79, %p80
      %p83 = scmp.ne.s32.totalorder %s66, %s82
      %p84 = scmp.eq.s32.totalorder %s16, 0
      %p85 = por %p83, %p84
      %p86 = scmp.le.s32.totalorder 1, %s10
      %p87 = scmp.lt.s32.totalorder %s10, 3
      %p88 = pnand %p86, %p87
      %p89 = pneg %p88
      // Predicated region
      $region9: #{tpu_custom_call.1} parent=5 // pred_check
        _
      $region10: #{tpu_custom_call.1} parent=5 // pred_check_branch
        %91 = sbr.rel (%p88) target = $region12
      $region11: #{tpu_custom_call.1} parent=5 // pred_region
        %s92 = ssub.s32 %s10, 1
        // Predicated region
        $region13: #{tpu_custom_call.1} parent=11 // pred_check
          %p93 = pneg %p31
        $region14: #{tpu_custom_call.1} parent=11 // pred_check_branch
          %95 = sbr.rel (%p93) target = $region16
        $region15: #{tpu_custom_call.1} parent=11 // pred_region
          %s97 = ssub.s32 4096, 4096
          %98 = vsyncadd [#allocation3], %s97
          %s99 = sshll.u32 [#allocation2], 4
          %s100 = int_to_ptr.vmem [resolvable:$true] %s99
          %105 = dma.hbm_to_vmem [thread:$0]  %s0, 4096, %s100, [#allocation3], 128, 128, 8
        $region16: #{tpu_custom_call.1} parent=11 // pred_fallthru
          _
        // Predicated region
        $region17: #{tpu_custom_call.1} parent=11 // pred_check
          %p106 = pneg %p52
        $region18: #{tpu_custom_call.1} parent=11 // pred_check_branch
          %108 = sbr.rel (%p106) target = $region20
        $region19: #{tpu_custom_call.1} parent=11 // pred_region
          %s110 = ssub.s32 2048, 2048
          %111 = vsyncadd [#allocation5], %s110
          %s112 = sshll.u32 [#allocation4], 4
          %s113 = int_to_ptr.vmem [resolvable:$true] %s112
          %118 = dma.hbm_to_vmem [thread:$0]  %s1, 2048, %s113, [#allocation5], 128, 128, 8
        $region20: #{tpu_custom_call.1} parent=11 // pred_fallthru
          _
      $region12: #{tpu_custom_call.1} parent=5 // pred_fallthru
        _
      %p119 = scmp.lt.s32.totalorder %s10, 2
      // Predicated region
      $region21: #{tpu_custom_call.1} parent=5 // pred_check
        %p120 = pneg %p119
      $region22: #{tpu_custom_call.1} parent=5 // pred_check_branch
        %122 = sbr.rel (%p120) target = $region24
      $region23: #{tpu_custom_call.1} parent=5 // pred_region
        _
      $region24: #{tpu_custom_call.1} parent=5 // pred_fallthru
        _
      %p123 = scmp.le.s32.totalorder 1, %s10
      %p124 = scmp.lt.s32.totalorder %s10, 3
      %p125 = pnand %p123, %p124
      %p126 = pneg %p125
      // Predicated region
      $region25: #{tpu_custom_call.1} parent=5 // pred_check
        _
      $region26: #{tpu_custom_call.1} parent=5 // pred_check_branch
        %128 = sbr.rel (%p125) target = $region28
      $region27: #{tpu_custom_call.1} parent=5 // pred_region
        %s129 = ssub.s32 %s10, 1
        // Predicated region
        $region29: #{tpu_custom_call.1} parent=27 // pred_check
          %p130 = pneg %p31
        $region30: #{tpu_custom_call.1} parent=27 // pred_check_branch
          %132 = sbr.rel (%p130) target = $region32
        $region31: #{tpu_custom_call.1} parent=27 // pred_region
          %133 = dma.done [#allocation3], 4096
        $region32: #{tpu_custom_call.1} parent=27 // pred_fallthru
          _
        // Predicated region
        $region33: #{tpu_custom_call.1} parent=27 // pred_check
          %p134 = pneg %p52
        $region34: #{tpu_custom_call.1} parent=27 // pred_check_branch
          %136 = sbr.rel (%p134) target = $region36
        $region35: #{tpu_custom_call.1} parent=27 // pred_region
          %137 = dma.done [#allocation5], 2048
        $region36: #{tpu_custom_call.1} parent=27 // pred_fallthru
          _
        %p138 = pneg %p31
        %p139 = pneg %p28
        %p140 = pneg %p52
        %p141 = pneg %p49
        %p142 = pneg %p78
        %p143 = pneg %p75
        %s144 = smul.u32 16, %s15
        %p145 = scmp.lt.s32.totalorder %s144, 31
        %s146 = scalar_select %p145, %s144, 31
        %s147 = smul.addr %s146, 8
        %s148 = scalar_lea.vmem %s2, %s147
        %s149 = smul.u32 16, %s15
        %p150 = scmp.lt.s32.totalorder %s149, 31
        %s151 = scalar_select %p150, %s149, 31
        %s152 = smul.addr %s151, 8
        %s153 = scalar_lea.vmem %s2, %s152
        %s154 = smul.u32 16, %s15
        %s155 = smul.u32 %s15, 128
        %s156 = scalar_lea.vmem [#allocation2], %s155
        %v157 = vld [vmem:[%s156] sm:$0xff]
        %v158 = vld [vmem:[%s156 + $0x8] sm:$0xff]
        %v159 = vld [vmem:[%s156 + $0x10] sm:$0xff]
        %v160 = vld [vmem:[%s156 + $0x18] sm:$0xff]
        %v161 = vld [vmem:[%s156 + $0x20] sm:$0xff]
        %v162 = vld [vmem:[%s156 + $0x28] sm:$0xff]
        %v163 = vld [vmem:[%s156 + $0x30] sm:$0xff]
        %v164 = vld [vmem:[%s156 + $0x38] sm:$0xff]
        %v165 = vld [vmem:[%s156 + $0x40] sm:$0xff]
        %v166 = vld [vmem:[%s156 + $0x48] sm:$0xff]
        %v167 = vld [vmem:[%s156 + $0x50] sm:$0xff]
        %v168 = vld [vmem:[%s156 + $0x58] sm:$0xff]
        %v169 = vld [vmem:[%s156 + $0x60] sm:$0xff]
        %v170 = vld [vmem:[%s156 + $0x68] sm:$0xff]
        %v171 = vld [vmem:[%s156 + $0x70] sm:$0xff]
        %v172 = vld [vmem:[%s156 + $0x78] sm:$0xff]
        %v173 = vld [vmem:[#allocation2] sm:$0xff]
        %v174 = vld [vmem:[#allocation2 + $0x8] sm:$0xff]
        %v175 = vld [vmem:[#allocation2 + $0x10] sm:$0xff]
        %v176 = vld [vmem:[#allocation2 + $0x18] sm:$0xff]
        %v177 = vld [vmem:[#allocation2 + $0x20] sm:$0xff]
        %v178 = vld [vmem:[#allocation2 + $0x28] sm:$0xff]
        %v179 = vld [vmem:[#allocation2 + $0x30] sm:$0xff]
        %v180 = vld [vmem:[#allocation2 + $0x38] sm:$0xff]
        %v181 = vld [vmem:[#allocation2 + $0x40] sm:$0xff]
        %v182 = vld [vmem:[#allocation2 + $0x48] sm:$0xff]
        %v183 = vld [vmem:[#allocation2 + $0x50] sm:$0xff]
        %v184 = vld [vmem:[#allocation2 + $0x58] sm:$0xff]
        %v185 = vld [vmem:[#allocation2 + $0x60] sm:$0xff]
        %v186 = vld [vmem:[#allocation2 + $0x68] sm:$0xff]
        %v187 = vld [vmem:[#allocation2 + $0x70] sm:$0xff]
        %v188 = vld [vmem:[#allocation2 + $0x78] sm:$0xff]
        %v189 = vld [vmem:[#allocation2 + $0x80] sm:$0xff]
        %v190 = vld [vmem:[#allocation2 + $0x88] sm:$0xff]
        %v191 = vld [vmem:[#allocation2 + $0x90] sm:$0xff]
        %v192 = vld [vmem:[#allocation2 + $0x98] sm:$0xff]
        %v193 = vld [vmem:[#allocation2 + $0xa0] sm:$0xff]
        %v194 = vld [vmem:[#allocation2 + $0xa8] sm:$0xff]
        %v195 = vld [vmem:[#allocation2 + $0xb0] sm:$0xff]
        %v196 = vld [vmem:[#allocation2 + $0xb8] sm:$0xff]
        %v197 = vld [vmem:[#allocation2 + $0xc0] sm:$0xff]
        %v198 = vld [vmem:[#allocation2 + $0xc8] sm:$0xff]
        %v199 = vld [vmem:[#allocation2 + $0xd0] sm:$0xff]
        %v200 = vld [vmem:[#allocation2 + $0xd8] sm:$0xff]
        %v201 = vld [vmem:[#allocation2 + $0xe0] sm:$0xff]
        %v202 = vld [vmem:[#allocation2 + $0xe8] sm:$0xff]
        %v203 = vld [vmem:[#allocation2 + $0xf0] sm:$0xff]
        %v204 = vld [vmem:[#allocation2 + $0xf8] sm:$0xff]
        %205 = vmatprep.subr.mxu0 0.0
        %v206 = vand.u32 %v173, 4294901760
        %207 = vmatpush1.xpose.msra.mxu0 %v206
        %208 = vmatprep.subr.mxu0 0.0
        %v209 = vand.u32 %v174, 4294901760
        %210 = vmatpush1.xpose.msra.mxu0 %v209
        %211 = vmatprep.subr.mxu0 0.0
        %v212 = vand.u32 %v175, 4294901760
        %213 = vmatpush1.xpose.msra.mxu0 %v212
        %214 = vmatprep.subr.mxu0 0.0
        %v215 = vand.u32 %v176, 4294901760
        %216 = vmatpush1.xpose.msra.mxu0 %v215
        %217 = vmatprep.subr.mxu0 0.0
        %v218 = vand.u32 %v177, 4294901760
        %219 = vmatpush1.xpose.msra.mxu0 %v218
        %220 = vmatprep.subr.mxu0 0.0
        %v221 = vand.u32 %v178, 4294901760
        %222 = vmatpush1.xpose.msra.mxu0 %v221
        %223 = vmatprep.subr.mxu0 0.0
        %v224 = vand.u32 %v179, 4294901760
        %225 = vmatpush1.xpose.msra.mxu0 %v224
        %226 = vmatprep.subr.mxu0 0.0
        %v227 = vand.u32 %v180, 4294901760
        %228 = vmatpush1.xpose.msra.mxu0 %v227
        %229 = vmatprep.subr.mxu0 0.0
        %v230 = vand.u32 %v181, 4294901760
        %231 = vmatpush1.xpose.msra.mxu0 %v230
        %232 = vmatprep.subr.mxu0 0.0
        %v233 = vand.u32 %v182, 4294901760
        %234 = vmatpush1.xpose.msra.mxu0 %v233
        %235 = vmatprep.subr.mxu0 0.0
        %v236 = vand.u32 %v183, 4294901760
        %237 = vmatpush1.xpose.msra.mxu0 %v236
        %238 = vmatprep.subr.mxu0 0.0
        %v239 = vand.u32 %v184, 4294901760
        %240 = vmatpush1.xpose.msra.mxu0 %v239
        %241 = vmatprep.subr.mxu0 0.0
        %v242 = vand.u32 %v185, 4294901760
        %243 = vmatpush1.xpose.msra.mxu0 %v242
        %244 = vmatprep.subr.mxu0 0.0
        %v245 = vand.u32 %v186, 4294901760
        %246 = vmatpush1.xpose.msra.mxu0 %v245
        %247 = vmatprep.subr.mxu0 0.0
        %v248 = vand.u32 %v187, 4294901760
        %249 = vmatpush1.xpose.msra.mxu0 %v248
        %250 = vmatprep.subr.mxu0 0.0
        %v251 = vand.u32 %v188, 4294901760
        %252 = vmatpush1.xpose.msra.mxu0 %v251
        %253 = vmatprep.subr.mxu0 0.0
        %v254 = vand.u32 %v189, 4294901760
        %255 = vmatpush1.xpose.msra.mxu0 %v254
        %256 = vmatprep.subr.mxu0 0.0
        %v257 = vand.u32 %v190, 4294901760
        %258 = vmatpush1.xpose.msra.mxu0 %v257
        %259 = vmatprep.subr.mxu0 0.0
        %v260 = vand.u32 %v191, 4294901760
        %261 = vmatpush1.xpose.msra.mxu0 %v260
        %262 = vmatprep.subr.mxu0 0.0
        %v263 = vand.u32 %v192, 4294901760
        %264 = vmatpush1.xpose.msra.mxu0 %v263
        %265 = vmatprep.subr.mxu0 0.0
        %v266 = vand.u32 %v193, 4294901760
        %267 = vmatpush1.xpose.msra.mxu0 %v266
        %268 = vmatprep.subr.mxu0 0.0
        %v269 = vand.u32 %v194, 4294901760
        %270 = vmatpush1.xpose.msra.mxu0 %v269
        %271 = vmatprep.subr.mxu0 0.0
        %v272 = vand.u32 %v195, 4294901760
        %273 = vmatpush1.xpose.msra.mxu0 %v272
        %274 = vmatprep.subr.mxu0 0.0
        %v275 = vand.u32 %v196, 4294901760
        %276 = vmatpush1.xpose.msra.mxu0 %v275
        %277 = vmatprep.subr.mxu0 0.0
        %v278 = vand.u32 %v197, 4294901760
        %279 = vmatpush1.xpose.msra.mxu0 %v278
        %280 = vmatprep.subr.mxu0 0.0
        %v281 = vand.u32 %v198, 4294901760
        %282 = vmatpush1.xpose.msra.mxu0 %v281
        %283 = vmatprep.subr.mxu0 0.0
        %v284 = vand.u32 %v199, 4294901760
        %285 = vmatpush1.xpose.msra.mxu0 %v284
        %286 = vmatprep.subr.mxu0 0.0
        %v287 = vand.u32 %v200, 4294901760
        %288 = vmatpush1.xpose.msra.mxu0 %v287
        %289 = vmatprep.subr.mxu0 0.0
        %v290 = vand.u32 %v201, 4294901760
        %291 = vmatpush1.xpose.msra.mxu0 %v290
        %292 = vmatprep.subr.mxu0 0.0
        %v293 = vand.u32 %v202, 4294901760
        %294 = vmatpush1.xpose.msra.mxu0 %v293
        %295 = vmatprep.subr.mxu0 0.0
        %v296 = vand.u32 %v203, 4294901760
        %297 = vmatpush1.xpose.msra.mxu0 %v296
        %298 = vmatprep.subr.mxu0 0.0
        %v299 = vand.u32 %v204, 4294901760
        %300 = vmatpush1.xpose.msra.mxu0 %v299
        %301 = vmatprep.mubr.f32.mxu0 0.0
        %v302 = vand.u32 %v157, 4294901760
        %v303 = vsub.f32 %v157, %v302
        %v304 = vand.u32 %v303, 4294901760
        %v305 = vsub.f32 %v303, %v304
        %v306 = vand.u32 %v305, 4294901760
        %307 = vmatmul.mubr.f32.gmra.mrb[0].mxu0 %v306
        %v308 = vpop.f32.mrb[0].mxu0
        %v309 = vadd.f32 0.0, %v308
        %v310 = vpop.f32.mrb[0].mxu0
        %v311 = vadd.f32 0.0, %v310
        %312 = vmatprep.mubr.f32.mxu0 0.0
        %v313 = vand.u32 %v158, 4294901760
        %v314 = vsub.f32 %v158, %v313
        %v315 = vand.u32 %v314, 4294901760
        %v316 = vsub.f32 %v314, %v315
        %v317 = vand.u32 %v316, 4294901760
        %318 = vmatmul.mubr.f32.gmra.mrb[0].mxu0 %v317
        %v319 = vpop.f32.mrb[0].mxu0
        %v320 = vadd.f32 0.0, %v319
        %v321 = vpop.f32.mrb[0].mxu0
        %v322 = vadd.f32 0.0, %v321
        %323 = vmatprep.mubr.f32.mxu0 0.0
        %v324 = vand.u32 %v159, 4294901760
        %v325 = vsub.f32 %v159, %v324
        %v326 = vand.u32 %v325, 4294901760
        %v327 = vsub.f32 %v325, %v326
        %v328 = vand.u32 %v327, 4294901760
        %329 = vmatmul.mubr.f32.gmra.mrb[0].mxu0 %v328
        %v330 = vpop.f32.mrb[0].mxu0
        %v331 = vadd.f32 0.0, %v330
        %v332 = vpop.f32.mrb[0].mxu0
        %v333 = vadd.f32 0.0, %v332
        %334 = vmatprep.mubr.f32.mxu0 0.0
        %v335 = vand.u32 %v160, 4294901760
        %v336 = vsub.f32 %v160, %v335
        %v337 = vand.u32 %v336, 4294901760
        %v338 = vsub.f32 %v336, %v337
        %v339 = vand.u32 %v338, 4294901760
        %340 = vmatmul.mubr.f32.gmra.mrb[0].mxu0 %v339
        %v341 = vpop.f32.mrb[0].mxu0
        %v342 = vadd.f32 0.0, %v341
        %v343 = vpop.f32.mrb[0].mxu0
        %v344 = vadd.f32 0.0, %v343
        %345 = vmatprep.mubr.f32.mxu0 0.0
        %v346 = vand.u32 %v161, 4294901760
        %v347 = vsub.f32 %v161, %v346
        %v348 = vand.u32 %v347, 4294901760
        %v349 = vsub.f32 %v347, %v348
        %v350 = vand.u32 %v349, 4294901760
        %351 = vmatmul.mubr.f32.gmra.mrb[0].mxu0 %v350
        %v352 = vpop.f32.mrb[0].mxu0
        %v353 = vadd.f32 0.0, %v352
        %v354 = vpop.f32.mrb[0].mxu0
        %v355 = vadd.f32 0.0, %v354
        %356 = vmatprep.mubr.f32.mxu0 0.0
        %v357 = vand.u32 %v162, 4294901760
        %v358 = vsub.f32 %v162, %v357
        %v359 = vand.u32 %v358, 4294901760
        %v360 = vsub.f32 %v358, %v359
        %v361 = vand.u32 %v360, 4294901760
        %362 = vmatmul.mubr.f32.gmra.mrb[0].mxu0 %v361
        %v363 = vpop.f32.mrb[0].mxu0
        %v364 = vadd.f32 0.0, %v363
        %v365 = vpop.f32.mrb[0].mxu0
        %v366 = vadd.f32 0.0, %v365
        %367 = vmatprep.mubr.f32.mxu0 0.0
        %v368 = vand.u32 %v163, 4294901760
        %v369 = vsub.f32 %v163, %v368
        %v370 = vand.u32 %v369, 4294901760
        %v371 = vsub.f32 %v369, %v370
        %v372 = vand.u32 %v371, 4294901760
        %373 = vmatmul.mubr.f32.gmra.mrb[0].mxu0 %v372
        %v374 = vpop.f32.mrb[0].mxu0
        %v375 = vadd.f32 0.0, %v374
        %v376 = vpop.f32.mrb[0].mxu0
        %v377 = vadd.f32 0.0, %v376
        %378 = vmatprep.mubr.f32.mxu0 0.0
        %v379 = vand.u32 %v164, 4294901760
        %v380 = vsub.f32 %v164, %v379
        %v381 = vand.u32 %v380, 4294901760
        %v382 = vsub.f32 %v380, %v381
        %v383 = vand.u32 %v382, 4294901760
        %384 = vmatmul.mubr.f32.gmra.mrb[0].mxu0 %v383
        %v385 = vpop.f32.mrb[0].mxu0
        %v386 = vadd.f32 0.0, %v385
        %v387 = vpop.f32.mrb[0].mxu0
        %v388 = vadd.f32 0.0, %v387
        %389 = vmatprep.mubr.f32.mxu0 0.0
        %v390 = vand.u32 %v165, 4294901760
        %v391 = vsub.f32 %v165, %v390
        %v392 = vand.u32 %v391, 4294901760
        %v393 = vsub.f32 %v391, %v392
        %v394 = vand.u32 %v393, 4294901760
        %395 = vmatmul.mubr.f32.gmra.mrb[0].mxu0 %v394
        %v396 = vpop.f32.mrb[0].mxu0
        %v397 = vadd.f32 0.0, %v396
        %v398 = vpop.f32.mrb[0].mxu0
        %v399 = vadd.f32 0.0, %v398
        %400 = vmatprep.mubr.f32.mxu0 0.0
        %v401 = vand.u32 %v166, 4294901760
        %v402 = vsub.f32 %v166, %v401
        %v403 = vand.u32 %v402, 4294901760
        %v404 = vsub.f32 %v402, %v403
        %v405 = vand.u32 %v404, 4294901760
        %406 = vmatmul.mubr.f32.gmra.mrb[0].mxu0 %v405
        %v407 = vpop.f32.mrb[0].mxu0
        %v408 = vadd.f32 0.0, %v407
        %v409 = vpop.f32.mrb[0].mxu0
        %v410 = vadd.f32 0.0, %v409
        %411 = vmatprep.mubr.f32.mxu0 0.0
        %v412 = vand.u32 %v167, 4294901760
        %v413 = vsub.f32 %v167, %v412
        %v414 = vand.u32 %v413, 4294901760
        %v415 = vsub.f32 %v413, %v414
        %v416 = vand.u32 %v415, 4294901760
        %417 = vmatmul.mubr.f32.gmra.mrb[0].mxu0 %v416
        %v418 = vpop.f32.mrb[0].mxu0
        %v419 = vadd.f32 0.0, %v418
        %v420 = vpop.f32.mrb[0].mxu0
        %v421 = vadd.f32 0.0, %v420
        %422 = vmatprep.mubr.f32.mxu0 0.0
        %v423 = vand.u32 %v168, 4294901760
        %v424 = vsub.f32 %v168, %v423
        %v425 = vand.u32 %v424, 4294901760
        %v426 = vsub.f32 %v424, %v425
        %v427 = vand.u32 %v426, 4294901760
        %428 = vmatmul.mubr.f32.gmra.mrb[0].mxu0 %v427
        %v429 = vpop.f32.mrb[0].mxu0
        %v430 = vadd.f32 0.0, %v429
        %v431 = vpop.f32.mrb[0].mxu0
        %v432 = vadd.f32 0.0, %v431
        %433 = vmatprep.mubr.f32.mxu0 0.0
        %v434 = vand.u32 %v169, 4294901760
        %v435 = vsub.f32 %v169, %v434
        %v436 = vand.u32 %v435, 4294901760
        %v437 = vsub.f32 %v435, %v436
        %v438 = vand.u32 %v437, 4294901760
        %439 = vmatmul.mubr.f32.gmra.mrb[0].mxu0 %v438
        %v440 = vpop.f32.mrb[0].mxu0
        %v441 = vadd.f32 0.0, %v440
        %v442 = vpop.f32.mrb[0].mxu0
        %v443 = vadd.f32 0.0, %v442
        %444 = vmatprep.mubr.f32.mxu0 0.0
        %v445 = vand.u32 %v170, 4294901760
        %v446 = vsub.f32 %v170, %v445
        %v447 = vand.u32 %v446, 4294901760
        %v448 = vsub.f32 %v446, %v447
        %v449 = vand.u32 %v448, 4294901760
        %450 = vmatmul.mubr.f32.gmra.mrb[0].mxu0 %v449
        %v451 = vpop.f32.mrb[0].mxu0
        %v452 = vadd.f32 0.0, %v451
        %v453 = vpop.f32.mrb[0].mxu0
        %v454 = vadd.f32 0.0, %v453
        %455 = vmatprep.mubr.f32.mxu0 0.0
        %v456 = vand.u32 %v171, 4294901760
        %v457 = vsub.f32 %v171, %v456
        %v458 = vand.u32 %v457, 4294901760
        %v459 = vsub.f32 %v457, %v458
        %v460 = vand.u32 %v459, 4294901760
        %461 = vmatmul.mubr.f32.gmra.mrb[0].mxu0 %v460
        %v462 = vpop.f32.mrb[0].mxu0
        %v463 = vadd.f32 0.0, %v462
        %v464 = vpop.f32.mrb[0].mxu0
        %v465 = vadd.f32 0.0, %v464
        %466 = vmatprep.mubr.f32.mxu0 0.0
        %v467 = vand.u32 %v172, 4294901760
        %v468 = vsub.f32 %v172, %v467
        %v469 = vand.u32 %v468, 4294901760
        %v470 = vsub.f32 %v468, %v469
        %v471 = vand.u32 %v470, 4294901760
        %472 = vmatmul.mubr.f32.gmra.mrb[0].mxu0 %v471
        %v473 = vpop.f32.mrb[0].mxu0
        %v474 = vadd.f32 0.0, %v473
        %v475 = vpop.f32.mrb[0].mxu0
        %v476 = vadd.f32 0.0, %v475
        %477 = vdwg.mxu0
        %478 = vmatprep.subr.mxu0 0.0
        %v479 = vand.u32 %v173, 4294901760
        %v480 = vsub.f32 %v173, %v479
        %v481 = vand.u32 %v480, 4294901760
        %v482 = vsub.f32 %v480, %v481
        %v483 = vand.u32 %v482, 4294901760
        %484 = vmatpush1.xpose.msra.mxu0 %v483
        %485 = vmatprep.subr.mxu0 0.0
        %v486 = vand.u32 %v174, 4294901760
        %v487 = vsub.f32 %v174, %v486
        %v488 = vand.u32 %v487, 4294901760
        %v489 = vsub.f32 %v487, %v488
        %v490 = vand.u32 %v489, 4294901760
        %491 = vmatpush1.xpose.msra.mxu0 %v490
        %492 = vmatprep.subr.mxu0 0.0
        %v493 = vand.u32 %v175, 4294901760
        %v494 = vsub.f32 %v175, %v493
        %v495 = vand.u32 %v494, 4294901760
        %v496 = vsub.f32 %v494, %v495
        %v497 = vand.u32 %v496, 4294901760
        %498 = vmatpush1.xpose.msra.mxu0 %v497
        %499 = vmatprep.subr.mxu0 0.0
        %v500 = vand.u32 %v176, 4294901760
        %v501 = vsub.f32 %v176, %v500
        %v502 = vand.u32 %v501, 4294901760
        %v503 = vsub.f32 %v501, %v502
        %v504 = vand.u32 %v503, 4294901760
        %505 = vmatpush1.xpose.msra.mxu0 %v504
        %506 = vmatprep.subr.mxu0 0.0
        %v507 = vand.u32 %v177, 4294901760
        %v508 = vsub.f32 %v177, %v507
        %v509 = vand.u32 %v508, 4294901760
        %v510 = vsub.f32 %v508, %v509
        %v511 = vand.u32 %v510, 4294901760
        %512 = vmatpush1.xpose.msra.mxu0 %v511
        %513 = vmatprep.subr.mxu0 0.0
        %v514 = vand.u32 %v178, 4294901760
        %v515 = vsub.f32 %v178, %v514
        %v516 = vand.u32 %v515, 4294901760
        %v517 = vsub.f32 %v515, %v516
        %v518 = vand.u32 %v517, 4294901760
        %519 = vmatpush1.xpose.msra.mxu0 %v518
        %520 = vmatprep.subr.mxu0 0.0
        %v521 = vand.u32 %v179, 4294901760
        %v522 = vsub.f32 %v179, %v521
        %v523 = vand.u32 %v522, 4294901760
        %v524 = vsub.f32 %v522, %v523
        %v525 = vand.u32 %v524, 4294901760
        %526 = vmatpush1.xpose.msra.mxu0 %v525
        %527 = vmatprep.subr.mxu0 0.0
        %v528 = vand.u32 %v180, 4294901760
        %v529 = vsub.f32 %v180, %v528
        %v530 = vand.u32 %v529, 4294901760
        %v531 = vsub.f32 %v529, %v530
        %v532 = vand.u32 %v531, 4294901760
        %533 = vmatpush1.xpose.msra.mxu0 %v532
        %534 = vmatprep.subr.mxu0 0.0
        %v535 = vand.u32 %v181, 4294901760
        %v536 = vsub.f32 %v181, %v535
        %v537 = vand.u32 %v536, 4294901760
        %v538 = vsub.f32 %v536, %v537
        %v539 = vand.u32 %v538, 4294901760
        %540 = vmatpush1.xpose.msra.mxu0 %v539
        %541 = vmatprep.subr.mxu0 0.0
        %v542 = vand.u32 %v182, 4294901760
        %v543 = vsub.f32 %v182, %v542
        %v544 = vand.u32 %v543, 4294901760
        %v545 = vsub.f32 %v543, %v544
        %v546 = vand.u32 %v545, 4294901760
        %547 = vmatpush1.xpose.msra.mxu0 %v546
        %548 = vmatprep.subr.mxu0 0.0
        %v549 = vand.u32 %v183, 4294901760
        %v550 = vsub.f32 %v183, %v549
        %v551 = vand.u32 %v550, 4294901760
        %v552 = vsub.f32 %v550, %v551
        %v553 = vand.u32 %v552, 4294901760
        %554 = vmatpush1.xpose.msra.mxu0 %v553
        %555 = vmatprep.subr.mxu0 0.0
        %v556 = vand.u32 %v184, 4294901760
        %v557 = vsub.f32 %v184, %v556
        %v558 = vand.u32 %v557, 4294901760
        %v559 = vsub.f32 %v557, %v558
        %v560 = vand.u32 %v559, 4294901760
        %561 = vmatpush1.xpose.msra.mxu0 %v560
        %562 = vmatprep.subr.mxu0 0.0
        %v563 = vand.u32 %v185, 4294901760
        %v564 = vsub.f32 %v185, %v563
        %v565 = vand.u32 %v564, 4294901760
        %v566 = vsub.f32 %v564, %v565
        %v567 = vand.u32 %v566, 4294901760
        %568 = vmatpush1.xpose.msra.mxu0 %v567
        %569 = vmatprep.subr.mxu0 0.0
        %v570 = vand.u32 %v186, 4294901760
        %v571 = vsub.f32 %v186, %v570
        %v572 = vand.u32 %v571, 4294901760
        %v573 = vsub.f32 %v571, %v572
        %v574 = vand.u32 %v573, 4294901760
        %575 = vmatpush1.xpose.msra.mxu0 %v574
        %576 = vmatprep.subr.mxu0 0.0
        %v577 = vand.u32 %v187, 4294901760
        %v578 = vsub.f32 %v187, %v577
        %v579 = vand.u32 %v578, 4294901760
        %v580 = vsub.f32 %v578, %v579
        %v581 = vand.u32 %v580, 4294901760
        %582 = vmatpush1.xpose.msra.mxu0 %v581
        %583 = vmatprep.subr.mxu0 0.0
        %v584 = vand.u32 %v188, 4294901760
        %v585 = vsub.f32 %v188, %v584
        %v586 = vand.u32 %v585, 4294901760
        %v587 = vsub.f32 %v585, %v586
        %v588 = vand.u32 %v587, 4294901760
        %589 = vmatpush1.xpose.msra.mxu0 %v588
        %590 = vmatprep.subr.mxu0 0.0
        %v591 = vand.u32 %v189, 4294901760
        %v592 = vsub.f32 %v189, %v591
        %v593 = vand.u32 %v592, 4294901760
        %v594 = vsub.f32 %v592, %v593
        %v595 = vand.u32 %v594, 4294901760
        %596 = vmatpush1.xpose.msra.mxu0 %v595
        %597 = vmatprep.subr.mxu0 0.0
        %v598 = vand.u32 %v190, 4294901760
        %v599 = vsub.f32 %v190, %v598
        %v600 = vand.u32 %v599, 4294901760
        %v601 = vsub.f32 %v599, %v600
        %v602 = vand.u32 %v601, 4294901760
        %603 = vmatpush1.xpose.msra.mxu0 %v602
        %604 = vmatprep.subr.mxu0 0.0
        %v605 = vand.u32 %v191, 4294901760
        %v606 = vsub.f32 %v191, %v605
        %v607 = vand.u32 %v606, 4294901760
        %v608 = vsub.f32 %v606, %v607
        %v609 = vand.u32 %v608, 4294901760
        %610 = vmatpush1.xpose.msra.mxu0 %v609
        %611 = vmatprep.subr.mxu0 0.0
        %v612 = vand.u32 %v192, 4294901760
        %v613 = vsub.f32 %v192, %v612
        %v614 = vand.u32 %v613, 4294901760
        %v615 = vsub.f32 %v613, %v614
        %v616 = vand.u32 %v615, 4294901760
        %617 = vmatpush1.xpose.msra.mxu0 %v616
        %618 = vmatprep.subr.mxu0 0.0
        %v619 = vand.u32 %v193, 4294901760
        %v620 = vsub.f32 %v193, %v619
        %v621 = vand.u32 %v620, 4294901760
        %v622 = vsub.f32 %v620, %v621
        %v623 = vand.u32 %v622, 4294901760
        %624 = vmatpush1.xpose.msra.mxu0 %v623
        %625 = vmatprep.subr.mxu0 0.0
        %v626 = vand.u32 %v194, 4294901760
        %v627 = vsub.f32 %v194, %v626
        %v628 = vand.u32 %v627, 4294901760
        %v629 = vsub.f32 %v627, %v628
        %v630 = vand.u32 %v629, 4294901760
        %631 = vmatpush1.xpose.msra.mxu0 %v630
        %632 = vmatprep.subr.mxu0 0.0
        %v633 = vand.u32 %v195, 4294901760
        %v634 = vsub.f32 %v195, %v633
        %v635 = vand.u32 %v634, 4294901760
        %v636 = vsub.f32 %v634, %v635
        %v637 = vand.u32 %v636, 4294901760
        %638 = vmatpush1.xpose.msra.mxu0 %v637
        %639 = vmatprep.subr.mxu0 0.0
        %v640 = vand.u32 %v196, 4294901760
        %v641 = vsub.f32 %v196, %v640
        %v642 = vand.u32 %v641, 4294901760
        %v643 = vsub.f32 %v641, %v642
        %v644 = vand.u32 %v643, 4294901760
        %645 = vmatpush1.xpose.msra.mxu0 %v644
        %646 = vmatprep.subr.mxu0 0.0
        %v647 = vand.u32 %v197, 4294901760
        %v648 = vsub.f32 %v197, %v647
        %v649 = vand.u32 %v648, 4294901760
        %v650 = vsub.f32 %v648, %v649
        %v651 = vand.u32 %v650, 4294901760
        %652 = vmatpush1.xpose.msra.mxu0 %v651
        %653 = vmatprep.subr.mxu0 0.0
        %v654 = vand.u32 %v198, 4294901760
        %v655 = vsub.f32 %v198, %v654
        %v656 = vand.u32 %v655, 4294901760
        %v657 = vsub.f32 %v655, %v656
        %v658 = vand.u32 %v657, 4294901760
        %659 = vmatpush1.xpose.msra.mxu0 %v658
        %660 = vmatprep.subr.mxu0 0.0
        %v661 = vand.u32 %v199, 4294901760
        %v662 = vsub.f32 %v199, %v661
        %v663 = vand.u32 %v662, 4294901760
        %v664 = vsub.f32 %v662, %v663
        %v665 = vand.u32 %v664, 4294901760
        %666 = vmatpush1.xpose.msra.mxu0 %v665
        %667 = vmatprep.subr.mxu0 0.0
        %v668 = vand.u32 %v200, 4294901760
        %v669 = vsub.f32 %v200, %v668
        %v670 = vand.u32 %v669, 4294901760
        %v671 = vsub.f32 %v669, %v670
        %v672 = vand.u32 %v671, 4294901760
        %673 = vmatpush1.xpose.msra.mxu0 %v672
        %674 = vmatprep.subr.mxu0 0.0
        %v675 = vand.u32 %v201, 4294901760
        %v676 = vsub.f32 %v201, %v675
        %v677 = vand.u32 %v676, 4294901760
        %v678 = vsub.f32 %v676, %v677
        %v679 = vand.u32 %v678, 4294901760
        %680 = vmatpush1.xpose.msra.mxu0 %v679
        %681 = vmatprep.subr.mxu0 0.0
        %v682 = vand.u32 %v202, 4294901760
        %v683 = vsub.f32 %v202, %v682
        %v684 = vand.u32 %v683, 4294901760
        %v685 = vsub.f32 %v683, %v684
        %v686 = vand.u32 %v685, 4294901760
        %687 = vmatpush1.xpose.msra.mxu0 %v686
        %688 = vmatprep.subr.mxu0 0.0
        %v689 = vand.u32 %v203, 4294901760
        %v690 = vsub.f32 %v203, %v689
        %v691 = vand.u32 %v690, 4294901760
        %v692 = vsub.f32 %v690, %v691
        %v693 = vand.u32 %v692, 4294901760
        %694 = vmatpush1.xpose.msra.mxu0 %v693
        %695 = vmatprep.subr.mxu0 0.0
        %v696 = vand.u32 %v204, 4294901760
        %v697 = vsub.f32 %v204, %v696
        %v698 = vand.u32 %v697, 4294901760
        %v699 = vsub.f32 %v697, %v698
        %v700 = vand.u32 %v699, 4294901760
        %701 = vmatpush1.xpose.msra.mxu0 %v700
        %702 = vmatprep.mubr.f32.mxu0 0.0
        %v703 = vand.u32 %v157, 4294901760
        %704 = vmatmul.mubr.f32.gmra.mrb[0].mxu0 %v703
        %v705 = vpop.f32.mrb[0].mxu0
        %v706 = vadd.f32 %v309, %v705
        %v707 = vpop.f32.mrb[0].mxu0
        %v708 = vadd.f32 %v311, %v707
        %709 = vmatprep.mubr.f32.mxu0 0.0
        %v710 = vand.u32 %v158, 4294901760
        %711 = vmatmul.mubr.f32.gmra.mrb[0].mxu0 %v710
        %v712 = vpop.f32.mrb[0].mxu0
        %v713 = vadd.f32 %v320, %v712
        %v714 = vpop.f32.mrb[0].mxu0
        %v715 = vadd.f32 %v322, %v714
        %716 = vmatprep.mubr.f32.mxu0 0.0
        %v717 = vand.u32 %v159, 4294901760
        %718 = vmatmul.mubr.f32.gmra.mrb[0].mxu0 %v717
        %v719 = vpop.f32.mrb[0].mxu0
        %v720 = vadd.f32 %v331, %v719
        %v721 = vpop.f32.mrb[0].mxu0
        %v722 = vadd.f32 %v333, %v721
        %723 = vmatprep.mubr.f32.mxu0 0.0
        %v724 = vand.u32 %v160, 4294901760
        %725 = vmatmul.mubr.f32.gmra.mrb[0].mxu0 %v724
        %v726 = vpop.f32.mrb[0].mxu0
        %v727 = vadd.f32 %v342, %v726
        %v728 = vpop.f32.mrb[0].mxu0
        %v729 = vadd.f32 %v344, %v728
        %730 = vmatprep.mubr.f32.mxu0 0.0
        %v731 = vand.u32 %v161, 4294901760
        %732 = vmatmul.mubr.f32.gmra.mrb[0].mxu0 %v731
        %v733 = vpop.f32.mrb[0].mxu0
        %v734 = vadd.f32 %v353, %v733
        %v735 = vpop.f32.mrb[0].mxu0
        %v736 = vadd.f32 %v355, %v735
        %737 = vmatprep.mubr.f32.mxu0 0.0
        %v738 = vand.u32 %v162, 4294901760
        %739 = vmatmul.mubr.f32.gmra.mrb[0].mxu0 %v738
        %v740 = vpop.f32.mrb[0].mxu0
        %v741 = vadd.f32 %v364, %v740
        %v742 = vpop.f32.mrb[0].mxu0
        %v743 = vadd.f32 %v366, %v742
        %744 = vmatprep.mubr.f32.mxu0 0.0
        %v745 = vand.u32 %v163, 4294901760
        %746 = vmatmul.mubr.f32.gmra.mrb[0].mxu0 %v745
        %v747 = vpop.f32.mrb[0].mxu0
        %v748 = vadd.f32 %v375, %v747
        %v749 = vpop.f32.mrb[0].mxu0
        %v750 = vadd.f32 %v377, %v749
        %751 = vmatprep.mubr.f32.mxu0 0.0
        %v752 = vand.u32 %v164, 4294901760
        %753 = vmatmul.mubr.f32.gmra.mrb[0].mxu0 %v752
        %v754 = vpop.f32.mrb[0].mxu0
        %v755 = vadd.f32 %v386, %v754
        %v756 = vpop.f32.mrb[0].mxu0
        %v757 = vadd.f32 %v388, %v756
        %758 = vmatprep.mubr.f32.mxu0 0.0
        %v759 = vand.u32 %v165, 4294901760
        %760 = vmatmul.mubr.f32.gmra.mrb[0].mxu0 %v759
        %v761 = vpop.f32.mrb[0].mxu0
        %v762 = vadd.f32 %v397, %v761
        %v763 = vpop.f32.mrb[0].mxu0
        %v764 = vadd.f32 %v399, %v763
        %765 = vmatprep.mubr.f32.mxu0 0.0
        %v766 = vand.u32 %v166, 4294901760
        %767 = vmatmul.mubr.f32.gmra.mrb[0].mxu0 %v766
        %v768 = vpop.f32.mrb[0].mxu0
        %v769 = vadd.f32 %v408, %v768
        %v770 = vpop.f32.mrb[0].mxu0
        %v771 = vadd.f32 %v410, %v770
        %772 = vmatprep.mubr.f32.mxu0 0.0
        %v773 = vand.u32 %v167, 4294901760
        %774 = vmatmul.mubr.f32.gmra.mrb[0].mxu0 %v773
        %v775 = vpop.f32.mrb[0].mxu0
        %v776 = vadd.f32 %v419, %v775
        %v777 = vpop.f32.mrb[0].mxu0
        %v778 = vadd.f32 %v421, %v777
        %779 = vmatprep.mubr.f32.mxu0 0.0
        %v780 = vand.u32 %v168, 4294901760
        %781 = vmatmul.mubr.f32.gmra.mrb[0].mxu0 %v780
        %v782 = vpop.f32.mrb[0].mxu0
        %v783 = vadd.f32 %v430, %v782
        %v784 = vpop.f32.mrb[0].mxu0
        %v785 = vadd.f32 %v432, %v784
        %786 = vmatprep.mubr.f32.mxu0 0.0
        %v787 = vand.u32 %v169, 4294901760
        %788 = vmatmul.mubr.f32.gmra.mrb[0].mxu0 %v787
        %v789 = vpop.f32.mrb[0].mxu0
        %v790 = vadd.f32 %v441, %v789
        %v791 = vpop.f32.mrb[0].mxu0
        %v792 = vadd.f32 %v443, %v791
        %793 = vmatprep.mubr.f32.mxu0 0.0
        %v794 = vand.u32 %v170, 4294901760
        %795 = vmatmul.mubr.f32.gmra.mrb[0].mxu0 %v794
        %v796 = vpop.f32.mrb[0].mxu0
        %v797 = vadd.f32 %v452, %v796
        %v798 = vpop.f32.mrb[0].mxu0
        %v799 = vadd.f32 %v454, %v798
        %800 = vmatprep.mubr.f32.mxu0 0.0
        %v801 = vand.u32 %v171, 4294901760
        %802 = vmatmul.mubr.f32.gmra.mrb[0].mxu0 %v801
        %v803 = vpop.f32.mrb[0].mxu0
        %v804 = vadd.f32 %v463, %v803
        %v805 = vpop.f32.mrb[0].mxu0
        %v806 = vadd.f32 %v465, %v805
        %807 = vmatprep.mubr.f32.mxu0 0.0
        %v808 = vand.u32 %v172, 4294901760
        %809 = vmatmul.mubr.f32.gmra.mrb[0].mxu0 %v808
        %v810 = vpop.f32.mrb[0].mxu0
        %v811 = vadd.f32 %v474, %v810
        %v812 = vpop.f32.mrb[0].mxu0
        %v813 = vadd.f32 %v476, %v812
        %814 = vdwg.mxu0
        %815 = vmatprep.subr.mxu0 0.0
        %v816 = vand.u32 %v173, 4294901760
        %v817 = vsub.f32 %v173, %v816
        %818 = vmatpush1.xpose.msra.mxu0 %v817
        %819 = vmatprep.subr.mxu0 0.0
        %v820 = vand.u32 %v174, 4294901760
        %v821 = vsub.f32 %v174, %v820
        %822 = vmatpush1.xpose.msra.mxu0 %v821
        %823 = vmatprep.subr.mxu0 0.0
        %v824 = vand.u32 %v175, 4294901760
        %v825 = vsub.f32 %v175, %v824
        %826 = vmatpush1.xpose.msra.mxu0 %v825
        %827 = vmatprep.subr.mxu0 0.0
        %v828 = vand.u32 %v176, 4294901760
        %v829 = vsub.f32 %v176, %v828
        %830 = vmatpush1.xpose.msra.mxu0 %v829
        %831 = vmatprep.subr.mxu0 0.0
        %v832 = vand.u32 %v177, 4294901760
        %v833 = vsub.f32 %v177, %v832
        %834 = vmatpush1.xpose.msra.mxu0 %v833
        %835 = vmatprep.subr.mxu0 0.0
        %v836 = vand.u32 %v178, 4294901760
        %v837 = vsub.f32 %v178, %v836
        %838 = vmatpush1.xpose.msra.mxu0 %v837
        %839 = vmatprep.subr.mxu0 0.0
        %v840 = vand.u32 %v179, 4294901760
        %v841 = vsub.f32 %v179, %v840
        %842 = vmatpush1.xpose.msra.mxu0 %v841
        %843 = vmatprep.subr.mxu0 0.0
        %v844 = vand.u32 %v180, 4294901760
        %v845 = vsub.f32 %v180, %v844
        %846 = vmatpush1.xpose.msra.mxu0 %v845
        %847 = vmatprep.subr.mxu0 0.0
        %v848 = vand.u32 %v181, 4294901760
        %v849 = vsub.f32 %v181, %v848
        %850 = vmatpush1.xpose.msra.mxu0 %v849
        %851 = vmatprep.subr.mxu0 0.0
        %v852 = vand.u32 %v182, 4294901760
        %v853 = vsub.f32 %v182, %v852
        %854 = vmatpush1.xpose.msra.mxu0 %v853
        %855 = vmatprep.subr.mxu0 0.0
        %v856 = vand.u32 %v183, 4294901760
        %v857 = vsub.f32 %v183, %v856
        %858 = vmatpush1.xpose.msra.mxu0 %v857
        %859 = vmatprep.subr.mxu0 0.0
        %v860 = vand.u32 %v184, 4294901760
        %v861 = vsub.f32 %v184, %v860
        %862 = vmatpush1.xpose.msra.mxu0 %v861
        %863 = vmatprep.subr.mxu0 0.0
        %v864 = vand.u32 %v185, 4294901760
        %v865 = vsub.f32 %v185, %v864
        %866 = vmatpush1.xpose.msra.mxu0 %v865
        %867 = vmatprep.subr.mxu0 0.0
        %v868 = vand.u32 %v186, 4294901760
        %v869 = vsub.f32 %v186, %v868
        %870 = vmatpush1.xpose.msra.mxu0 %v869
        %871 = vmatprep.subr.mxu0 0.0
        %v872 = vand.u32 %v187, 4294901760
        %v873 = vsub.f32 %v187, %v872
        %874 = vmatpush1.xpose.msra.mxu0 %v873
        %875 = vmatprep.subr.mxu0 0.0
        %v876 = vand.u32 %v188, 4294901760
        %v877 = vsub.f32 %v188, %v876
        %878 = vmatpush1.xpose.msra.mxu0 %v877
        %879 = vmatprep.subr.mxu0 0.0
        %v880 = vand.u32 %v189, 4294901760
        %v881 = vsub.f32 %v189, %v880
        %882 = vmatpush1.xpose.msra.mxu0 %v881
        %883 = vmatprep.subr.mxu0 0.0
        %v884 = vand.u32 %v190, 4294901760
        %v885 = vsub.f32 %v190, %v884
        %886 = vmatpush1.xpose.msra.mxu0 %v885
        %887 = vmatprep.subr.mxu0 0.0
        %v888 = vand.u32 %v191, 4294901760
        %v889 = vsub.f32 %v191, %v888
        %890 = vmatpush1.xpose.msra.mxu0 %v889
        %891 = vmatprep.subr.mxu0 0.0
        %v892 = vand.u32 %v192, 4294901760
        %v893 = vsub.f32 %v192, %v892
        %894 = vmatpush1.xpose.msra.mxu0 %v893
        %895 = vmatprep.subr.mxu0 0.0
        %v896 = vand.u32 %v193, 4294901760
        %v897 = vsub.f32 %v193, %v896
        %898 = vmatpush1.xpose.msra.mxu0 %v897
        %899 = vmatprep.subr.mxu0 0.0
        %v900 = vand.u32 %v194, 4294901760
        %v901 = vsub.f32 %v194, %v900
        %902 = vmatpush1.xpose.msra.mxu0 %v901
        %903 = vmatprep.subr.mxu0 0.0
        %v904 = vand.u32 %v195, 4294901760
        %v905 = vsub.f32 %v195, %v904
        %906 = vmatpush1.xpose.msra.mxu0 %v905
        %907 = vmatprep.subr.mxu0 0.0
        %v908 = vand.u32 %v196, 4294901760
        %v909 = vsub.f32 %v196, %v908
        %910 = vmatpush1.xpose.msra.mxu0 %v909
        %911 = vmatprep.subr.mxu0 0.0
        %v912 = vand.u32 %v197, 4294901760
        %v913 = vsub.f32 %v197, %v912
        %914 = vmatpush1.xpose.msra.mxu0 %v913
        %915 = vmatprep.subr.mxu0 0.0
        %v916 = vand.u32 %v198, 4294901760
        %v917 = vsub.f32 %v198, %v916
        %918 = vmatpush1.xpose.msra.mxu0 %v917
        %919 = vmatprep.subr.mxu0 0.0
        %v920 = vand.u32 %v199, 4294901760
        %v921 = vsub.f32 %v199, %v920
        %922 = vmatpush1.xpose.msra.mxu0 %v921
        %923 = vmatprep.subr.mxu0 0.0
        %v924 = vand.u32 %v200, 4294901760
        %v925 = vsub.f32 %v200, %v924
        %926 = vmatpush1.xpose.msra.mxu0 %v925
        %927 = vmatprep.subr.mxu0 0.0
        %v928 = vand.u32 %v201, 4294901760
        %v929 = vsub.f32 %v201, %v928
        %930 = vmatpush1.xpose.msra.mxu0 %v929
        %931 = vmatprep.subr.mxu0 0.0
        %v932 = vand.u32 %v202, 4294901760
        %v933 = vsub.f32 %v202, %v932
        %934 = vmatpush1.xpose.msra.mxu0 %v933
        %935 = vmatprep.subr.mxu0 0.0
        %v936 = vand.u32 %v203, 4294901760
        %v937 = vsub.f32 %v203, %v936
        %938 = vmatpush1.xpose.msra.mxu0 %v937
        %939 = vmatprep.subr.mxu0 0.0
        %v940 = vand.u32 %v204, 4294901760
        %v941 = vsub.f32 %v204, %v940
        %942 = vmatpush1.xpose.msra.mxu0 %v941
        %943 = vmatprep.mubr.f32.mxu0 0.0
        %v944 = vand.u32 %v157, 4294901760
        %v945 = vsub.f32 %v157, %v944
        %946 = vmatmul.mubr.f32.gmra.mrb[0].mxu0 %v945
        %v947 = vpop.f32.mrb[0].mxu0
        %v948 = vadd.f32 %v706, %v947
        %v949 = vpop.f32.mrb[0].mxu0
        %v950 = vadd.f32 %v708, %v949
        %951 = vmatprep.mubr.f32.mxu0 0.0
        %v952 = vand.u32 %v158, 4294901760
        %v953 = vsub.f32 %v158, %v952
        %954 = vmatmul.mubr.f32.gmra.mrb[0].mxu0 %v953
        %v955 = vpop.f32.mrb[0].mxu0
        %v956 = vadd.f32 %v713, %v955
        %v957 = vpop.f32.mrb[0].mxu0
        %v958 = vadd.f32 %v715, %v957
        %959 = vmatprep.mubr.f32.mxu0 0.0
        %v960 = vand.u32 %v159, 4294901760
        %v961 = vsub.f32 %v159, %v960
        %962 = vmatmul.mubr.f32.gmra.mrb[0].mxu0 %v961
        %v963 = vpop.f32.mrb[0].mxu0
        %v964 = vadd.f32 %v720, %v963
        %v965 = vpop.f32.mrb[0].mxu0
        %v966 = vadd.f32 %v722, %v965
        %967 = vmatprep.mubr.f32.mxu0 0.0
        %v968 = vand.u32 %v160, 4294901760
        %v969 = vsub.f32 %v160, %v968
        %970 = vmatmul.mubr.f32.gmra.mrb[0].mxu0 %v969
        %v971 = vpop.f32.mrb[0].mxu0
        %v972 = vadd.f32 %v727, %v971
        %v973 = vpop.f32.mrb[0].mxu0
        %v974 = vadd.f32 %v729, %v973
        %975 = vmatprep.mubr.f32.mxu0 0.0
        %v976 = vand.u32 %v161, 4294901760
        %v977 = vsub.f32 %v161, %v976
        %978 = vmatmul.mubr.f32.gmra.mrb[0].mxu0 %v977
        %v979 = vpop.f32.mrb[0].mxu0
        %v980 = vadd.f32 %v734, %v979
        %v981 = vpop.f32.mrb[0].mxu0
        %v982 = vadd.f32 %v736, %v981
        %983 = vmatprep.mubr.f32.mxu0 0.0
        %v984 = vand.u32 %v162, 4294901760
        %v985 = vsub.f32 %v162, %v984
        %986 = vmatmul.mubr.f32.gmra.mrb[0].mxu0 %v985
        %v987 = vpop.f32.mrb[0].mxu0
        %v988 = vadd.f32 %v741, %v987
        %v989 = vpop.f32.mrb[0].mxu0
        %v990 = vadd.f32 %v743, %v989
        %991 = vmatprep.mubr.f32.mxu0 0.0
        %v992 = vand.u32 %v163, 4294901760
        %v993 = vsub.f32 %v163, %v992
        %994 = vmatmul.mubr.f32.gmra.mrb[0].mxu0 %v993
        %v995 = vpop.f32.mrb[0].mxu0
        %v996 = vadd.f32 %v748, %v995
        %v997 = vpop.f32.mrb[0].mxu0
        %v998 = vadd.f32 %v750, %v997
        %999 = vmatprep.mubr.f32.mxu0 0.0
        %v1000 = vand.u32 %v164, 4294901760
        %v1001 = vsub.f32 %v164, %v1000
        %1002 = vmatmul.mubr.f32.gmra.mrb[0].mxu0 %v1001
        %v1003 = vpop.f32.mrb[0].mxu0
        %v1004 = vadd.f32 %v755, %v1003
        %v1005 = vpop.f32.mrb[0].mxu0
        %v1006 = vadd.f32 %v757, %v1005
        %1007 = vmatprep.mubr.f32.mxu0 0.0
        %v1008 = vand.u32 %v165, 4294901760
        %v1009 = vsub.f32 %v165, %v1008
        %1010 = vmatmul.mubr.f32.gmra.mrb[0].mxu0 %v1009
        %v1011 = vpop.f32.mrb[0].mxu0
        %v1012 = vadd.f32 %v762, %v1011
        %v1013 = vpop.f32.mrb[0].mxu0
        %v1014 = vadd.f32 %v764, %v1013
        %1015 = vmatprep.mubr.f32.mxu0 0.0
        %v1016 = vand.u32 %v166, 4294901760
        %v1017 = vsub.f32 %v166, %v1016
        %1018 = vmatmul.mubr.f32.gmra.mrb[0].mxu0 %v1017
        %v1019 = vpop.f32.mrb[0].mxu0
        %v1020 = vadd.f32 %v769, %v1019
        %v1021 = vpop.f32.mrb[0].mxu0
        %v1022 = vadd.f32 %v771, %v1021
        %1023 = vmatprep.mubr.f32.mxu0 0.0
        %v1024 = vand.u32 %v167, 4294901760
        %v1025 = vsub.f32 %v167, %v1024
        %1026 = vmatmul.mubr.f32.gmra.mrb[0].mxu0 %v1025
        %v1027 = vpop.f32.mrb[0].mxu0
        %v1028 = vadd.f32 %v776, %v1027
        %v1029 = vpop.f32.mrb[0].mxu0
        %v1030 = vadd.f32 %v778, %v1029
        %1031 = vmatprep.mubr.f32.mxu0 0.0
        %v1032 = vand.u32 %v168, 4294901760
        %v1033 = vsub.f32 %v168, %v1032
        %1034 = vmatmul.mubr.f32.gmra.mrb[0].mxu0 %v1033
        %v1035 = vpop.f32.mrb[0].mxu0
        %v1036 = vadd.f32 %v783, %v1035
        %v1037 = vpop.f32.mrb[0].mxu0
        %v1038 = vadd.f32 %v785, %v1037
        %1039 = vmatprep.mubr.f32.mxu0 0.0
        %v1040 = vand.u32 %v169, 4294901760
        %v1041 = vsub.f32 %v169, %v1040
        %1042 = vmatmul.mubr.f32.gmra.mrb[0].mxu0 %v1041
        %v1043 = vpop.f32.mrb[0].mxu0
        %v1044 = vadd.f32 %v790, %v1043
        %v1045 = vpop.f32.mrb[0].mxu0
        %v1046 = vadd.f32 %v792, %v1045
        %1047 = vmatprep.mubr.f32.mxu0 0.0
        %v1048 = vand.u32 %v170, 4294901760
        %v1049 = vsub.f32 %v170, %v1048
        %1050 = vmatmul.mubr.f32.gmra.mrb[0].mxu0 %v1049
        %v1051 = vpop.f32.mrb[0].mxu0
        %v1052 = vadd.f32 %v797, %v1051
        %v1053 = vpop.f32.mrb[0].mxu0
        %v1054 = vadd.f32 %v799, %v1053
        %1055 = vmatprep.mubr.f32.mxu0 0.0
        %v1056 = vand.u32 %v171, 4294901760
        %v1057 = vsub.f32 %v171, %v1056
        %1058 = vmatmul.mubr.f32.gmra.mrb[0].mxu0 %v1057
        %v1059 = vpop.f32.mrb[0].mxu0
        %v1060 = vadd.f32 %v804, %v1059
        %v1061 = vpop.f32.mrb[0].mxu0
        %v1062 = vadd.f32 %v806, %v1061
        %1063 = vmatprep.mubr.f32.mxu0 0.0
        %v1064 = vand.u32 %v172, 4294901760
        %v1065 = vsub.f32 %v172, %v1064
        %1066 = vmatmul.mubr.f32.gmra.mrb[0].mxu0 %v1065
        %v1067 = vpop.f32.mrb[0].mxu0
        %v1068 = vadd.f32 %v811, %v1067
        %v1069 = vpop.f32.mrb[0].mxu0
        %v1070 = vadd.f32 %v813, %v1069
        %1071 = vdwg.mxu0
        %1072 = vmatprep.subr.mxu0 0.0
        %v1073 = vand.u32 %v173, 4294901760
        %1074 = vmatpush1.xpose.msra.mxu0 %v1073
        %1075 = vmatprep.subr.mxu0 0.0
        %v1076 = vand.u32 %v174, 4294901760
        %1077 = vmatpush1.xpose.msra.mxu0 %v1076
        %1078 = vmatprep.subr.mxu0 0.0
        %v1079 = vand.u32 %v175, 4294901760
        %1080 = vmatpush1.xpose.msra.mxu0 %v1079
        %1081 = vmatprep.subr.mxu0 0.0
        %v1082 = vand.u32 %v176, 4294901760
        %1083 = vmatpush1.xpose.msra.mxu0 %v1082
        %1084 = vmatprep.subr.mxu0 0.0
        %v1085 = vand.u32 %v177, 4294901760
        %1086 = vmatpush1.xpose.msra.mxu0 %v1085
        %1087 = vmatprep.subr.mxu0 0.0
        %v1088 = vand.u32 %v178, 4294901760
        %1089 = vmatpush1.xpose.msra.mxu0 %v1088
        %1090 = vmatprep.subr.mxu0 0.0
        %v1091 = vand.u32 %v179, 4294901760
        %1092 = vmatpush1.xpose.msra.mxu0 %v1091
        %1093 = vmatprep.subr.mxu0 0.0
        %v1094 = vand.u32 %v180, 4294901760
        %1095 = vmatpush1.xpose.msra.mxu0 %v1094
        %1096 = vmatprep.subr.mxu0 0.0
        %v1097 = vand.u32 %v181, 4294901760
        %1098 = vmatpush1.xpose.msra.mxu0 %v1097
        %1099 = vmatprep.subr.mxu0 0.0
        %v1100 = vand.u32 %v182, 4294901760
        %1101 = vmatpush1.xpose.msra.mxu0 %v1100
        %1102 = vmatprep.subr.mxu0 0.0
        %v1103 = vand.u32 %v183, 4294901760
        %1104 = vmatpush1.xpose.msra.mxu0 %v1103
        %1105 = vmatprep.subr.mxu0 0.0
        %v1106 = vand.u32 %v184, 4294901760
        %1107 = vmatpush1.xpose.msra.mxu0 %v1106
        %1108 = vmatprep.subr.mxu0 0.0
        %v1109 = vand.u32 %v185, 4294901760
        %1110 = vmatpush1.xpose.msra.mxu0 %v1109
        %1111 = vmatprep.subr.mxu0 0.0
        %v1112 = vand.u32 %v186, 4294901760
        %1113 = vmatpush1.xpose.msra.mxu0 %v1112
        %1114 = vmatprep.subr.mxu0 0.0
        %v1115 = vand.u32 %v187, 4294901760
        %1116 = vmatpush1.xpose.msra.mxu0 %v1115
        %1117 = vmatprep.subr.mxu0 0.0
        %v1118 = vand.u32 %v188, 4294901760
        %1119 = vmatpush1.xpose.msra.mxu0 %v1118
        %1120 = vmatprep.subr.mxu0 0.0
        %v1121 = vand.u32 %v189, 4294901760
        %1122 = vmatpush1.xpose.msra.mxu0 %v1121
        %1123 = vmatprep.subr.mxu0 0.0
        %v1124 = vand.u32 %v190, 4294901760
        %1125 = vmatpush1.xpose.msra.mxu0 %v1124
        %1126 = vmatprep.subr.mxu0 0.0
        %v1127 = vand.u32 %v191, 4294901760
        %1128 = vmatpush1.xpose.msra.mxu0 %v1127
        %1129 = vmatprep.subr.mxu0 0.0
        %v1130 = vand.u32 %v192, 4294901760
        %1131 = vmatpush1.xpose.msra.mxu0 %v1130
        %1132 = vmatprep.subr.mxu0 0.0
        %v1133 = vand.u32 %v193, 4294901760
        %1134 = vmatpush1.xpose.msra.mxu0 %v1133
        %1135 = vmatprep.subr.mxu0 0.0
        %v1136 = vand.u32 %v194, 4294901760
        %1137 = vmatpush1.xpose.msra.mxu0 %v1136
        %1138 = vmatprep.subr.mxu0 0.0
        %v1139 = vand.u32 %v195, 4294901760
        %1140 = vmatpush1.xpose.msra.mxu0 %v1139
        %1141 = vmatprep.subr.mxu0 0.0
        %v1142 = vand.u32 %v196, 4294901760
        %1143 = vmatpush1.xpose.msra.mxu0 %v1142
        %1144 = vmatprep.subr.mxu0 0.0
        %v1145 = vand.u32 %v197, 4294901760
        %1146 = vmatpush1.xpose.msra.mxu0 %v1145
        %1147 = vmatprep.subr.mxu0 0.0
        %v1148 = vand.u32 %v198, 4294901760
        %1149 = vmatpush1.xpose.msra.mxu0 %v1148
        %1150 = vmatprep.subr.mxu0 0.0
        %v1151 = vand.u32 %v199, 4294901760
        %1152 = vmatpush1.xpose.msra.mxu0 %v1151
        %1153 = vmatprep.subr.mxu0 0.0
        %v1154 = vand.u32 %v200, 4294901760
        %1155 = vmatpush1.xpose.msra.mxu0 %v1154
        %1156 = vmatprep.subr.mxu0 0.0
        %v1157 = vand.u32 %v201, 4294901760
        %1158 = vmatpush1.xpose.msra.mxu0 %v1157
        %1159 = vmatprep.subr.mxu0 0.0
        %v1160 = vand.u32 %v202, 4294901760
        %1161 = vmatpush1.xpose.msra.mxu0 %v1160
        %1162 = vmatprep.subr.mxu0 0.0
        %v1163 = vand.u32 %v203, 4294901760
        %1164 = vmatpush1.xpose.msra.mxu0 %v1163
        %1165 = vmatprep.subr.mxu0 0.0
        %v1166 = vand.u32 %v204, 4294901760
        %1167 = vmatpush1.xpose.msra.mxu0 %v1166
        %1168 = vmatprep.mubr.f32.mxu0 0.0
        %v1169 = vand.u32 %v157, 4294901760
        %v1170 = vsub.f32 %v157, %v1169
        %v1171 = vand.u32 %v1170, 4294901760
        %1172 = vmatmul.mubr.f32.gmra.mrb[0].mxu0 %v1171
        %v1173 = vpop.f32.mrb[0].mxu0
        %v1174 = vadd.f32 %v948, %v1173
        %v1175 = vpop.f32.mrb[0].mxu0
        %v1176 = vadd.f32 %v950, %v1175
        %1177 = vmatprep.mubr.f32.mxu0 0.0
        %v1178 = vand.u32 %v158, 4294901760
        %v1179 = vsub.f32 %v158, %v1178
        %v1180 = vand.u32 %v1179, 4294901760
        %1181 = vmatmul.mubr.f32.gmra.mrb[0].mxu0 %v1180
        %v1182 = vpop.f32.mrb[0].mxu0
        %v1183 = vadd.f32 %v956, %v1182
        %v1184 = vpop.f32.mrb[0].mxu0
        %v1185 = vadd.f32 %v958, %v1184
        %1186 = vmatprep.mubr.f32.mxu0 0.0
        %v1187 = vand.u32 %v159, 4294901760
        %v1188 = vsub.f32 %v159, %v1187
        %v1189 = vand.u32 %v1188, 4294901760
        %1190 = vmatmul.mubr.f32.gmra.mrb[0].mxu0 %v1189
        %v1191 = vpop.f32.mrb[0].mxu0
        %v1192 = vadd.f32 %v964, %v1191
        %v1193 = vpop.f32.mrb[0].mxu0
        %v1194 = vadd.f32 %v966, %v1193
        %1195 = vmatprep.mubr.f32.mxu0 0.0
        %v1196 = vand.u32 %v160, 4294901760
        %v1197 = vsub.f32 %v160, %v1196
        %v1198 = vand.u32 %v1197, 4294901760
        %1199 = vmatmul.mubr.f32.gmra.mrb[0].mxu0 %v1198
        %v1200 = vpop.f32.mrb[0].mxu0
        %v1201 = vadd.f32 %v972, %v1200
        %v1202 = vpop.f32.mrb[0].mxu0
        %v1203 = vadd.f32 %v974, %v1202
        %1204 = vmatprep.mubr.f32.mxu0 0.0
        %v1205 = vand.u32 %v161, 4294901760
        %v1206 = vsub.f32 %v161, %v1205
        %v1207 = vand.u32 %v1206, 4294901760
        %1208 = vmatmul.mubr.f32.gmra.mrb[0].mxu0 %v1207
        %v1209 = vpop.f32.mrb[0].mxu0
        %v1210 = vadd.f32 %v980, %v1209
        %v1211 = vpop.f32.mrb[0].mxu0
        %v1212 = vadd.f32 %v982, %v1211
        %1213 = vmatprep.mubr.f32.mxu0 0.0
        %v1214 = vand.u32 %v162, 4294901760
        %v1215 = vsub.f32 %v162, %v1214
        %v1216 = vand.u32 %v1215, 4294901760
        %1217 = vmatmul.mubr.f32.gmra.mrb[0].mxu0 %v1216
        %v1218 = vpop.f32.mrb[0].mxu0
        %v1219 = vadd.f32 %v988, %v1218
        %v1220 = vpop.f32.mrb[0].mxu0
        %v1221 = vadd.f32 %v990, %v1220
        %1222 = vmatprep.mubr.f32.mxu0 0.0
        %v1223 = vand.u32 %v163, 4294901760
        %v1224 = vsub.f32 %v163, %v1223
        %v1225 = vand.u32 %v1224, 4294901760
        %1226 = vmatmul.mubr.f32.gmra.mrb[0].mxu0 %v1225
        %v1227 = vpop.f32.mrb[0].mxu0
        %v1228 = vadd.f32 %v996, %v1227
        %v1229 = vpop.f32.mrb[0].mxu0
        %v1230 = vadd.f32 %v998, %v1229
        %1231 = vmatprep.mubr.f32.mxu0 0.0
        %v1232 = vand.u32 %v164, 4294901760
        %v1233 = vsub.f32 %v164, %v1232
        %v1234 = vand.u32 %v1233, 4294901760
        %1235 = vmatmul.mubr.f32.gmra.mrb[0].mxu0 %v1234
        %v1236 = vpop.f32.mrb[0].mxu0
        %v1237 = vadd.f32 %v1004, %v1236
        %v1238 = vpop.f32.mrb[0].mxu0
        %v1239 = vadd.f32 %v1006, %v1238
        %1240 = vmatprep.mubr.f32.mxu0 0.0
        %v1241 = vand.u32 %v165, 4294901760
        %v1242 = vsub.f32 %v165, %v1241
        %v1243 = vand.u32 %v1242, 4294901760
        %1244 = vmatmul.mubr.f32.gmra.mrb[0].mxu0 %v1243
        %v1245 = vpop.f32.mrb[0].mxu0
        %v1246 = vadd.f32 %v1012, %v1245
        %v1247 = vpop.f32.mrb[0].mxu0
        %v1248 = vadd.f32 %v1014, %v1247
        %1249 = vmatprep.mubr.f32.mxu0 0.0
        %v1250 = vand.u32 %v166, 4294901760
        %v1251 = vsub.f32 %v166, %v1250
        %v1252 = vand.u32 %v1251, 4294901760
        %1253 = vmatmul.mubr.f32.gmra.mrb[0].mxu0 %v1252
        %v1254 = vpop.f32.mrb[0].mxu0
        %v1255 = vadd.f32 %v1020, %v1254
        %v1256 = vpop.f32.mrb[0].mxu0
        %v1257 = vadd.f32 %v1022, %v1256
        %1258 = vmatprep.mubr.f32.mxu0 0.0
        %v1259 = vand.u32 %v167, 4294901760
        %v1260 = vsub.f32 %v167, %v1259
        %v1261 = vand.u32 %v1260, 4294901760
        %1262 = vmatmul.mubr.f32.gmra.mrb[0].mxu0 %v1261
        %v1263 = vpop.f32.mrb[0].mxu0
        %v1264 = vadd.f32 %v1028, %v1263
        %v1265 = vpop.f32.mrb[0].mxu0
        %v1266 = vadd.f32 %v1030, %v1265
        %1267 = vmatprep.mubr.f32.mxu0 0.0
        %v1268 = vand.u32 %v168, 4294901760
        %v1269 = vsub.f32 %v168, %v1268
        %v1270 = vand.u32 %v1269, 4294901760
        %1271 = vmatmul.mubr.f32.gmra.mrb[0].mxu0 %v1270
        %v1272 = vpop.f32.mrb[0].mxu0
        %v1273 = vadd.f32 %v1036, %v1272
        %v1274 = vpop.f32.mrb[0].mxu0
        %v1275 = vadd.f32 %v1038, %v1274
        %1276 = vmatprep.mubr.f32.mxu0 0.0
        %v1277 = vand.u32 %v169, 4294901760
        %v1278 = vsub.f32 %v169, %v1277
        %v1279 = vand.u32 %v1278, 4294901760
        %1280 = vmatmul.mubr.f32.gmra.mrb[0].mxu0 %v1279
        %v1281 = vpop.f32.mrb[0].mxu0
        %v1282 = vadd.f32 %v1044, %v1281
        %v1283 = vpop.f32.mrb[0].mxu0
        %v1284 = vadd.f32 %v1046, %v1283
        %1285 = vmatprep.mubr.f32.mxu0 0.0
        %v1286 = vand.u32 %v170, 4294901760
        %v1287 = vsub.f32 %v170, %v1286
        %v1288 = vand.u32 %v1287, 4294901760
        %1289 = vmatmul.mubr.f32.gmra.mrb[0].mxu0 %v1288
        %v1290 = vpop.f32.mrb[0].mxu0
        %v1291 = vadd.f32 %v1052, %v1290
        %v1292 = vpop.f32.mrb[0].mxu0
        %v1293 = vadd.f32 %v1054, %v1292
        %1294 = vmatprep.mubr.f32.mxu0 0.0
        %v1295 = vand.u32 %v171, 4294901760
        %v1296 = vsub.f32 %v171, %v1295
        %v1297 = vand.u32 %v1296, 4294901760
        %1298 = vmatmul.mubr.f32.gmra.mrb[0].mxu0 %v1297
        %v1299 = vpop.f32.mrb[0].mxu0
        %v1300 = vadd.f32 %v1060, %v1299
        %v1301 = vpop.f32.mrb[0].mxu0
        %v1302 = vadd.f32 %v1062, %v1301
        %1303 = vmatprep.mubr.f32.mxu0 0.0
        %v1304 = vand.u32 %v172, 4294901760
        %v1305 = vsub.f32 %v172, %v1304
        %v1306 = vand.u32 %v1305, 4294901760
        %1307 = vmatmul.mubr.f32.gmra.mrb[0].mxu0 %v1306
        %v1308 = vpop.f32.mrb[0].mxu0
        %v1309 = vadd.f32 %v1068, %v1308
        %v1310 = vpop.f32.mrb[0].mxu0
        %v1311 = vadd.f32 %v1070, %v1310
        %1312 = vdwg.mxu0
        %1313 = vmatprep.subr.mxu0 0.0
        %v1314 = vand.u32 %v173, 4294901760
        %v1315 = vsub.f32 %v173, %v1314
        %v1316 = vand.u32 %v1315, 4294901760
        %1317 = vmatpush1.xpose.msra.mxu0 %v1316
        %1318 = vmatprep.subr.mxu0 0.0
        %v1319 = vand.u32 %v174, 4294901760
        %v1320 = vsub.f32 %v174, %v1319
        %v1321 = vand.u32 %v1320, 4294901760
        %1322 = vmatpush1.xpose.msra.mxu0 %v1321
        %1323 = vmatprep.subr.mxu0 0.0
        %v1324 = vand.u32 %v175, 4294901760
        %v1325 = vsub.f32 %v175, %v1324
        %v1326 = vand.u32 %v1325, 4294901760
        %1327 = vmatpush1.xpose.msra.mxu0 %v1326
        %1328 = vmatprep.subr.mxu0 0.0
        %v1329 = vand.u32 %v176, 4294901760
        %v1330 = vsub.f32 %v176, %v1329
        %v1331 = vand.u32 %v1330, 4294901760
        %1332 = vmatpush1.xpose.msra.mxu0 %v1331
        %1333 = vmatprep.subr.mxu0 0.0
        %v1334 = vand.u32 %v177, 4294901760
        %v1335 = vsub.f32 %v177, %v1334
        %v1336 = vand.u32 %v1335, 4294901760
        %1337 = vmatpush1.xpose.msra.mxu0 %v1336
        %1338 = vmatprep.subr.mxu0 0.0
        %v1339 = vand.u32 %v178, 4294901760
        %v1340 = vsub.f32 %v178, %v1339
        %v1341 = vand.u32 %v1340, 4294901760
        %1342 = vmatpush1.xpose.msra.mxu0 %v1341
        %1343 = vmatprep.subr.mxu0 0.0
        %v1344 = vand.u32 %v179, 4294901760
        %v1345 = vsub.f32 %v179, %v1344
        %v1346 = vand.u32 %v1345, 4294901760
        %1347 = vmatpush1.xpose.msra.mxu0 %v1346
        %1348 = vmatprep.subr.mxu0 0.0
        %v1349 = vand.u32 %v180, 4294901760
        %v1350 = vsub.f32 %v180, %v1349
        %v1351 = vand.u32 %v1350, 4294901760
        %1352 = vmatpush1.xpose.msra.mxu0 %v1351
        %1353 = vmatprep.subr.mxu0 0.0
        %v1354 = vand.u32 %v181, 4294901760
        %v1355 = vsub.f32 %v181, %v1354
        %v1356 = vand.u32 %v1355, 4294901760
        %1357 = vmatpush1.xpose.msra.mxu0 %v1356
        %1358 = vmatprep.subr.mxu0 0.0
        %v1359 = vand.u32 %v182, 4294901760
        %v1360 = vsub.f32 %v182, %v1359
        %v1361 = vand.u32 %v1360, 4294901760
        %1362 = vmatpush1.xpose.msra.mxu0 %v1361
        %1363 = vmatprep.subr.mxu0 0.0
        %v1364 = vand.u32 %v183, 4294901760
        %v1365 = vsub.f32 %v183, %v1364
        %v1366 = vand.u32 %v1365, 4294901760
        %1367 = vmatpush1.xpose.msra.mxu0 %v1366
        %1368 = vmatprep.subr.mxu0 0.0
        %v1369 = vand.u32 %v184, 4294901760
        %v1370 = vsub.f32 %v184, %v1369
        %v1371 = vand.u32 %v1370, 4294901760
        %1372 = vmatpush1.xpose.msra.mxu0 %v1371
        %1373 = vmatprep.subr.mxu0 0.0
        %v1374 = vand.u32 %v185, 4294901760
        %v1375 = vsub.f32 %v185, %v1374
        %v1376 = vand.u32 %v1375, 4294901760
        %1377 = vmatpush1.xpose.msra.mxu0 %v1376
        %1378 = vmatprep.subr.mxu0 0.0
        %v1379 = vand.u32 %v186, 4294901760
        %v1380 = vsub.f32 %v186, %v1379
        %v1381 = vand.u32 %v1380, 4294901760
        %1382 = vmatpush1.xpose.msra.mxu0 %v1381
        %1383 = vmatprep.subr.mxu0 0.0
        %v1384 = vand.u32 %v187, 4294901760
        %v1385 = vsub.f32 %v187, %v1384
        %v1386 = vand.u32 %v1385, 4294901760
        %1387 = vmatpush1.xpose.msra.mxu0 %v1386
        %1388 = vmatprep.subr.mxu0 0.0
        %v1389 = vand.u32 %v188, 4294901760
        %v1390 = vsub.f32 %v188, %v1389
        %v1391 = vand.u32 %v1390, 4294901760
        %1392 = vmatpush1.xpose.msra.mxu0 %v1391
        %1393 = vmatprep.subr.mxu0 0.0
        %v1394 = vand.u32 %v189, 4294901760
        %v1395 = vsub.f32 %v189, %v1394
        %v1396 = vand.u32 %v1395, 4294901760
        %1397 = vmatpush1.xpose.msra.mxu0 %v1396
        %1398 = vmatprep.subr.mxu0 0.0
        %v1399 = vand.u32 %v190, 4294901760
        %v1400 = vsub.f32 %v190, %v1399
        %v1401 = vand.u32 %v1400, 4294901760
        %1402 = vmatpush1.xpose.msra.mxu0 %v1401
        %1403 = vmatprep.subr.mxu0 0.0
        %v1404 = vand.u32 %v191, 4294901760
        %v1405 = vsub.f32 %v191, %v1404
        %v1406 = vand.u32 %v1405, 4294901760
        %1407 = vmatpush1.xpose.msra.mxu0 %v1406
        %1408 = vmatprep.subr.mxu0 0.0
        %v1409 = vand.u32 %v192, 4294901760
        %v1410 = vsub.f32 %v192, %v1409
        %v1411 = vand.u32 %v1410, 4294901760
        %1412 = vmatpush1.xpose.msra.mxu0 %v1411
        %1413 = vmatprep.subr.mxu0 0.0
        %v1414 = vand.u32 %v193, 4294901760
        %v1415 = vsub.f32 %v193, %v1414
        %v1416 = vand.u32 %v1415, 4294901760
        %1417 = vmatpush1.xpose.msra.mxu0 %v1416
        %1418 = vmatprep.subr.mxu0 0.0
        %v1419 = vand.u32 %v194, 4294901760
        %v1420 = vsub.f32 %v194, %v1419
        %v1421 = vand.u32 %v1420, 4294901760
        %1422 = vmatpush1.xpose.msra.mxu0 %v1421
        %1423 = vmatprep.subr.mxu0 0.0
        %v1424 = vand.u32 %v195, 4294901760
        %v1425 = vsub.f32 %v195, %v1424
        %v1426 = vand.u32 %v1425, 4294901760
        %1427 = vmatpush1.xpose.msra.mxu0 %v1426
        %1428 = vmatprep.subr.mxu0 0.0
        %v1429 = vand.u32 %v196, 4294901760
        %v1430 = vsub.f32 %v196, %v1429
        %v1431 = vand.u32 %v1430, 4294901760
        %1432 = vmatpush1.xpose.msra.mxu0 %v1431
        %1433 = vmatprep.subr.mxu0 0.0
        %v1434 = vand.u32 %v197, 4294901760
        %v1435 = vsub.f32 %v197, %v1434
        %v1436 = vand.u32 %v1435, 4294901760
        %1437 = vmatpush1.xpose.msra.mxu0 %v1436
        %1438 = vmatprep.subr.mxu0 0.0
        %v1439 = vand.u32 %v198, 4294901760
        %v1440 = vsub.f32 %v198, %v1439
        %v1441 = vand.u32 %v1440, 4294901760
        %1442 = vmatpush1.xpose.msra.mxu0 %v1441
        %1443 = vmatprep.subr.mxu0 0.0
        %v1444 = vand.u32 %v199, 4294901760
        %v1445 = vsub.f32 %v199, %v1444
        %v1446 = vand.u32 %v1445, 4294901760
        %1447 = vmatpush1.xpose.msra.mxu0 %v1446
        %1448 = vmatprep.subr.mxu0 0.0
        %v1449 = vand.u32 %v200, 4294901760
        %v1450 = vsub.f32 %v200, %v1449
        %v1451 = vand.u32 %v1450, 4294901760
        %1452 = vmatpush1.xpose.msra.mxu0 %v1451
        %1453 = vmatprep.subr.mxu0 0.0
        %v1454 = vand.u32 %v201, 4294901760
        %v1455 = vsub.f32 %v201, %v1454
        %v1456 = vand.u32 %v1455, 4294901760
        %1457 = vmatpush1.xpose.msra.mxu0 %v1456
        %1458 = vmatprep.subr.mxu0 0.0
        %v1459 = vand.u32 %v202, 4294901760
        %v1460 = vsub.f32 %v202, %v1459
        %v1461 = vand.u32 %v1460, 4294901760
        %1462 = vmatpush1.xpose.msra.mxu0 %v1461
        %1463 = vmatprep.subr.mxu0 0.0
        %v1464 = vand.u32 %v203, 4294901760
        %v1465 = vsub.f32 %v203, %v1464
        %v1466 = vand.u32 %v1465, 4294901760
        %1467 = vmatpush1.xpose.msra.mxu0 %v1466
        %1468 = vmatprep.subr.mxu0 0.0
        %v1469 = vand.u32 %v204, 4294901760
        %v1470 = vsub.f32 %v204, %v1469
        %v1471 = vand.u32 %v1470, 4294901760
        %1472 = vmatpush1.xpose.msra.mxu0 %v1471
        %1473 = vmatprep.mubr.f32.mxu0 0.0
        %v1474 = vand.u32 %v157, 4294901760
        %1475 = vmatmul.mubr.f32.gmra.mrb[0].mxu0 %v1474
        %v1476 = vpop.f32.mrb[0].mxu0
        %v1477 = vadd.f32 %v1174, %v1476
        %v1478 = vpop.f32.mrb[0].mxu0
        %v1479 = vadd.f32 %v1176, %v1478
        %1480 = vmatprep.mubr.f32.mxu0 0.0
        %v1481 = vand.u32 %v158, 4294901760
        %1482 = vmatmul.mubr.f32.gmra.mrb[0].mxu0 %v1481
        %v1483 = vpop.f32.mrb[0].mxu0
        %v1484 = vadd.f32 %v1183, %v1483
        %v1485 = vpop.f32.mrb[0].mxu0
        %v1486 = vadd.f32 %v1185, %v1485
        %1487 = vmatprep.mubr.f32.mxu0 0.0
        %v1488 = vand.u32 %v159, 4294901760
        %1489 = vmatmul.mubr.f32.gmra.mrb[0].mxu0 %v1488
        %v1490 = vpop.f32.mrb[0].mxu0
        %v1491 = vadd.f32 %v1192, %v1490
        %v1492 = vpop.f32.mrb[0].mxu0
        %v1493 = vadd.f32 %v1194, %v1492
        %1494 = vmatprep.mubr.f32.mxu0 0.0
        %v1495 = vand.u32 %v160, 4294901760
        %1496 = vmatmul.mubr.f32.gmra.mrb[0].mxu0 %v1495
        %v1497 = vpop.f32.mrb[0].mxu0
        %v1498 = vadd.f32 %v1201, %v1497
        %v1499 = vpop.f32.mrb[0].mxu0
        %v1500 = vadd.f32 %v1203, %v1499
        %1501 = vmatprep.mubr.f32.mxu0 0.0
        %v1502 = vand.u32 %v161, 4294901760
        %1503 = vmatmul.mubr.f32.gmra.mrb[0].mxu0 %v1502
        %v1504 = vpop.f32.mrb[0].mxu0
        %v1505 = vadd.f32 %v1210, %v1504
        %v1506 = vpop.f32.mrb[0].mxu0
        %v1507 = vadd.f32 %v1212, %v1506
        %1508 = vmatprep.mubr.f32.mxu0 0.0
        %v1509 = vand.u32 %v162, 4294901760
        %1510 = vmatmul.mubr.f32.gmra.mrb[0].mxu0 %v1509
        %v1511 = vpop.f32.mrb[0].mxu0
        %v1512 = vadd.f32 %v1219, %v1511
        %v1513 = vpop.f32.mrb[0].mxu0
        %v1514 = vadd.f32 %v1221, %v1513
        %1515 = vmatprep.mubr.f32.mxu0 0.0
        %v1516 = vand.u32 %v163, 4294901760
        %1517 = vmatmul.mubr.f32.gmra.mrb[0].mxu0 %v1516
        %v1518 = vpop.f32.mrb[0].mxu0
        %v1519 = vadd.f32 %v1228, %v1518
        %v1520 = vpop.f32.mrb[0].mxu0
        %v1521 = vadd.f32 %v1230, %v1520
        %1522 = vmatprep.mubr.f32.mxu0 0.0
        %v1523 = vand.u32 %v164, 4294901760
        %1524 = vmatmul.mubr.f32.gmra.mrb[0].mxu0 %v1523
        %v1525 = vpop.f32.mrb[0].mxu0
        %v1526 = vadd.f32 %v1237, %v1525
        %v1527 = vpop.f32.mrb[0].mxu0
        %v1528 = vadd.f32 %v1239, %v1527
        %1529 = vmatprep.mubr.f32.mxu0 0.0
        %v1530 = vand.u32 %v165, 4294901760
        %1531 = vmatmul.mubr.f32.gmra.mrb[0].mxu0 %v1530
        %v1532 = vpop.f32.mrb[0].mxu0
        %v1533 = vadd.f32 %v1246, %v1532
        %v1534 = vpop.f32.mrb[0].mxu0
        %v1535 = vadd.f32 %v1248, %v1534
        %1536 = vmatprep.mubr.f32.mxu0 0.0
        %v1537 = vand.u32 %v166, 4294901760
        %1538 = vmatmul.mubr.f32.gmra.mrb[0].mxu0 %v1537
        %v1539 = vpop.f32.mrb[0].mxu0
        %v1540 = vadd.f32 %v1255, %v1539
        %v1541 = vpop.f32.mrb[0].mxu0
        %v1542 = vadd.f32 %v1257, %v1541
        %1543 = vmatprep.mubr.f32.mxu0 0.0
        %v1544 = vand.u32 %v167, 4294901760
        %1545 = vmatmul.mubr.f32.gmra.mrb[0].mxu0 %v1544
        %v1546 = vpop.f32.mrb[0].mxu0
        %v1547 = vadd.f32 %v1264, %v1546
        %v1548 = vpop.f32.mrb[0].mxu0
        %v1549 = vadd.f32 %v1266, %v1548
        %1550 = vmatprep.mubr.f32.mxu0 0.0
        %v1551 = vand.u32 %v168, 4294901760
        %1552 = vmatmul.mubr.f32.gmra.mrb[0].mxu0 %v1551
        %v1553 = vpop.f32.mrb[0].mxu0
        %v1554 = vadd.f32 %v1273, %v1553
        %v1555 = vpop.f32.mrb[0].mxu0
        %v1556 = vadd.f32 %v1275, %v1555
        %1557 = vmatprep.mubr.f32.mxu0 0.0
        %v1558 = vand.u32 %v169, 4294901760
        %1559 = vmatmul.mubr.f32.gmra.mrb[0].mxu0 %v1558
        %v1560 = vpop.f32.mrb[0].mxu0
        %v1561 = vadd.f32 %v1282, %v1560
        %v1562 = vpop.f32.mrb[0].mxu0
        %v1563 = vadd.f32 %v1284, %v1562
        %1564 = vmatprep.mubr.f32.mxu0 0.0
        %v1565 = vand.u32 %v170, 4294901760
        %1566 = vmatmul.mubr.f32.gmra.mrb[0].mxu0 %v1565
        %v1567 = vpop.f32.mrb[0].mxu0
        %v1568 = vadd.f32 %v1291, %v1567
        %v1569 = vpop.f32.mrb[0].mxu0
        %v1570 = vadd.f32 %v1293, %v1569
        %1571 = vmatprep.mubr.f32.mxu0 0.0
        %v1572 = vand.u32 %v171, 4294901760
        %1573 = vmatmul.mubr.f32.gmra.mrb[0].mxu0 %v1572
        %v1574 = vpop.f32.mrb[0].mxu0
        %v1575 = vadd.f32 %v1300, %v1574
        %v1576 = vpop.f32.mrb[0].mxu0
        %v1577 = vadd.f32 %v1302, %v1576
        %1578 = vmatprep.mubr.f32.mxu0 0.0
        %v1579 = vand.u32 %v172, 4294901760
        %1580 = vmatmul.mubr.f32.gmra.mrb[0].mxu0 %v1579
        %v1581 = vpop.f32.mrb[0].mxu0
        %v1582 = vadd.f32 %v1309, %v1581
        %v1583 = vpop.f32.mrb[0].mxu0
        %v1584 = vadd.f32 %v1311, %v1583
        %1585 = vdwg.mxu0
        %1586 = vmatprep.subr.mxu0 0.0
        %v1587 = vand.u32 %v173, 4294901760
        %1588 = vmatpush1.xpose.msra.mxu0 %v1587
        %1589 = vmatprep.subr.mxu0 0.0
        %v1590 = vand.u32 %v174, 4294901760
        %1591 = vmatpush1.xpose.msra.mxu0 %v1590
        %1592 = vmatprep.subr.mxu0 0.0
        %v1593 = vand.u32 %v175, 4294901760
        %1594 = vmatpush1.xpose.msra.mxu0 %v1593
        %1595 = vmatprep.subr.mxu0 0.0
        %v1596 = vand.u32 %v176, 4294901760
        %1597 = vmatpush1.xpose.msra.mxu0 %v1596
        %1598 = vmatprep.subr.mxu0 0.0
        %v1599 = vand.u32 %v177, 4294901760
        %1600 = vmatpush1.xpose.msra.mxu0 %v1599
        %1601 = vmatprep.subr.mxu0 0.0
        %v1602 = vand.u32 %v178, 4294901760
        %1603 = vmatpush1.xpose.msra.mxu0 %v1602
        %1604 = vmatprep.subr.mxu0 0.0
        %v1605 = vand.u32 %v179, 4294901760
        %1606 = vmatpush1.xpose.msra.mxu0 %v1605
        %1607 = vmatprep.subr.mxu0 0.0
        %v1608 = vand.u32 %v180, 4294901760
        %1609 = vmatpush1.xpose.msra.mxu0 %v1608
        %1610 = vmatprep.subr.mxu0 0.0
        %v1611 = vand.u32 %v181, 4294901760
        %1612 = vmatpush1.xpose.msra.mxu0 %v1611
        %1613 = vmatprep.subr.mxu0 0.0
        %v1614 = vand.u32 %v182, 4294901760
        %1615 = vmatpush1.xpose.msra.mxu0 %v1614
        %1616 = vmatprep.subr.mxu0 0.0
        %v1617 = vand.u32 %v183, 4294901760
        %1618 = vmatpush1.xpose.msra.mxu0 %v1617
        %1619 = vmatprep.subr.mxu0 0.0
        %v1620 = vand.u32 %v184, 4294901760
        %1621 = vmatpush1.xpose.msra.mxu0 %v1620
        %1622 = vmatprep.subr.mxu0 0.0
        %v1623 = vand.u32 %v185, 4294901760
        %1624 = vmatpush1.xpose.msra.mxu0 %v1623
        %1625 = vmatprep.subr.mxu0 0.0
        %v1626 = vand.u32 %v186, 4294901760
        %1627 = vmatpush1.xpose.msra.mxu0 %v1626
        %1628 = vmatprep.subr.mxu0 0.0
        %v1629 = vand.u32 %v187, 4294901760
        %1630 = vmatpush1.xpose.msra.mxu0 %v1629
        %1631 = vmatprep.subr.mxu0 0.0
        %v1632 = vand.u32 %v188, 4294901760
        %1633 = vmatpush1.xpose.msra.mxu0 %v1632
        %1634 = vmatprep.subr.mxu0 0.0
        %v1635 = vand.u32 %v189, 4294901760
        %1636 = vmatpush1.xpose.msra.mxu0 %v1635
        %1637 = vmatprep.subr.mxu0 0.0
        %v1638 = vand.u32 %v190, 4294901760
        %1639 = vmatpush1.xpose.msra.mxu0 %v1638
        %1640 = vmatprep.subr.mxu0 0.0
        %v1641 = vand.u32 %v191, 4294901760
        %1642 = vmatpush1.xpose.msra.mxu0 %v1641
        %1643 = vmatprep.subr.mxu0 0.0
        %v1644 = vand.u32 %v192, 4294901760
        %1645 = vmatpush1.xpose.msra.mxu0 %v1644
        %1646 = vmatprep.subr.mxu0 0.0
        %v1647 = vand.u32 %v193, 4294901760
        %1648 = vmatpush1.xpose.msra.mxu0 %v1647
        %1649 = vmatprep.subr.mxu0 0.0
        %v1650 = vand.u32 %v194, 4294901760
        %1651 = vmatpush1.xpose.msra.mxu0 %v1650
        %1652 = vmatprep.subr.mxu0 0.0
        %v1653 = vand.u32 %v195, 4294901760
        %1654 = vmatpush1.xpose.msra.mxu0 %v1653
        %1655 = vmatprep.subr.mxu0 0.0
        %v1656 = vand.u32 %v196, 4294901760
        %1657 = vmatpush1.xpose.msra.mxu0 %v1656
        %1658 = vmatprep.subr.mxu0 0.0
        %v1659 = vand.u32 %v197, 4294901760
        %1660 = vmatpush1.xpose.msra.mxu0 %v1659
        %1661 = vmatprep.subr.mxu0 0.0
        %v1662 = vand.u32 %v198, 4294901760
        %1663 = vmatpush1.xpose.msra.mxu0 %v1662
        %1664 = vmatprep.subr.mxu0 0.0
        %v1665 = vand.u32 %v199, 4294901760
        %1666 = vmatpush1.xpose.msra.mxu0 %v1665
        %1667 = vmatprep.subr.mxu0 0.0
        %v1668 = vand.u32 %v200, 4294901760
        %1669 = vmatpush1.xpose.msra.mxu0 %v1668
        %1670 = vmatprep.subr.mxu0 0.0
        %v1671 = vand.u32 %v201, 4294901760
        %1672 = vmatpush1.xpose.msra.mxu0 %v1671
        %1673 = vmatprep.subr.mxu0 0.0
        %v1674 = vand.u32 %v202, 4294901760
        %1675 = vmatpush1.xpose.msra.mxu0 %v1674
        %1676 = vmatprep.subr.mxu0 0.0
        %v1677 = vand.u32 %v203, 4294901760
        %1678 = vmatpush1.xpose.msra.mxu0 %v1677
        %1679 = vmatprep.subr.mxu0 0.0
        %v1680 = vand.u32 %v204, 4294901760
        %1681 = vmatpush1.xpose.msra.mxu0 %v1680
        %1682 = vmatprep.mubr.f32.mxu0 0.0
        %v1683 = vand.u32 %v157, 4294901760
        %1684 = vmatmul.mubr.f32.gmra.mrb[0].mxu0 %v1683
        %v1685 = vpop.f32.mrb[0].mxu0
        %v1686 = vadd.f32 %v1477, %v1685
        %v1687 = vpop.f32.mrb[0].mxu0
        %v1688 = vadd.f32 %v1479, %v1687
        %1689 = vmatprep.mubr.f32.mxu0 0.0
        %v1690 = vand.u32 %v158, 4294901760
        %1691 = vmatmul.mubr.f32.gmra.mrb[0].mxu0 %v1690
        %v1692 = vpop.f32.mrb[0].mxu0
        %v1693 = vadd.f32 %v1484, %v1692
        %v1694 = vpop.f32.mrb[0].mxu0
        %v1695 = vadd.f32 %v1486, %v1694
        %1696 = vmatprep.mubr.f32.mxu0 0.0
        %v1697 = vand.u32 %v159, 4294901760
        %1698 = vmatmul.mubr.f32.gmra.mrb[0].mxu0 %v1697
        %v1699 = vpop.f32.mrb[0].mxu0
        %v1700 = vadd.f32 %v1491, %v1699
        %v1701 = vpop.f32.mrb[0].mxu0
        %v1702 = vadd.f32 %v1493, %v1701
        %1703 = vmatprep.mubr.f32.mxu0 0.0
        %v1704 = vand.u32 %v160, 4294901760
        %1705 = vmatmul.mubr.f32.gmra.mrb[0].mxu0 %v1704
        %v1706 = vpop.f32.mrb[0].mxu0
        %v1707 = vadd.f32 %v1498, %v1706
        %v1708 = vpop.f32.mrb[0].mxu0
        %v1709 = vadd.f32 %v1500, %v1708
        %1710 = vmatprep.mubr.f32.mxu0 0.0
        %v1711 = vand.u32 %v161, 4294901760
        %1712 = vmatmul.mubr.f32.gmra.mrb[0].mxu0 %v1711
        %v1713 = vpop.f32.mrb[0].mxu0
        %v1714 = vadd.f32 %v1505, %v1713
        %v1715 = vpop.f32.mrb[0].mxu0
        %v1716 = vadd.f32 %v1507, %v1715
        %1717 = vmatprep.mubr.f32.mxu0 0.0
        %v1718 = vand.u32 %v162, 4294901760
        %1719 = vmatmul.mubr.f32.gmra.mrb[0].mxu0 %v1718
        %v1720 = vpop.f32.mrb[0].mxu0
        %v1721 = vadd.f32 %v1512, %v1720
        %v1722 = vpop.f32.mrb[0].mxu0
        %v1723 = vadd.f32 %v1514, %v1722
        %1724 = vmatprep.mubr.f32.mxu0 0.0
        %v1725 = vand.u32 %v163, 4294901760
        %1726 = vmatmul.mubr.f32.gmra.mrb[0].mxu0 %v1725
        %v1727 = vpop.f32.mrb[0].mxu0
        %v1728 = vadd.f32 %v1519, %v1727
        %v1729 = vpop.f32.mrb[0].mxu0
        %v1730 = vadd.f32 %v1521, %v1729
        %1731 = vmatprep.mubr.f32.mxu0 0.0
        %v1732 = vand.u32 %v164, 4294901760
        %1733 = vmatmul.mubr.f32.gmra.mrb[0].mxu0 %v1732
        %v1734 = vpop.f32.mrb[0].mxu0
        %v1735 = vadd.f32 %v1526, %v1734
        %v1736 = vpop.f32.mrb[0].mxu0
        %v1737 = vadd.f32 %v1528, %v1736
        %1738 = vmatprep.mubr.f32.mxu0 0.0
        %v1739 = vand.u32 %v165, 4294901760
        %1740 = vmatmul.mubr.f32.gmra.mrb[0].mxu0 %v1739
        %v1741 = vpop.f32.mrb[0].mxu0
        %v1742 = vadd.f32 %v1533, %v1741
        %v1743 = vpop.f32.mrb[0].mxu0
        %v1744 = vadd.f32 %v1535, %v1743
        %1745 = vmatprep.mubr.f32.mxu0 0.0
        %v1746 = vand.u32 %v166, 4294901760
        %1747 = vmatmul.mubr.f32.gmra.mrb[0].mxu0 %v1746
        %v1748 = vpop.f32.mrb[0].mxu0
        %v1749 = vadd.f32 %v1540, %v1748
        %v1750 = vpop.f32.mrb[0].mxu0
        %v1751 = vadd.f32 %v1542, %v1750
        %1752 = vmatprep.mubr.f32.mxu0 0.0
        %v1753 = vand.u32 %v167, 4294901760
        %1754 = vmatmul.mubr.f32.gmra.mrb[0].mxu0 %v1753
        %v1755 = vpop.f32.mrb[0].mxu0
        %v1756 = vadd.f32 %v1547, %v1755
        %v1757 = vpop.f32.mrb[0].mxu0
        %v1758 = vadd.f32 %v1549, %v1757
        %1759 = vmatprep.mubr.f32.mxu0 0.0
        %v1760 = vand.u32 %v168, 4294901760
        %1761 = vmatmul.mubr.f32.gmra.mrb[0].mxu0 %v1760
        %v1762 = vpop.f32.mrb[0].mxu0
        %v1763 = vadd.f32 %v1554, %v1762
        %v1764 = vpop.f32.mrb[0].mxu0
        %v1765 = vadd.f32 %v1556, %v1764
        %1766 = vmatprep.mubr.f32.mxu0 0.0
        %v1767 = vand.u32 %v169, 4294901760
        %1768 = vmatmul.mubr.f32.gmra.mrb[0].mxu0 %v1767
        %v1769 = vpop.f32.mrb[0].mxu0
        %v1770 = vadd.f32 %v1561, %v1769
        %v1771 = vpop.f32.mrb[0].mxu0
        %v1772 = vadd.f32 %v1563, %v1771
        %1773 = vmatprep.mubr.f32.mxu0 0.0
        %v1774 = vand.u32 %v170, 4294901760
        %1775 = vmatmul.mubr.f32.gmra.mrb[0].mxu0 %v1774
        %v1776 = vpop.f32.mrb[0].mxu0
        %v1777 = vadd.f32 %v1568, %v1776
        %v1778 = vpop.f32.mrb[0].mxu0
        %v1779 = vadd.f32 %v1570, %v1778
        %1780 = vmatprep.mubr.f32.mxu0 0.0
        %v1781 = vand.u32 %v171, 4294901760
        %1782 = vmatmul.mubr.f32.gmra.mrb[0].mxu0 %v1781
        %v1783 = vpop.f32.mrb[0].mxu0
        %v1784 = vadd.f32 %v1575, %v1783
        %v1785 = vpop.f32.mrb[0].mxu0
        %v1786 = vadd.f32 %v1577, %v1785
        %1787 = vmatprep.mubr.f32.mxu0 0.0
        %v1788 = vand.u32 %v172, 4294901760
        %1789 = vmatmul.mubr.f32.gmra.mrb[0].mxu0 %v1788
        %v1790 = vpop.f32.mrb[0].mxu0
        %v1791 = vadd.f32 %v1582, %v1790
        %v1792 = vpop.f32.mrb[0].mxu0
        %v1793 = vadd.f32 %v1584, %v1792
        %1794 = vdwg.mxu0
        %v1795 = vmul.f32 %v1686, 14.285714
        %v1796 = vmul.f32 %v1688, 14.285714
        %v1797 = vmul.f32 %v1693, 14.285714
        %v1798 = vmul.f32 %v1695, 14.285714
        %v1799 = vmul.f32 %v1700, 14.285714
        %v1800 = vmul.f32 %v1702, 14.285714
        %v1801 = vmul.f32 %v1707, 14.285714
        %v1802 = vmul.f32 %v1709, 14.285714
        %v1803 = vmul.f32 %v1714, 14.285714
        %v1804 = vmul.f32 %v1716, 14.285714
        %v1805 = vmul.f32 %v1721, 14.285714
        %v1806 = vmul.f32 %v1723, 14.285714
        %v1807 = vmul.f32 %v1728, 14.285714
        %v1808 = vmul.f32 %v1730, 14.285714
        %v1809 = vmul.f32 %v1735, 14.285714
        %v1810 = vmul.f32 %v1737, 14.285714
        %v1811 = vmul.f32 %v1742, 14.285714
        %v1812 = vmul.f32 %v1744, 14.285714
        %v1813 = vmul.f32 %v1749, 14.285714
        %v1814 = vmul.f32 %v1751, 14.285714
        %v1815 = vmul.f32 %v1756, 14.285714
        %v1816 = vmul.f32 %v1758, 14.285714
        %v1817 = vmul.f32 %v1763, 14.285714
        %v1818 = vmul.f32 %v1765, 14.285714
        %v1819 = vmul.f32 %v1770, 14.285714
        %v1820 = vmul.f32 %v1772, 14.285714
        %v1821 = vmul.f32 %v1777, 14.285714
        %v1822 = vmul.f32 %v1779, 14.285714
        %v1823 = vmul.f32 %v1784, 14.285714
        %v1824 = vmul.f32 %v1786, 14.285714
        %v1825 = vmul.f32 %v1791, 14.285714
        %v1826 = vmul.f32 %v1793, 14.285714
        %v1827 = vlaneseq
        %v1828 = vand.u32 %v1827, 127
        %v1829 = vadd.s32 %v1828, 128
        %v1830 = vlaneseq
        %v1831 = vshrl.u32 %v1830, 7
        %v1832 = vadd.s32 %v1831, 8
        %v1833 = vadd.s32 %v1831, 16
        %v1834 = vadd.s32 %v1831, 24
        %v1835 = vadd.s32 %v1831, 32
        %v1836 = vadd.s32 %v1831, 40
        %v1837 = vadd.s32 %v1831, 48
        %v1838 = vadd.s32 %v1831, 56
        %v1839 = vadd.s32 %v1831, 64
        %v1840 = vadd.s32 %v1831, 72
        %v1841 = vadd.s32 %v1831, 80
        %v1842 = vadd.s32 %v1831, 88
        %v1843 = vadd.s32 %v1831, 96
        %v1844 = vadd.s32 %v1831, 104
        %v1845 = vadd.s32 %v1831, 112
        %v1846 = vadd.s32 %v1831, 120
        %v1847 = vstv %s155
        %v1848 = vadd.s32 %v1847, %v1831
        %v1849 = vadd.s32 %v1847, %v1832
        %v1850 = vadd.s32 %v1847, %v1833
        %v1851 = vadd.s32 %v1847, %v1834
        %v1852 = vadd.s32 %v1847, %v1835
        %v1853 = vadd.s32 %v1847, %v1836
        %v1854 = vadd.s32 %v1847, %v1837
        %v1855 = vadd.s32 %v1847, %v1838
        %v1856 = vadd.s32 %v1847, %v1839
        %v1857 = vadd.s32 %v1847, %v1840
        %v1858 = vadd.s32 %v1847, %v1841
        %v1859 = vadd.s32 %v1847, %v1842
        %v1860 = vadd.s32 %v1847, %v1843
        %v1861 = vadd.s32 %v1847, %v1844
        %v1862 = vadd.s32 %v1847, %v1845
        %v1863 = vadd.s32 %v1847, %v1846
        %vm1864 = vcmp.lt.s32.totalorder %v1828, 0
        %vm1865 = vcmp.lt.s32.totalorder %v1829, 0
        %vm1866 = vcmp.ge.s32.totalorder %v1828, 0
        %vm1867 = vcmp.ge.s32.totalorder %v1829, 0
        %vm1868 = vcmp.lt.s32.totalorder %v1828, 8
        %vm1869 = vcmp.lt.s32.totalorder %v1829, 8
        %vm1870 = vmand %vm1866, %vm1868
        %vm1871 = vmand %vm1867, %vm1869
        %vm1872 = vmor %vm1864, %vm1870
        %vm1873 = vmor %vm1865, %vm1871
        %vm1874 = vcmp.ge.s32.totalorder %v1828, 128
        %vm1875 = vcmp.ge.s32.totalorder %v1829, 128
        %vm1876 = vcmp.lt.s32.totalorder %v1828, 136
        %vm1877 = vcmp.lt.s32.totalorder %v1829, 136
        %vm1878 = vmand %vm1874, %vm1876
        %vm1879 = vmand %vm1875, %vm1877
        %vm1880 = vmor %vm1872, %vm1878
        %vm1881 = vmor %vm1873, %vm1879
        %vm1882 = vcmp.ne.s32.totalorder %v1828, %v1848
        %vm1883 = vcmp.ne.s32.totalorder %v1829, %v1848
        %vm1884 = vcmp.ne.s32.totalorder %v1828, %v1849
        %vm1885 = vcmp.ne.s32.totalorder %v1829, %v1849
        %vm1886 = vcmp.ne.s32.totalorder %v1828, %v1850
        %vm1887 = vcmp.ne.s32.totalorder %v1829, %v1850
        %vm1888 = vcmp.ne.s32.totalorder %v1828, %v1851
        %vm1889 = vcmp.ne.s32.totalorder %v1829, %v1851
        %vm1890 = vcmp.ne.s32.totalorder %v1828, %v1852
        %vm1891 = vcmp.ne.s32.totalorder %v1829, %v1852
        %vm1892 = vcmp.ne.s32.totalorder %v1828, %v1853
        %vm1893 = vcmp.ne.s32.totalorder %v1829, %v1853
        %vm1894 = vcmp.ne.s32.totalorder %v1828, %v1854
        %vm1895 = vcmp.ne.s32.totalorder %v1829, %v1854
        %vm1896 = vcmp.ne.s32.totalorder %v1828, %v1855
        %vm1897 = vcmp.ne.s32.totalorder %v1829, %v1855
        %vm1898 = vcmp.ne.s32.totalorder %v1828, %v1856
        %vm1899 = vcmp.ne.s32.totalorder %v1829, %v1856
        %vm1900 = vcmp.ne.s32.totalorder %v1828, %v1857
        %vm1901 = vcmp.ne.s32.totalorder %v1829, %v1857
        %vm1902 = vcmp.ne.s32.totalorder %v1828, %v1858
        %vm1903 = vcmp.ne.s32.totalorder %v1829, %v1858
        %vm1904 = vcmp.ne.s32.totalorder %v1828, %v1859
        %vm1905 = vcmp.ne.s32.totalorder %v1829, %v1859
        %vm1906 = vcmp.ne.s32.totalorder %v1828, %v1860
        %vm1907 = vcmp.ne.s32.totalorder %v1829, %v1860
        %vm1908 = vcmp.ne.s32.totalorder %v1828, %v1861
        %vm1909 = vcmp.ne.s32.totalorder %v1829, %v1861
        %vm1910 = vcmp.ne.s32.totalorder %v1828, %v1862
        %vm1911 = vcmp.ne.s32.totalorder %v1829, %v1862
        %vm1912 = vcmp.ne.s32.totalorder %v1828, %v1863
        %vm1913 = vcmp.ne.s32.totalorder %v1829, %v1863
        %vm1914 = vmand %vm1880, %vm1882
        %vm1915 = vmand %vm1881, %vm1883
        %vm1916 = vmand %vm1880, %vm1884
        %vm1917 = vmand %vm1881, %vm1885
        %vm1918 = vmand %vm1880, %vm1886
        %vm1919 = vmand %vm1881, %vm1887
        %vm1920 = vmand %vm1880, %vm1888
        %vm1921 = vmand %vm1881, %vm1889
        %vm1922 = vmand %vm1880, %vm1890
        %vm1923 = vmand %vm1881, %vm1891
        %vm1924 = vmand %vm1880, %vm1892
        %vm1925 = vmand %vm1881, %vm1893
        %vm1926 = vmand %vm1880, %vm1894
        %vm1927 = vmand %vm1881, %vm1895
        %vm1928 = vmand %vm1880, %vm1896
        %vm1929 = vmand %vm1881, %vm1897
        %vm1930 = vmand %vm1880, %vm1898
        %vm1931 = vmand %vm1881, %vm1899
        %vm1932 = vmand %vm1880, %vm1900
        %vm1933 = vmand %vm1881, %vm1901
        %vm1934 = vmand %vm1880, %vm1902
        %vm1935 = vmand %vm1881, %vm1903
        %vm1936 = vmand %vm1880, %vm1904
        %vm1937 = vmand %vm1881, %vm1905
        %vm1938 = vmand %vm1880, %vm1906
        %vm1939 = vmand %vm1881, %vm1907
        %vm1940 = vmand %vm1880, %vm1908
        %vm1941 = vmand %vm1881, %vm1909
        %vm1942 = vmand %vm1880, %vm1910
        %vm1943 = vmand %vm1881, %vm1911
        %vm1944 = vmand %vm1880, %vm1912
        %vm1945 = vmand %vm1881, %vm1913
        %v1946 = vsel %vm1880, %v1795, -inf
        %v1947 = vsel %vm1881, %v1796, -inf
        %v1948 = vsel %vm1880, %v1797, -inf
        %v1949 = vsel %vm1881, %v1798, -inf
        %v1950 = vsel %vm1880, %v1799, -inf
        %v1951 = vsel %vm1881, %v1800, -inf
        %v1952 = vsel %vm1880, %v1801, -inf
        %v1953 = vsel %vm1881, %v1802, -inf
        %v1954 = vsel %vm1880, %v1803, -inf
        %v1955 = vsel %vm1881, %v1804, -inf
        %v1956 = vsel %vm1880, %v1805, -inf
        %v1957 = vsel %vm1881, %v1806, -inf
        %v1958 = vsel %vm1880, %v1807, -inf
        %v1959 = vsel %vm1881, %v1808, -inf
        %v1960 = vsel %vm1880, %v1809, -inf
        %v1961 = vsel %vm1881, %v1810, -inf
        %v1962 = vsel %vm1880, %v1811, -inf
        %v1963 = vsel %vm1881, %v1812, -inf
        %v1964 = vsel %vm1880, %v1813, -inf
        %v1965 = vsel %vm1881, %v1814, -inf
        %v1966 = vsel %vm1880, %v1815, -inf
        %v1967 = vsel %vm1881, %v1816, -inf
        %v1968 = vsel %vm1880, %v1817, -inf
        %v1969 = vsel %vm1881, %v1818, -inf
        %v1970 = vsel %vm1880, %v1819, -inf
        %v1971 = vsel %vm1881, %v1820, -inf
        %v1972 = vsel %vm1880, %v1821, -inf
        %v1973 = vsel %vm1881, %v1822, -inf
        %v1974 = vsel %vm1880, %v1823, -inf
        %v1975 = vsel %vm1881, %v1824, -inf
        %v1976 = vsel %vm1880, %v1825, -inf
        %v1977 = vsel %vm1881, %v1826, -inf
        %v1978 = vmax.f32 %v1946, %v1947
        %1979 = vmax.xlane.f32.xlu0 %v1978
        %v1980 = vpop.xlane.xlu0 %1979
        %v1981 = vmax.f32 %v1948, %v1949
        %1982 = vmax.xlane.f32.xlu0 %v1981
        %v1983 = vpop.xlane.xlu0 %1982
        %v1984 = vmax.f32 %v1950, %v1951
        %1985 = vmax.xlane.f32.xlu0 %v1984
        %v1986 = vpop.xlane.xlu0 %1985
        %v1987 = vmax.f32 %v1952, %v1953
        %1988 = vmax.xlane.f32.xlu0 %v1987
        %v1989 = vpop.xlane.xlu0 %1988
        %v1990 = vmax.f32 %v1954, %v1955
        %1991 = vmax.xlane.f32.xlu0 %v1990
        %v1992 = vpop.xlane.xlu0 %1991
        %v1993 = vmax.f32 %v1956, %v1957
        %1994 = vmax.xlane.f32.xlu0 %v1993
        %v1995 = vpop.xlane.xlu0 %1994
        %v1996 = vmax.f32 %v1958, %v1959
        %1997 = vmax.xlane.f32.xlu0 %v1996
        %v1998 = vpop.xlane.xlu0 %1997
        %v1999 = vmax.f32 %v1960, %v1961
        %2000 = vmax.xlane.f32.xlu0 %v1999
        %v2001 = vpop.xlane.xlu0 %2000
        %v2002 = vmax.f32 %v1962, %v1963
        %2003 = vmax.xlane.f32.xlu0 %v2002
        %v2004 = vpop.xlane.xlu0 %2003
        %v2005 = vmax.f32 %v1964, %v1965
        %2006 = vmax.xlane.f32.xlu0 %v2005
        %v2007 = vpop.xlane.xlu0 %2006
        %v2008 = vmax.f32 %v1966, %v1967
        %2009 = vmax.xlane.f32.xlu0 %v2008
        %v2010 = vpop.xlane.xlu0 %2009
        %v2011 = vmax.f32 %v1968, %v1969
        %2012 = vmax.xlane.f32.xlu0 %v2011
        %v2013 = vpop.xlane.xlu0 %2012
        %v2014 = vmax.f32 %v1970, %v1971
        %2015 = vmax.xlane.f32.xlu0 %v2014
        %v2016 = vpop.xlane.xlu0 %2015
        %v2017 = vmax.f32 %v1972, %v1973
        %2018 = vmax.xlane.f32.xlu0 %v2017
        %v2019 = vpop.xlane.xlu0 %2018
        %v2020 = vmax.f32 %v1974, %v1975
        %2021 = vmax.xlane.f32.xlu0 %v2020
        %v2022 = vpop.xlane.xlu0 %2021
        %v2023 = vmax.f32 %v1976, %v1977
        %2024 = vmax.xlane.f32.xlu0 %v2023
        %v2025 = vpop.xlane.xlu0 %2024
        %v2026 = vsub.f32 %v1795, %v1980
        %v2027 = vsub.f32 %v1796, %v1980
        %v2028 = vsub.f32 %v1797, %v1983
        %v2029 = vsub.f32 %v1798, %v1983
        %v2030 = vsub.f32 %v1799, %v1986
        %v2031 = vsub.f32 %v1800, %v1986
        %v2032 = vsub.f32 %v1801, %v1989
        %v2033 = vsub.f32 %v1802, %v1989
        %v2034 = vsub.f32 %v1803, %v1992
        %v2035 = vsub.f32 %v1804, %v1992
        %v2036 = vsub.f32 %v1805, %v1995
        %v2037 = vsub.f32 %v1806, %v1995
        %v2038 = vsub.f32 %v1807, %v1998
        %v2039 = vsub.f32 %v1808, %v1998
        %v2040 = vsub.f32 %v1809, %v2001
        %v2041 = vsub.f32 %v1810, %v2001
        %v2042 = vsub.f32 %v1811, %v2004
        %v2043 = vsub.f32 %v1812, %v2004
        %v2044 = vsub.f32 %v1813, %v2007
        %v2045 = vsub.f32 %v1814, %v2007
        %v2046 = vsub.f32 %v1815, %v2010
        %v2047 = vsub.f32 %v1816, %v2010
        %v2048 = vsub.f32 %v1817, %v2013
        %v2049 = vsub.f32 %v1818, %v2013
        %v2050 = vsub.f32 %v1819, %v2016
        %v2051 = vsub.f32 %v1820, %v2016
        %v2052 = vsub.f32 %v1821, %v2019
        %v2053 = vsub.f32 %v1822, %v2019
        %v2054 = vsub.f32 %v1823, %v2022
        %v2055 = vsub.f32 %v1824, %v2022
        %v2056 = vsub.f32 %v1825, %v2025
        %v2057 = vsub.f32 %v1826, %v2025
        %v2058 = vsel %vm1914, %v2026, -inf
        %v2059 = vsel %vm1915, %v2027, -inf
        %v2060 = vsel %vm1916, %v2028, -inf
        %v2061 = vsel %vm1917, %v2029, -inf
        %v2062 = vsel %vm1918, %v2030, -inf
        %v2063 = vsel %vm1919, %v2031, -inf
        %v2064 = vsel %vm1920, %v2032, -inf
        %v2065 = vsel %vm1921, %v2033, -inf
        %v2066 = vsel %vm1922, %v2034, -inf
        %v2067 = vsel %vm1923, %v2035, -inf
        %v2068 = vsel %vm1924, %v2036, -inf
        %v2069 = vsel %vm1925, %v2037, -inf
        %v2070 = vsel %vm1926, %v2038, -inf
        %v2071 = vsel %vm1927, %v2039, -inf
        %v2072 = vsel %vm1928, %v2040, -inf
        %v2073 = vsel %vm1929, %v2041, -inf
        %v2074 = vsel %vm1930, %v2042, -inf
        %v2075 = vsel %vm1931, %v2043, -inf
        %v2076 = vsel %vm1932, %v2044, -inf
        %v2077 = vsel %vm1933, %v2045, -inf
        %v2078 = vsel %vm1934, %v2046, -inf
        %v2079 = vsel %vm1935, %v2047, -inf
        %v2080 = vsel %vm1936, %v2048, -inf
        %v2081 = vsel %vm1937, %v2049, -inf
        %v2082 = vsel %vm1938, %v2050, -inf
        %v2083 = vsel %vm1939, %v2051, -inf
        %v2084 = vsel %vm1940, %v2052, -inf
        %v2085 = vsel %vm1941, %v2053, -inf
        %v2086 = vsel %vm1942, %v2054, -inf
        %v2087 = vsel %vm1943, %v2055, -inf
        %v2088 = vsel %vm1944, %v2056, -inf
        %v2089 = vsel %vm1945, %v2057, -inf
        %v2090 = vmul.f32 %v2058, 1.442695
        %v2091 = vpow.pop %v2090
        %v2092 = vmul.f32 %v2059, 1.442695
        %v2093 = vpow.pop %v2092
        %v2094 = vmul.f32 %v2060, 1.442695
        %v2095 = vpow.pop %v2094
        %v2096 = vmul.f32 %v2061, 1.442695
        %v2097 = vpow.pop %v2096
        %v2098 = vmul.f32 %v2062, 1.442695
        %v2099 = vpow.pop %v2098
        %v2100 = vmul.f32 %v2063, 1.442695
        %v2101 = vpow.pop %v2100
        %v2102 = vmul.f32 %v2064, 1.442695
        %v2103 = vpow.pop %v2102
        %v2104 = vmul.f32 %v2065, 1.442695
        %v2105 = vpow.pop %v2104
        %v2106 = vmul.f32 %v2066, 1.442695
        %v2107 = vpow.pop %v2106
        %v2108 = vmul.f32 %v2067, 1.442695
        %v2109 = vpow.pop %v2108
        %v2110 = vmul.f32 %v2068, 1.442695
        %v2111 = vpow.pop %v2110
        %v2112 = vmul.f32 %v2069, 1.442695
        %v2113 = vpow.pop %v2112
        %v2114 = vmul.f32 %v2070, 1.442695
        %v2115 = vpow.pop %v2114
        %v2116 = vmul.f32 %v2071, 1.442695
        %v2117 = vpow.pop %v2116
        %v2118 = vmul.f32 %v2072, 1.442695
        %v2119 = vpow.pop %v2118
        %v2120 = vmul.f32 %v2073, 1.442695
        %v2121 = vpow.pop %v2120
        %v2122 = vmul.f32 %v2074, 1.442695
        %v2123 = vpow.pop %v2122
        %v2124 = vmul.f32 %v2075, 1.442695
        %v2125 = vpow.pop %v2124
        %v2126 = vmul.f32 %v2076, 1.442695
        %v2127 = vpow.pop %v2126
        %v2128 = vmul.f32 %v2077, 1.442695
        %v2129 = vpow.pop %v2128
        %v2130 = vmul.f32 %v2078, 1.442695
        %v2131 = vpow.pop %v2130
        %v2132 = vmul.f32 %v2079, 1.442695
        %v2133 = vpow.pop %v2132
        %v2134 = vmul.f32 %v2080, 1.442695
        %v2135 = vpow.pop %v2134
        %v2136 = vmul.f32 %v2081, 1.442695
        %v2137 = vpow.pop %v2136
        %v2138 = vmul.f32 %v2082, 1.442695
        %v2139 = vpow.pop %v2138
        %v2140 = vmul.f32 %v2083, 1.442695
        %v2141 = vpow.pop %v2140
        %v2142 = vmul.f32 %v2084, 1.442695
        %v2143 = vpow.pop %v2142
        %v2144 = vmul.f32 %v2085, 1.442695
        %v2145 = vpow.pop %v2144
        %v2146 = vmul.f32 %v2086, 1.442695
        %v2147 = vpow.pop %v2146
        %v2148 = vmul.f32 %v2087, 1.442695
        %v2149 = vpow.pop %v2148
        %v2150 = vmul.f32 %v2088, 1.442695
        %v2151 = vpow.pop %v2150
        %v2152 = vmul.f32 %v2089, 1.442695
        %v2153 = vpow.pop %v2152
        %v2154 = vadd.f32 %v2091, %v2093
        %2155 = vadd.xlane.f32.xlu0 %v2154
        %v2156 = vpop.xlane.xlu0 %2155
        %v2157 = vadd.f32 %v2095, %v2097
        %2158 = vadd.xlane.f32.xlu0 %v2157
        %v2159 = vpop.xlane.xlu0 %2158
        %v2160 = vadd.f32 %v2099, %v2101
        %2161 = vadd.xlane.f32.xlu0 %v2160
        %v2162 = vpop.xlane.xlu0 %2161
        %v2163 = vadd.f32 %v2103, %v2105
        %2164 = vadd.xlane.f32.xlu0 %v2163
        %v2165 = vpop.xlane.xlu0 %2164
        %v2166 = vadd.f32 %v2107, %v2109
        %2167 = vadd.xlane.f32.xlu0 %v2166
        %v2168 = vpop.xlane.xlu0 %2167
        %v2169 = vadd.f32 %v2111, %v2113
        %2170 = vadd.xlane.f32.xlu0 %v2169
        %v2171 = vpop.xlane.xlu0 %2170
        %v2172 = vadd.f32 %v2115, %v2117
        %2173 = vadd.xlane.f32.xlu0 %v2172
        %v2174 = vpop.xlane.xlu0 %2173
        %v2175 = vadd.f32 %v2119, %v2121
        %2176 = vadd.xlane.f32.xlu0 %v2175
        %v2177 = vpop.xlane.xlu0 %2176
        %v2178 = vadd.f32 %v2123, %v2125
        %2179 = vadd.xlane.f32.xlu0 %v2178
        %v2180 = vpop.xlane.xlu0 %2179
        %v2181 = vadd.f32 %v2127, %v2129
        %2182 = vadd.xlane.f32.xlu0 %v2181
        %v2183 = vpop.xlane.xlu0 %2182
        %v2184 = vadd.f32 %v2131, %v2133
        %2185 = vadd.xlane.f32.xlu0 %v2184
        %v2186 = vpop.xlane.xlu0 %2185
        %v2187 = vadd.f32 %v2135, %v2137
        %2188 = vadd.xlane.f32.xlu0 %v2187
        %v2189 = vpop.xlane.xlu0 %2188
        %v2190 = vadd.f32 %v2139, %v2141
        %2191 = vadd.xlane.f32.xlu0 %v2190
        %v2192 = vpop.xlane.xlu0 %2191
        %v2193 = vadd.f32 %v2143, %v2145
        %2194 = vadd.xlane.f32.xlu0 %v2193
        %v2195 = vpop.xlane.xlu0 %2194
        %v2196 = vadd.f32 %v2147, %v2149
        %2197 = vadd.xlane.f32.xlu0 %v2196
        %v2198 = vpop.xlane.xlu0 %2197
        %v2199 = vadd.f32 %v2151, %v2153
        %2200 = vadd.xlane.f32.xlu0 %v2199
        %v2201 = vpop.xlane.xlu0 %2200
        %v2202 = vld [vmem:[#allocation4] sm:$0xff]
        %v2203 = vld [vmem:[#allocation4 + $0x8] sm:$0xff]
        %v2204 = vld [vmem:[#allocation4 + $0x10] sm:$0xff]
        %v2205 = vld [vmem:[#allocation4 + $0x18] sm:$0xff]
        %v2206 = vld [vmem:[#allocation4 + $0x20] sm:$0xff]
        %v2207 = vld [vmem:[#allocation4 + $0x28] sm:$0xff]
        %v2208 = vld [vmem:[#allocation4 + $0x30] sm:$0xff]
        %v2209 = vld [vmem:[#allocation4 + $0x38] sm:$0xff]
        %v2210 = vld [vmem:[#allocation4 + $0x40] sm:$0xff]
        %v2211 = vld [vmem:[#allocation4 + $0x48] sm:$0xff]
        %v2212 = vld [vmem:[#allocation4 + $0x50] sm:$0xff]
        %v2213 = vld [vmem:[#allocation4 + $0x58] sm:$0xff]
        %v2214 = vld [vmem:[#allocation4 + $0x60] sm:$0xff]
        %v2215 = vld [vmem:[#allocation4 + $0x68] sm:$0xff]
        %v2216 = vld [vmem:[#allocation4 + $0x70] sm:$0xff]
        %v2217 = vld [vmem:[#allocation4 + $0x78] sm:$0xff]
        %v2218 = vsel %vm1914, %v2202, 0.0
        %v2219 = vsel %vm1916, %v2203, 0.0
        %v2220 = vsel %vm1918, %v2204, 0.0
        %v2221 = vsel %vm1920, %v2205, 0.0
        %v2222 = vsel %vm1922, %v2206, 0.0
        %v2223 = vsel %vm1924, %v2207, 0.0
        %v2224 = vsel %vm1926, %v2208, 0.0
        %v2225 = vsel %vm1928, %v2209, 0.0
        %v2226 = vsel %vm1930, %v2210, 0.0
        %v2227 = vsel %vm1932, %v2211, 0.0
        %v2228 = vsel %vm1934, %v2212, 0.0
        %v2229 = vsel %vm1936, %v2213, 0.0
        %v2230 = vsel %vm1938, %v2214, 0.0
        %v2231 = vsel %vm1940, %v2215, 0.0
        %v2232 = vsel %vm1942, %v2216, 0.0
        %v2233 = vsel %vm1944, %v2217, 0.0
        %2234 = vadd.xlane.f32.xlu0 %v2218
        %v2235 = vpop.xlane.xlu0 %2234
        %2236 = vadd.xlane.f32.xlu0 %v2219
        %v2237 = vpop.xlane.xlu0 %2236
        %2238 = vadd.xlane.f32.xlu0 %v2220
        %v2239 = vpop.xlane.xlu0 %2238
        %2240 = vadd.xlane.f32.xlu0 %v2221
        %v2241 = vpop.xlane.xlu0 %2240
        %2242 = vadd.xlane.f32.xlu0 %v2222
        %v2243 = vpop.xlane.xlu0 %2242
        %2244 = vadd.xlane.f32.xlu0 %v2223
        %v2245 = vpop.xlane.xlu0 %2244
        %2246 = vadd.xlane.f32.xlu0 %v2224
        %v2247 = vpop.xlane.xlu0 %2246
        %2248 = vadd.xlane.f32.xlu0 %v2225
        %v2249 = vpop.xlane.xlu0 %2248
        %2250 = vadd.xlane.f32.xlu0 %v2226
        %v2251 = vpop.xlane.xlu0 %2250
        %2252 = vadd.xlane.f32.xlu0 %v2227
        %v2253 = vpop.xlane.xlu0 %2252
        %2254 = vadd.xlane.f32.xlu0 %v2228
        %v2255 = vpop.xlane.xlu0 %2254
        %2256 = vadd.xlane.f32.xlu0 %v2229
        %v2257 = vpop.xlane.xlu0 %2256
        %2258 = vadd.xlane.f32.xlu0 %v2230
        %v2259 = vpop.xlane.xlu0 %2258
        %2260 = vadd.xlane.f32.xlu0 %v2231
        %v2261 = vpop.xlane.xlu0 %2260
        %2262 = vadd.xlane.f32.xlu0 %v2232
        %v2263 = vpop.xlane.xlu0 %2262
        %2264 = vadd.xlane.f32.xlu0 %v2233
        %v2265 = vpop.xlane.xlu0 %2264
        %v2266 = vadd.f32 %v2235, 0.0
        %v2267 = vadd.f32 %v2237, 0.0
        %v2268 = vadd.f32 %v2239, 0.0
        %v2269 = vadd.f32 %v2241, 0.0
        %v2270 = vadd.f32 %v2243, 0.0
        %v2271 = vadd.f32 %v2245, 0.0
        %v2272 = vadd.f32 %v2247, 0.0
        %v2273 = vadd.f32 %v2249, 0.0
        %v2274 = vadd.f32 %v2251, 0.0
        %v2275 = vadd.f32 %v2253, 0.0
        %v2276 = vadd.f32 %v2255, 0.0
        %v2277 = vadd.f32 %v2257, 0.0
        %v2278 = vadd.f32 %v2259, 0.0
        %v2279 = vadd.f32 %v2261, 0.0
        %v2280 = vadd.f32 %v2263, 0.0
        %v2281 = vadd.f32 %v2265, 0.0
        %v2282 = vmul.f32 %v2218, %v2026
        %v2283 = vmul.f32 %v2219, %v2028
        %v2284 = vmul.f32 %v2220, %v2030
        %v2285 = vmul.f32 %v2221, %v2032
        %v2286 = vmul.f32 %v2222, %v2034
        %v2287 = vmul.f32 %v2223, %v2036
        %v2288 = vmul.f32 %v2224, %v2038
        %v2289 = vmul.f32 %v2225, %v2040
        %v2290 = vmul.f32 %v2226, %v2042
        %v2291 = vmul.f32 %v2227, %v2044
        %v2292 = vmul.f32 %v2228, %v2046
        %v2293 = vmul.f32 %v2229, %v2048
        %v2294 = vmul.f32 %v2230, %v2050
        %v2295 = vmul.f32 %v2231, %v2052
        %v2296 = vmul.f32 %v2232, %v2054
        %v2297 = vmul.f32 %v2233, %v2056
        %2298 = vadd.xlane.f32.xlu0 %v2282
        %v2299 = vpop.xlane.xlu0 %2298
        %2300 = vadd.xlane.f32.xlu0 %v2283
        %v2301 = vpop.xlane.xlu0 %2300
        %2302 = vadd.xlane.f32.xlu0 %v2284
        %v2303 = vpop.xlane.xlu0 %2302
        %2304 = vadd.xlane.f32.xlu0 %v2285
        %v2305 = vpop.xlane.xlu0 %2304
        %2306 = vadd.xlane.f32.xlu0 %v2286
        %v2307 = vpop.xlane.xlu0 %2306
        %2308 = vadd.xlane.f32.xlu0 %v2287
        %v2309 = vpop.xlane.xlu0 %2308
        %2310 = vadd.xlane.f32.xlu0 %v2288
        %v2311 = vpop.xlane.xlu0 %2310
        %2312 = vadd.xlane.f32.xlu0 %v2289
        %v2313 = vpop.xlane.xlu0 %2312
        %2314 = vadd.xlane.f32.xlu0 %v2290
        %v2315 = vpop.xlane.xlu0 %2314
        %2316 = vadd.xlane.f32.xlu0 %v2291
        %v2317 = vpop.xlane.xlu0 %2316
        %2318 = vadd.xlane.f32.xlu0 %v2292
        %v2319 = vpop.xlane.xlu0 %2318
        %2320 = vadd.xlane.f32.xlu0 %v2293
        %v2321 = vpop.xlane.xlu0 %2320
        %2322 = vadd.xlane.f32.xlu0 %v2294
        %v2323 = vpop.xlane.xlu0 %2322
        %2324 = vadd.xlane.f32.xlu0 %v2295
        %v2325 = vpop.xlane.xlu0 %2324
        %2326 = vadd.xlane.f32.xlu0 %v2296
        %v2327 = vpop.xlane.xlu0 %2326
        %2328 = vadd.xlane.f32.xlu0 %v2297
        %v2329 = vpop.xlane.xlu0 %2328
        %v2330 = vadd.f32 %v2299, 0.0
        %v2331 = vadd.f32 %v2301, 0.0
        %v2332 = vadd.f32 %v2303, 0.0
        %v2333 = vadd.f32 %v2305, 0.0
        %v2334 = vadd.f32 %v2307, 0.0
        %v2335 = vadd.f32 %v2309, 0.0
        %v2336 = vadd.f32 %v2311, 0.0
        %v2337 = vadd.f32 %v2313, 0.0
        %v2338 = vadd.f32 %v2315, 0.0
        %v2339 = vadd.f32 %v2317, 0.0
        %v2340 = vadd.f32 %v2319, 0.0
        %v2341 = vadd.f32 %v2321, 0.0
        %v2342 = vadd.f32 %v2323, 0.0
        %v2343 = vadd.f32 %v2325, 0.0
        %v2344 = vadd.f32 %v2327, 0.0
        %v2345 = vadd.f32 %v2329, 0.0
        %v2346 = vsel %vm1915, %v2202, 0.0
        %v2347 = vsel %vm1917, %v2203, 0.0
        %v2348 = vsel %vm1919, %v2204, 0.0
        %v2349 = vsel %vm1921, %v2205, 0.0
        %v2350 = vsel %vm1923, %v2206, 0.0
        %v2351 = vsel %vm1925, %v2207, 0.0
        %v2352 = vsel %vm1927, %v2208, 0.0
        %v2353 = vsel %vm1929, %v2209, 0.0
        %v2354 = vsel %vm1931, %v2210, 0.0
        %v2355 = vsel %vm1933, %v2211, 0.0
        %v2356 = vsel %vm1935, %v2212, 0.0
        %v2357 = vsel %vm1937, %v2213, 0.0
        %v2358 = vsel %vm1939, %v2214, 0.0
        %v2359 = vsel %vm1941, %v2215, 0.0
        %v2360 = vsel %vm1943, %v2216, 0.0
        %v2361 = vsel %vm1945, %v2217, 0.0
        %2362 = vadd.xlane.f32.xlu0 %v2346
        %v2363 = vpop.xlane.xlu0 %2362
        %2364 = vadd.xlane.f32.xlu0 %v2347
        %v2365 = vpop.xlane.xlu0 %2364
        %2366 = vadd.xlane.f32.xlu0 %v2348
        %v2367 = vpop.xlane.xlu0 %2366
        %2368 = vadd.xlane.f32.xlu0 %v2349
        %v2369 = vpop.xlane.xlu0 %2368
        %2370 = vadd.xlane.f32.xlu0 %v2350
        %v2371 = vpop.xlane.xlu0 %2370
        %2372 = vadd.xlane.f32.xlu0 %v2351
        %v2373 = vpop.xlane.xlu0 %2372
        %2374 = vadd.xlane.f32.xlu0 %v2352
        %v2375 = vpop.xlane.xlu0 %2374
        %2376 = vadd.xlane.f32.xlu0 %v2353
        %v2377 = vpop.xlane.xlu0 %2376
        %2378 = vadd.xlane.f32.xlu0 %v2354
        %v2379 = vpop.xlane.xlu0 %2378
        %2380 = vadd.xlane.f32.xlu0 %v2355
        %v2381 = vpop.xlane.xlu0 %2380
        %2382 = vadd.xlane.f32.xlu0 %v2356
        %v2383 = vpop.xlane.xlu0 %2382
        %2384 = vadd.xlane.f32.xlu0 %v2357
        %v2385 = vpop.xlane.xlu0 %2384
        %2386 = vadd.xlane.f32.xlu0 %v2358
        %v2387 = vpop.xlane.xlu0 %2386
        %2388 = vadd.xlane.f32.xlu0 %v2359
        %v2389 = vpop.xlane.xlu0 %2388
        %2390 = vadd.xlane.f32.xlu0 %v2360
        %v2391 = vpop.xlane.xlu0 %2390
        %2392 = vadd.xlane.f32.xlu0 %v2361
        %v2393 = vpop.xlane.xlu0 %2392
        %v2394 = vadd.f32 %v2266, %v2363
        %v2395 = vadd.f32 %v2267, %v2365
        %v2396 = vadd.f32 %v2268, %v2367
        %v2397 = vadd.f32 %v2269, %v2369
        %v2398 = vadd.f32 %v2270, %v2371
        %v2399 = vadd.f32 %v2271, %v2373
        %v2400 = vadd.f32 %v2272, %v2375
        %v2401 = vadd.f32 %v2273, %v2377
        %v2402 = vadd.f32 %v2274, %v2379
        %v2403 = vadd.f32 %v2275, %v2381
        %v2404 = vadd.f32 %v2276, %v2383
        %v2405 = vadd.f32 %v2277, %v2385
        %v2406 = vadd.f32 %v2278, %v2387
        %v2407 = vadd.f32 %v2279, %v2389
        %v2408 = vadd.f32 %v2280, %v2391
        %v2409 = vadd.f32 %v2281, %v2393
        %v2410 = vmul.f32 %v2346, %v2027
        %v2411 = vmul.f32 %v2347, %v2029
        %v2412 = vmul.f32 %v2348, %v2031
        %v2413 = vmul.f32 %v2349, %v2033
        %v2414 = vmul.f32 %v2350, %v2035
        %v2415 = vmul.f32 %v2351, %v2037
        %v2416 = vmul.f32 %v2352, %v2039
        %v2417 = vmul.f32 %v2353, %v2041
        %v2418 = vmul.f32 %v2354, %v2043
        %v2419 = vmul.f32 %v2355, %v2045
        %v2420 = vmul.f32 %v2356, %v2047
        %v2421 = vmul.f32 %v2357, %v2049
        %v2422 = vmul.f32 %v2358, %v2051
        %v2423 = vmul.f32 %v2359, %v2053
        %v2424 = vmul.f32 %v2360, %v2055
        %v2425 = vmul.f32 %v2361, %v2057
        %2426 = vadd.xlane.f32.xlu0 %v2410
        %v2427 = vpop.xlane.xlu0 %2426
        %2428 = vadd.xlane.f32.xlu0 %v2411
        %v2429 = vpop.xlane.xlu0 %2428
        %2430 = vadd.xlane.f32.xlu0 %v2412
        %v2431 = vpop.xlane.xlu0 %2430
        %2432 = vadd.xlane.f32.xlu0 %v2413
        %v2433 = vpop.xlane.xlu0 %2432
        %2434 = vadd.xlane.f32.xlu0 %v2414
        %v2435 = vpop.xlane.xlu0 %2434
        %2436 = vadd.xlane.f32.xlu0 %v2415
        %v2437 = vpop.xlane.xlu0 %2436
        %2438 = vadd.xlane.f32.xlu0 %v2416
        %v2439 = vpop.xlane.xlu0 %2438
        %2440 = vadd.xlane.f32.xlu0 %v2417
        %v2441 = vpop.xlane.xlu0 %2440
        %2442 = vadd.xlane.f32.xlu0 %v2418
        %v2443 = vpop.xlane.xlu0 %2442
        %2444 = vadd.xlane.f32.xlu0 %v2419
        %v2445 = vpop.xlane.xlu0 %2444
        %2446 = vadd.xlane.f32.xlu0 %v2420
        %v2447 = vpop.xlane.xlu0 %2446
        %2448 = vadd.xlane.f32.xlu0 %v2421
        %v2449 = vpop.xlane.xlu0 %2448
        %2450 = vadd.xlane.f32.xlu0 %v2422
        %v2451 = vpop.xlane.xlu0 %2450
        %2452 = vadd.xlane.f32.xlu0 %v2423
        %v2453 = vpop.xlane.xlu0 %2452
        %2454 = vadd.xlane.f32.xlu0 %v2424
        %v2455 = vpop.xlane.xlu0 %2454
        %2456 = vadd.xlane.f32.xlu0 %v2425
        %v2457 = vpop.xlane.xlu0 %2456
        %v2458 = vadd.f32 %v2330, %v2427
        %v2459 = vadd.f32 %v2331, %v2429
        %v2460 = vadd.f32 %v2332, %v2431
        %v2461 = vadd.f32 %v2333, %v2433
        %v2462 = vadd.f32 %v2334, %v2435
        %v2463 = vadd.f32 %v2335, %v2437
        %v2464 = vadd.f32 %v2336, %v2439
        %v2465 = vadd.f32 %v2337, %v2441
        %v2466 = vadd.f32 %v2338, %v2443
        %v2467 = vadd.f32 %v2339, %v2445
        %v2468 = vadd.f32 %v2340, %v2447
        %v2469 = vadd.f32 %v2341, %v2449
        %v2470 = vadd.f32 %v2342, %v2451
        %v2471 = vadd.f32 %v2343, %v2453
        %v2472 = vadd.f32 %v2344, %v2455
        %v2473 = vadd.f32 %v2345, %v2457
        %vm2474 = vcmp.lt.f32.partialorder %v2394, 1e-06
        %vm2475 = vcmp.lt.f32.partialorder %v2395, 1e-06
        %vm2476 = vcmp.lt.f32.partialorder %v2396, 1e-06
        %vm2477 = vcmp.lt.f32.partialorder %v2397, 1e-06
        %vm2478 = vcmp.lt.f32.partialorder %v2398, 1e-06
        %vm2479 = vcmp.lt.f32.partialorder %v2399, 1e-06
        %vm2480 = vcmp.lt.f32.partialorder %v2400, 1e-06
        %vm2481 = vcmp.lt.f32.partialorder %v2401, 1e-06
        %vm2482 = vcmp.lt.f32.partialorder %v2402, 1e-06
        %vm2483 = vcmp.lt.f32.partialorder %v2403, 1e-06
        %vm2484 = vcmp.lt.f32.partialorder %v2404, 1e-06
        %vm2485 = vcmp.lt.f32.partialorder %v2405, 1e-06
        %vm2486 = vcmp.lt.f32.partialorder %v2406, 1e-06
        %vm2487 = vcmp.lt.f32.partialorder %v2407, 1e-06
        %vm2488 = vcmp.lt.f32.partialorder %v2408, 1e-06
        %vm2489 = vcmp.lt.f32.partialorder %v2409, 1e-06
        %v2490 = vsel %vm2474, 1.0, %v2394
        %v2491 = vsel %vm2475, 1.0, %v2395
        %v2492 = vsel %vm2476, 1.0, %v2396
        %v2493 = vsel %vm2477, 1.0, %v2397
        %v2494 = vsel %vm2478, 1.0, %v2398
        %v2495 = vsel %vm2479, 1.0, %v2399
        %v2496 = vsel %vm2480, 1.0, %v2400
        %v2497 = vsel %vm2481, 1.0, %v2401
        %v2498 = vsel %vm2482, 1.0, %v2402
        %v2499 = vsel %vm2483, 1.0, %v2403
        %v2500 = vsel %vm2484, 1.0, %v2404
        %v2501 = vsel %vm2485, 1.0, %v2405
        %v2502 = vsel %vm2486, 1.0, %v2406
        %v2503 = vsel %vm2487, 1.0, %v2407
        %v2504 = vsel %vm2488, 1.0, %v2408
        %v2505 = vsel %vm2489, 1.0, %v2409
        %v2506 = vlog2.pop %v2156
        %v2507 = vmul.f32 %v2506, 0.6931472
        %v2508 = vlog2.pop %v2159
        %v2509 = vmul.f32 %v2508, 0.6931472
        %v2510 = vlog2.pop %v2162
        %v2511 = vmul.f32 %v2510, 0.6931472
        %v2512 = vlog2.pop %v2165
        %v2513 = vmul.f32 %v2512, 0.6931472
        %v2514 = vlog2.pop %v2168
        %v2515 = vmul.f32 %v2514, 0.6931472
        %v2516 = vlog2.pop %v2171
        %v2517 = vmul.f32 %v2516, 0.6931472
        %v2518 = vlog2.pop %v2174
        %v2519 = vmul.f32 %v2518, 0.6931472
        %v2520 = vlog2.pop %v2177
        %v2521 = vmul.f32 %v2520, 0.6931472
        %v2522 = vlog2.pop %v2180
        %v2523 = vmul.f32 %v2522, 0.6931472
        %v2524 = vlog2.pop %v2183
        %v2525 = vmul.f32 %v2524, 0.6931472
        %v2526 = vlog2.pop %v2186
        %v2527 = vmul.f32 %v2526, 0.6931472
        %v2528 = vlog2.pop %v2189
        %v2529 = vmul.f32 %v2528, 0.6931472
        %v2530 = vlog2.pop %v2192
        %v2531 = vmul.f32 %v2530, 0.6931472
        %v2532 = vlog2.pop %v2195
        %v2533 = vmul.f32 %v2532, 0.6931472
        %v2534 = vlog2.pop %v2198
        %v2535 = vmul.f32 %v2534, 0.6931472
        %v2536 = vlog2.pop %v2201
        %v2537 = vmul.f32 %v2536, 0.6931472
        %v2538 = vmul.f32 %v2394, %v2507
        %v2539 = vmul.f32 %v2395, %v2509
        %v2540 = vmul.f32 %v2396, %v2511
        %v2541 = vmul.f32 %v2397, %v2513
        %v2542 = vmul.f32 %v2398, %v2515
        %v2543 = vmul.f32 %v2399, %v2517
        %v2544 = vmul.f32 %v2400, %v2519
        %v2545 = vmul.f32 %v2401, %v2521
        %v2546 = vmul.f32 %v2402, %v2523
        %v2547 = vmul.f32 %v2403, %v2525
        %v2548 = vmul.f32 %v2404, %v2527
        %v2549 = vmul.f32 %v2405, %v2529
        %v2550 = vmul.f32 %v2406, %v2531
        %v2551 = vmul.f32 %v2407, %v2533
        %v2552 = vmul.f32 %v2408, %v2535
        %v2553 = vmul.f32 %v2409, %v2537
        %v2554 = vsub.f32 %v2458, %v2538
        %v2555 = vsub.f32 %v2459, %v2539
        %v2556 = vsub.f32 %v2460, %v2540
        %v2557 = vsub.f32 %v2461, %v2541
        %v2558 = vsub.f32 %v2462, %v2542
        %v2559 = vsub.f32 %v2463, %v2543
        %v2560 = vsub.f32 %v2464, %v2544
        %v2561 = vsub.f32 %v2465, %v2545
        %v2562 = vsub.f32 %v2466, %v2546
        %v2563 = vsub.f32 %v2467, %v2547
        %v2564 = vsub.f32 %v2468, %v2548
        %v2565 = vsub.f32 %v2469, %v2549
        %v2566 = vsub.f32 %v2470, %v2550
        %v2567 = vsub.f32 %v2471, %v2551
        %v2568 = vsub.f32 %v2472, %v2552
        %v2569 = vsub.f32 %v2473, %v2553
        %v2570 = vrcp.pop %v2490
        %v2571 = vmul.f32 %v2554, %v2570
        %v2572 = vrcp.pop %v2491
        %v2573 = vmul.f32 %v2555, %v2572
        %v2574 = vrcp.pop %v2492
        %v2575 = vmul.f32 %v2556, %v2574
        %v2576 = vrcp.pop %v2493
        %v2577 = vmul.f32 %v2557, %v2576
        %v2578 = vrcp.pop %v2494
        %v2579 = vmul.f32 %v2558, %v2578
        %v2580 = vrcp.pop %v2495
        %v2581 = vmul.f32 %v2559, %v2580
        %v2582 = vrcp.pop %v2496
        %v2583 = vmul.f32 %v2560, %v2582
        %v2584 = vrcp.pop %v2497
        %v2585 = vmul.f32 %v2561, %v2584
        %v2586 = vrcp.pop %v2498
        %v2587 = vmul.f32 %v2562, %v2586
        %v2588 = vrcp.pop %v2499
        %v2589 = vmul.f32 %v2563, %v2588
        %v2590 = vrcp.pop %v2500
        %v2591 = vmul.f32 %v2564, %v2590
        %v2592 = vrcp.pop %v2501
        %v2593 = vmul.f32 %v2565, %v2592
        %v2594 = vrcp.pop %v2502
        %v2595 = vmul.f32 %v2566, %v2594
        %v2596 = vrcp.pop %v2503
        %v2597 = vmul.f32 %v2567, %v2596
        %v2598 = vrcp.pop %v2504
        %v2599 = vmul.f32 %v2568, %v2598
        %v2600 = vrcp.pop %v2505
        %v2601 = vmul.f32 %v2569, %v2600
        %v2602 = vmul.f32 %v2571, -1.0
        %v2603 = vmul.f32 %v2573, -1.0
        %v2604 = vmul.f32 %v2575, -1.0
        %v2605 = vmul.f32 %v2577, -1.0
        %v2606 = vmul.f32 %v2579, -1.0
        %v2607 = vmul.f32 %v2581, -1.0
        %v2608 = vmul.f32 %v2583, -1.0
        %v2609 = vmul.f32 %v2585, -1.0
        %v2610 = vmul.f32 %v2587, -1.0
        %v2611 = vmul.f32 %v2589, -1.0
        %v2612 = vmul.f32 %v2591, -1.0
        %v2613 = vmul.f32 %v2593, -1.0
        %v2614 = vmul.f32 %v2595, -1.0
        %v2615 = vmul.f32 %v2597, -1.0
        %v2616 = vmul.f32 %v2599, -1.0
        %v2617 = vmul.f32 %v2601, -1.0
        %vm2618 = vcmask 7168
        %2619 = vst.msk [vmem:[%s153] sm:$0xff] %vm2618, %v2602
        %2620 = vst.msk [vmem:[%s153 + $0x8] sm:$0xff] %vm2618, %v2603
        %2621 = vst.msk [vmem:[%s153 + $0x10] sm:$0xff] %vm2618, %v2604
        %2622 = vst.msk [vmem:[%s153 + $0x18] sm:$0xff] %vm2618, %v2605
        %2623 = vst.msk [vmem:[%s153 + $0x20] sm:$0xff] %vm2618, %v2606
        %2624 = vst.msk [vmem:[%s153 + $0x28] sm:$0xff] %vm2618, %v2607
        %2625 = vst.msk [vmem:[%s153 + $0x30] sm:$0xff] %vm2618, %v2608
        %2626 = vst.msk [vmem:[%s153 + $0x38] sm:$0xff] %vm2618, %v2609
        %2627 = vst.msk [vmem:[%s153 + $0x40] sm:$0xff] %vm2618, %v2610
        %2628 = vst.msk [vmem:[%s153 + $0x48] sm:$0xff] %vm2618, %v2611
        %2629 = vst.msk [vmem:[%s153 + $0x50] sm:$0xff] %vm2618, %v2612
        %2630 = vst.msk [vmem:[%s153 + $0x58] sm:$0xff] %vm2618, %v2613
        %2631 = vst.msk [vmem:[%s153 + $0x60] sm:$0xff] %vm2618, %v2614
        %2632 = vst.msk [vmem:[%s153 + $0x68] sm:$0xff] %vm2618, %v2615
        %2633 = vst.msk [vmem:[%s153 + $0x70] sm:$0xff] %vm2618, %v2616
        %2634 = vst.msk [vmem:[%s153 + $0x78] sm:$0xff] %vm2618, %v2617
        %s2635 = smul.u32 16, %s15
        %p2636 = scmp.lt.s32.totalorder %s2635, 31
        %s2637 = scalar_select %p2636, %s2635, 31
        %s2638 = smul.addr %s2637, 8
        %s2639 = scalar_lea.vmem %s2, %s2638
        // Predicated region
        $region37: #{tpu_custom_call.1} parent=27 // pred_check
          %p2640 = pneg %p75
        $region38: #{tpu_custom_call.1} parent=27 // pred_check_branch
          %2642 = sbr.rel (%p2640) target = $region40
        $region39: #{tpu_custom_call.1} parent=27 // pred_region
          %s2643 = smul.u32 16, %s15
        $region40: #{tpu_custom_call.1} parent=27 // pred_fallthru
          _
      $region28: #{tpu_custom_call.1} parent=5 // pred_fallthru
        _
      %p2644 = scmp.le.s32.totalorder 2, %s10
      // Predicated region
      $region41: #{tpu_custom_call.1} parent=5 // pred_check
        %p2645 = pneg %p2644
      $region42: #{tpu_custom_call.1} parent=5 // pred_check_branch
        %2647 = sbr.rel (%p2645) target = $region44
      $region43: #{tpu_custom_call.1} parent=5 // pred_region
        %s2648 = ssub.s32 %s10, 2
        // Predicated region
        $region45: #{tpu_custom_call.1} parent=43 // pred_check
          %p2649 = pneg %p81
        $region46: #{tpu_custom_call.1} parent=43 // pred_check_branch
          %2651 = sbr.rel (%p2649) target = $region48
        $region47: #{tpu_custom_call.1} parent=43 // pred_region
          %s2652 = smul.u32 16, %s16
          %p2653 = scmp.lt.s32.totalorder %s2652, 31
          %s2654 = scalar_select %p2653, %s2652, 31
          %s2655 = smul.addr %s2654, 8
          %s2656 = scalar_lea.vmem %s2, %s2655
        $region48: #{tpu_custom_call.1} parent=43 // pred_fallthru
          _
      $region44: #{tpu_custom_call.1} parent=5 // pred_fallthru
        _
    $region6: #{tpu_custom_call.1} parent=1 // loop_footer
      %s14 = sadd.s32 1, %s10
    $region7: #{tpu_custom_call.1} parent=1 // loop_footer_branch
      %9 = sbr.rel target = $region3
    $region8: #{tpu_custom_call.1} parent=1 // loop_exit
      _
    %2657 = vsyncpa [#allocation3], 1
    %s2658 = scalar_lea.sflag [#allocation3], 1
    %2659 = vsyncpa %s2658, 1
    %2660 = vsyncpa [#allocation5], 1

</llo_original>
